<compile_context>
chip_gen: v5e
topology: v5e:2x2
jax: 0.10.0
libtpu: 0.0.40
codegen_flags: <defaults>
</compile_context>

<pallas_src>
import functools

import jax
import jax.numpy as jnp
from jax import lax
from jax.experimental import pallas as pl
from jax.experimental.pallas import tpu as pltpu

MEMRISTOR_STD = 0.1
_NB_MAX = 32  # batch tile: conv1 matmul M = 32*24 = 768, conv2 M = 32*8 = 256


def _round_up(x, m):
    return ((x + m - 1) // m) * m


def _pick_epilogue_dtype():
    """bf16 conv epilogue on v6e/v7x (bf16 VPU); f32 on v5e and older."""
    try:
        kind = jax.devices()[0].device_kind.lower()
    except Exception:
        kind = ""
    return jnp.bfloat16 if ("v6" in kind or "v7" in kind) else jnp.float32


def _pick_batch_tile(n):
    """Fill MXU M rows, but keep >=2 grid steps when possible (v7x megacore)."""
    if n >= 4:
        return min(_NB_MAX, pl.cdiv(n, 2))
    return max(n, 1)


# ---------------------------------------------------------------------------
# Fused whole-network Pallas kernel
# ---------------------------------------------------------------------------
def _netmem_kernel(x_ref, t1_ref, b1_ref, t2_ref, b2_ref,
                   w1_ref, bf1_ref, w2_ref, bf2_ref, o_ref,
                   *, kh, oh1, oh2, ep_dtype):
    """x_ref: (nb, H, W*Cin) bf16 input slab, lane index = w*Cin + ci.
    t*_ref: (kh*WCpad, 2*pc_pad) bf16 banded Toeplitz conv weights.
    b*_ref: (1, 2*pc_pad) f32 conv biases (per ow-parity, lane-padded).
    w1_ref: (poh2*pc2_pad, 512) bf16; w2_ref: (512, 10) bf16.
    o_ref : (nb, 10) f32 log-probs.
    """
    nb = x_ref.shape[0]

    def conv_relu_pool(x, t_ref_, b_ref_, oh):
        # Single K-concat MXU matmul (K = kh * lane_width) + fused epilogue.
        wc = x.shape[2]
        two_pc = t_ref_.shape[1]
        pc = two_pc // 2
        poh = oh // 2
        xs = jnp.concatenate([x[:, i:i + oh, :] for i in range(kh)], axis=-1)
        xs = xs.reshape(nb * oh, kh * wc)
        acc = jnp.dot(xs, t_ref_[...], preferred_element_type=jnp.float32)
        y = jnp.maximum(acc + b_ref_[...], 0.0).astype(ep_dtype)   # bias + ReLU
        y = jnp.maximum(y[:, :pc], y[:, pc:])                       # width pool: ow-parity lane halves (128-aligned)
        y = jnp.max(y.reshape(nb * poh, 2, pc), axis=1)             # height pool: oh row pairs
        return y.reshape(nb, poh, pc).astype(jnp.bfloat16)

    h1 = conv_relu_pool(x_ref[...], t1_ref, b1_ref, oh1)            # (nb, 12, 256)
    h2 = conv_relu_pool(h1, t2_ref, b2_ref, oh2)                    # (nb,  4, 256)
    flat = h2.reshape(nb, h2.shape[1] * h2.shape[2])                # (nb, 1024) bf16

    z1 = jnp.dot(flat, w1_ref[...], preferred_element_type=jnp.float32) + bf1_ref[...]
    z1 = jnp.maximum(z1, 0.0).astype(jnp.bfloat16)                  # (nb, 512)
    z2 = jnp.dot(z1, w2_ref[...], preferred_element_type=jnp.float32) + bf2_ref[...]
    z = z2 - jnp.max(z2, axis=1, keepdims=True)                     # log_softmax (row-wise, exact per tile)
    o_ref[...] = (z - jnp.log(jnp.sum(jnp.exp(z), axis=1, keepdims=True))).astype(o_ref.dtype)


def netmem_forward(x_nchw, prep, meta):
    N, C, H, W = x_nchw.shape
    x = jnp.transpose(x_nchw, (0, 2, 3, 1)).reshape(N, H, W * C).astype(jnp.bfloat16)
    nb = _pick_batch_tile(N)

    def wspec(a):
        return pl.BlockSpec(a.shape, lambda i: (0,) * a.ndim)       # resident weights

    kernel = functools.partial(_netmem_kernel, kh=meta["kh"], oh1=meta["oh1"],
                               oh2=meta["oh2"], ep_dtype=meta["ep_dtype"])
    return pl.pallas_call(
        kernel,
        out_shape=jax.ShapeDtypeStruct((N, 10), jnp.float32),
        grid=(pl.cdiv(N, nb),),
        in_specs=[
            pl.BlockSpec((nb, H, W * C), lambda i: (i, 0, 0)),
            wspec(prep["t1"]), wspec(prep["b1"]),
            wspec(prep["t2"]), wspec(prep["b2"]),
            wspec(prep["w1"]), wspec(prep["b_fc1"]),
            wspec(prep["w2"]), wspec(prep["b_fc2"]),
        ],
        out_specs=pl.BlockSpec((nb, 10), lambda i: (i, 0)),
        compiler_params=pltpu.CompilerParams(
            dimension_semantics=("parallel",),
            vmem_limit_bytes=32 * 1024 * 1024,
        ),
    )(x, prep["t1"], prep["b1"], prep["t2"], prep["b2"],
      prep["w1"], prep["b_fc1"], prep["w2"], prep["b_fc2"])


# ---------------------------------------------------------------------------
# Parameter prep (done ONCE, outside the forward pass)
# ---------------------------------------------------------------------------
def _conv_toeplitz(w_oihw, b, noise, in_w, in_lane_pad, dtype=jnp.bfloat16):
    """Expand (Cout, Cin, kh, kw) conv weights into a stacked banded matrix T with
       conv(x)[oh, ow, co] = im2col(x)[oh, :] @ T
    where the im2col lane index is tap*in_lane_pad + w*Cin + ci and the output
    column index is ow_parity*pc_pad + pw*Cout + co (zero-padded to pc_pad so
    stores are lane-dense and the width pool is a lane-half max)."""
    co, ci, kh, kw = (int(s) for s in w_oihw.shape)
    ow = in_w - kw + 1
    assert ow % 2 == 0, "width-pool lane-half trick requires even OW"
    pw = ow // 2
    pc = pw * co
    pc_pad = _round_up(pc, 128)
    wt = jnp.transpose((w_oihw * noise).astype(jnp.float32), (2, 3, 1, 0))   # (kh,kw,ci,co)
    sel = (jnp.arange(in_w)[:, None, None]
           == jnp.arange(ow)[None, :, None] + jnp.arange(kw)[None, None, :]
           ).astype(jnp.float32)                                             # (W,OW,kw)
    t = jnp.einsum("woj,kjnc->kwnoc", sel, wt)                               # (kh,W,ci,OW,co)
    t = t.reshape(kh, in_w, ci, pw, 2, co)
    t = jnp.transpose(t, (0, 1, 2, 4, 3, 5))                                 # (kh,W,ci,2,pw,co)
    t = t.reshape(kh, in_w * ci, 2, pc)
    t = jnp.pad(t, ((0, 0), (0, in_lane_pad - in_w * ci), (0, 0), (0, pc_pad - pc)))
    t = t.reshape(kh * in_lane_pad, 2 * pc_pad).astype(dtype)
    b_half = jnp.pad(jnp.tile(b.astype(jnp.float32), pw), (0, pc_pad - pc))
    b_row = jnp.concatenate([b_half, b_half]).reshape(1, 2 * pc_pad)
    return t, b_row, pc_pad


def init_params(key, mnist=True):
    c_in = 1 if mnist else 3
    flat = 4 * 4 * 50 if mnist else 1250
    keys = jax.random.split(key, 12)

    def unif(k, shape, fan_in):
        bound = 1.0 / jnp.sqrt(jnp.float32(fan_in))
        return jax.random.uniform(k, shape, jnp.float32, -bound, bound)

    params = {
        "conv1_w": unif(keys[0], (20, c_in, 5, 5), c_in * 25),
        "conv1_b": unif(keys[1], (20,), c_in * 25),
        "conv2_w": unif(keys[2], (50, 20, 5, 5), 20 * 25),
        "conv2_b": unif(keys[3], (50,), 20 * 25),
        "fc1_w": unif(keys[4], (500, flat), flat),
        "fc1_b": unif(keys[5], (500,), flat),
        "fc2_w": unif(keys[6], (10, 500), 500),
        "fc2_b": unif(keys[7], (10,), 500),
    }
    noises = {
        "n1": 1.0 + MEMRISTOR_STD * jax.random.normal(keys[8], params["conv1_w"].shape),
        "n2": 1.0 + MEMRISTOR_STD * jax.random.normal(keys[9], params["conv2_w"].shape),
        "n3": 1.0 + MEMRISTOR_STD * jax.random.normal(keys[10], params["fc1_w"].shape),
        "n4": 1.0 + MEMRISTOR_STD * jax.random.normal(keys[11], params["fc2_w"].shape),
    }
    return params, noises, flat


def prepare_params(params, noises, mnist=True):
    """Apply memristor noise, Toeplitz-expand, fold permutations and lane padding ONCE."""
    in_hw = 28 if mnist else 32
    kh = 5
    oh1 = in_hw - (kh - 1)
    poh1 = oh1 // 2
    oh2 = poh1 - (kh - 1)
    poh2 = oh2 // 2
    pw2 = poh2                      # pooled output spatial is square
    ci1 = int(params["conv1_w"].shape[1])
    co2 = int(params["conv2_w"].shape[0])
    n_fc1 = int(params["fc1_w"].shape[0])
    n_fc1_pad = _round_up(n_fc1, 128)

    t1, b1, pc1_pad = _conv_toeplitz(params["conv1_w"], params["conv1_b"], noises["n1"],
                                     in_w=in_hw, in_lane_pad=in_hw * ci1)
    t2, b2, pc2_pad = _conv_toeplitz(params["conv2_w"], params["conv2_b"], noises["n2"],
                                     in_w=poh1, in_lane_pad=pc1_pad)

    # fc1: fold PyTorch's channel-major flatten (c, ph, pw) into the weight so the
    # kernel consumes the padded NHWC-flat pooled activations (ph, pw*Cout+pad) directly;
    # pad the 500-wide output to 512 (zero weights + zero bias -> relu(0)=0).
    w1 = (params["fc1_w"] * noises["n3"]).astype(jnp.float32)
    w1 = w1.reshape(n_fc1, co2, poh2, pw2)
    w1 = jnp.transpose(w1, (2, 3, 1, 0)).reshape(poh2, pw2 * co2, n_fc1)
    w1 = jnp.pad(w1, ((0, 0), (0, pc2_pad - pw2 * co2), (0, n_fc1_pad - n_fc1)))
    w1 = w1.reshape(poh2 * pc2_pad, n_fc1_pad).astype(jnp.bfloat16)
    b_fc1 = jnp.pad(params["fc1_b"].astype(jnp.float32),
                    (0, n_fc1_pad - n_fc1)).reshape(1, n_fc1_pad)

    w2 = (params["fc2_w"] * noises["n4"]).astype(jnp.float32).T              # (500, 10)
    w2 = jnp.pad(w2, ((0, n_fc1_pad - n_fc1), (0, 0))).astype(jnp.bfloat16)  # (512, 10)
    b_fc2 = params["fc2_b"].astype(jnp.float32).reshape(1, -1)

    prep = {"t1": t1, "b1": b1, "t2": t2, "b2": b2,
            "w1": w1, "b_fc1": b_fc1, "w2": w2, "b_fc2": b_fc2}
    meta = {"kh": kh, "oh1": oh1, "oh2": oh2, "ep_dtype": _pick_epilogue_dtype()}
    return prep, meta


# ---------------------------------------------------------------------------
# Pure-JAX reference (same bf16 boundary quantization, f32 accumulation)
# ---------------------------------------------------------------------------
def _q(a):
    return a.astype(jnp.bfloat16).astype(jnp.float32)


def netmem_reference(x_nchw, params, noises):
    dn = ("NCHW", "OIHW", "NCHW")
    y = _q(x_nchw.astype(jnp.float32))
    y = lax.conv_general_dilated(y, _q(params["conv1_w"] * noises["n1"]), (1, 1), "VALID",
                                 dimension_numbers=dn)
    y = jnp.maximum(y + params["conv1_b"][None, :, None, None], 0.0)
    y = lax.reduce_window(y, -jnp.inf, lax.max, (1, 1, 2, 2), (1, 1, 2, 2), "VALID")
    y = _q(y)
    y = lax.conv_general_dilated(y, _q(params["conv2_w"] * noises["n2"]), (1, 1), "VALID",
                                 dimension_numbers=dn)
    y = jnp.maximum(y + params["conv2_b"][None, :, None, None], 0.0)
    y = lax.reduce_window(y, -jnp.inf, lax.max, (1, 1, 2, 2), (1, 1, 2, 2), "VALID")
    y = _q(y).reshape(y.shape[0], -1)
    y = jnp.maximum(y @ _q(params["fc1_w"] * noises["n3"]).T + params["fc1_b"][None, :], 0.0)
    y = _q(y) @ _q(params["fc2_w"] * noises["n4"]).T + params["fc2_b"][None, :]
    return jax.nn.log_softmax(y, axis=1)


if __name__ == "__main__":
    key = jax.random.PRNGKey(0)
    k_params, k_x = jax.random.split(key)
    params, noises, _ = init_params(k_params, mnist=True)
    prep, meta = prepare_params(params, noises, mnist=True)

    x = jax.random.normal(k_x, (2, 1, 28, 28), dtype=jnp.float32)  # NCHW, MNIST-sized

    out = jax.block_until_ready(netmem_forward(x, prep, meta))
    ref = jax.block_until_ready(netmem_reference(x, params, noises))

    assert out.shape == (2, 10), out.shape
    assert bool(jnp.all(jnp.isfinite(out)))
    # log_softmax rows exponentiate-sum to ~1
    assert bool(jnp.allclose(jnp.sum(jnp.exp(out), axis=1), 1.0, atol=1e-4))
    # matches the bf16-quantized pure-JAX reference
    assert bool(jnp.allclose(out, ref, atol=1e-2)), float(jnp.max(jnp.abs(out - ref)))
    print("KERNEL_OK")
</pallas_src>

<mosaic_0001>
module attributes {stable_mosaic.version = 11 : i64} {
  func.func @_netmem_kernel(%arg0: i32, %arg1: memref<2x28x28xbf16, #tpu.memory_space<vmem>>, %arg2: memref<140x512xbf16, #tpu.memory_space<vmem>>, %arg3: memref<1x512xf32, #tpu.memory_space<vmem>>, %arg4: memref<1280x512xbf16, #tpu.memory_space<vmem>>, %arg5: memref<1x512xf32, #tpu.memory_space<vmem>>, %arg6: memref<1024x512xbf16, #tpu.memory_space<vmem>>, %arg7: memref<1x512xf32, #tpu.memory_space<vmem>>, %arg8: memref<512x10xbf16, #tpu.memory_space<vmem>>, %arg9: memref<1x10xf32, #tpu.memory_space<vmem>>, %arg10: memref<2x10xf32, #tpu.memory_space<vmem>>) attributes {dimension_semantics = [#tpu.dimension_semantics<parallel>], iteration_bounds = array<i64: 1>, scalar_prefetch = 0 : i64, scratch_operands = 0 : i64, tpu.core_type = #tpu.core_type<tc>, window_params = [{transform_indices = @transform_0, window_bounds = array<i64: 2, 28, 28>}, {pipeline_mode = #tpu.pipeline_mode<synchronous>, transform_indices = @transform_1, window_bounds = array<i64: 140, 512>}, {pipeline_mode = #tpu.pipeline_mode<synchronous>, transform_indices = @transform_2, window_bounds = array<i64: 1, 512>}, {pipeline_mode = #tpu.pipeline_mode<synchronous>, transform_indices = @transform_3, window_bounds = array<i64: 1280, 512>}, {pipeline_mode = #tpu.pipeline_mode<synchronous>, transform_indices = @transform_4, window_bounds = array<i64: 1, 512>}, {pipeline_mode = #tpu.pipeline_mode<synchronous>, transform_indices = @transform_5, window_bounds = array<i64: 1024, 512>}, {pipeline_mode = #tpu.pipeline_mode<synchronous>, transform_indices = @transform_6, window_bounds = array<i64: 1, 512>}, {pipeline_mode = #tpu.pipeline_mode<synchronous>, transform_indices = @transform_7, window_bounds = array<i64: 512, 10>}, {pipeline_mode = #tpu.pipeline_mode<synchronous>, transform_indices = @transform_8, window_bounds = array<i64: 1, 10>}, {transform_indices = @transform_9, window_bounds = array<i64: 2, 10>}]} {
    %c0 = arith.constant 0 : index
    %c0_0 = arith.constant 0 : index
    %c0_1 = arith.constant 0 : index
    %0 = vector.load %arg1[%c0, %c0_0, %c0_1] : memref<2x28x28xbf16, #tpu.memory_space<vmem>>, vector<2x28x28xbf16>
    %1 = vector.extract_strided_slice %0 {offsets = [0, 0, 0], sizes = [2, 24, 28], strides = [1, 1, 1]} : vector<2x28x28xbf16> to vector<2x24x28xbf16>
    %2 = vector.extract_strided_slice %0 {offsets = [0, 1, 0], sizes = [2, 24, 28], strides = [1, 1, 1]} : vector<2x28x28xbf16> to vector<2x24x28xbf16>
    %3 = vector.extract_strided_slice %0 {offsets = [0, 2, 0], sizes = [2, 24, 28], strides = [1, 1, 1]} : vector<2x28x28xbf16> to vector<2x24x28xbf16>
    %4 = vector.extract_strided_slice %0 {offsets = [0, 3, 0], sizes = [2, 24, 28], strides = [1, 1, 1]} : vector<2x28x28xbf16> to vector<2x24x28xbf16>
    %5 = vector.extract_strided_slice %0 {offsets = [0, 4, 0], sizes = [2, 24, 28], strides = [1, 1, 1]} : vector<2x28x28xbf16> to vector<2x24x28xbf16>
    %6 = tpu.concatenate %1, %2, %3, %4, %5 in 2 : vector<2x24x28xbf16>, vector<2x24x28xbf16>, vector<2x24x28xbf16>, vector<2x24x28xbf16>, vector<2x24x28xbf16> -> vector<2x24x140xbf16>
    %7 = vector.shape_cast %6 : vector<2x24x140xbf16> to vector<48x140xbf16>
    %c0_2 = arith.constant 0 : index
    %c0_3 = arith.constant 0 : index
    %8 = vector.load %arg2[%c0_2, %c0_3] : memref<140x512xbf16, #tpu.memory_space<vmem>>, vector<140x512xbf16>
    %cst = arith.constant dense<0.000000e+00> : vector<48x512xf32>
    %9 = tpu.matmul %7, %8, %cst {dimension_numbers = #tpu.dot_dimension_numbers<[1], [0], [0], [1], [0, 0, 1, 1], [], []>} : vector<48x140xbf16>, vector<140x512xbf16>, vector<48x512xf32> -> vector<48x512xf32>
    %c0_4 = arith.constant 0 : index
    %c0_5 = arith.constant 0 : index
    %10 = vector.load %arg3[%c0_4, %c0_5] : memref<1x512xf32, #tpu.memory_space<vmem>>, vector<1x512xf32>
    %11 = vector.broadcast %10 : vector<1x512xf32> to vector<48x512xf32>
    %12 = arith.addf %9, %11 : vector<48x512xf32>
    %cst_6 = arith.constant 0.000000e+00 : f32
    %13 = vector.broadcast %cst_6 : f32 to vector<48x512xf32>
    %14 = arith.maximumf %12, %13 : vector<48x512xf32>
    %15 = vector.extract_strided_slice %14 {offsets = [0, 0], sizes = [48, 256], strides = [1, 1]} : vector<48x512xf32> to vector<48x256xf32>
    %16 = vector.extract_strided_slice %14 {offsets = [0, 256], sizes = [48, 256], strides = [1, 1]} : vector<48x512xf32> to vector<48x256xf32>
    %17 = arith.maximumf %15, %16 : vector<48x256xf32>
    %18 = vector.shape_cast %17 : vector<48x256xf32> to vector<24x2x256xf32>
    %cst_7 = arith.constant dense<0xFF800000> : vector<24x256xf32>
    %19 = vector.multi_reduction <maximumf>, %18, %cst_7 [1] : vector<24x2x256xf32> to vector<24x256xf32>
    %20 = vector.shape_cast %19 : vector<24x256xf32> to vector<2x12x256xf32>
    %21 = arith.truncf %20 : vector<2x12x256xf32> to vector<2x12x256xbf16>
    %22 = vector.extract_strided_slice %21 {offsets = [0, 0, 0], sizes = [2, 8, 256], strides = [1, 1, 1]} : vector<2x12x256xbf16> to vector<2x8x256xbf16>
    %23 = vector.extract_strided_slice %21 {offsets = [0, 1, 0], sizes = [2, 8, 256], strides = [1, 1, 1]} : vector<2x12x256xbf16> to vector<2x8x256xbf16>
    %24 = vector.extract_strided_slice %21 {offsets = [0, 2, 0], sizes = [2, 8, 256], strides = [1, 1, 1]} : vector<2x12x256xbf16> to vector<2x8x256xbf16>
    %25 = vector.extract_strided_slice %21 {offsets = [0, 3, 0], sizes = [2, 8, 256], strides = [1, 1, 1]} : vector<2x12x256xbf16> to vector<2x8x256xbf16>
    %26 = vector.extract_strided_slice %21 {offsets = [0, 4, 0], sizes = [2, 8, 256], strides = [1, 1, 1]} : vector<2x12x256xbf16> to vector<2x8x256xbf16>
    %27 = tpu.concatenate %22, %23, %24, %25, %26 in 2 : vector<2x8x256xbf16>, vector<2x8x256xbf16>, vector<2x8x256xbf16>, vector<2x8x256xbf16>, vector<2x8x256xbf16> -> vector<2x8x1280xbf16>
    %28 = vector.shape_cast %27 : vector<2x8x1280xbf16> to vector<16x1280xbf16>
    %c0_8 = arith.constant 0 : index
    %c0_9 = arith.constant 0 : index
    %29 = vector.load %arg4[%c0_8, %c0_9] : memref<1280x512xbf16, #tpu.memory_space<vmem>>, vector<1280x512xbf16>
    %cst_10 = arith.constant dense<0.000000e+00> : vector<16x512xf32>
    %30 = tpu.matmul %28, %29, %cst_10 {dimension_numbers = #tpu.dot_dimension_numbers<[1], [0], [0], [1], [0, 0, 1, 1], [], []>} : vector<16x1280xbf16>, vector<1280x512xbf16>, vector<16x512xf32> -> vector<16x512xf32>
    %c0_11 = arith.constant 0 : index
    %c0_12 = arith.constant 0 : index
    %31 = vector.load %arg5[%c0_11, %c0_12] : memref<1x512xf32, #tpu.memory_space<vmem>>, vector<1x512xf32>
    %32 = vector.broadcast %31 : vector<1x512xf32> to vector<16x512xf32>
    %33 = arith.addf %30, %32 : vector<16x512xf32>
    %cst_13 = arith.constant 0.000000e+00 : f32
    %34 = vector.broadcast %cst_13 : f32 to vector<16x512xf32>
    %35 = arith.maximumf %33, %34 : vector<16x512xf32>
    %36 = vector.extract_strided_slice %35 {offsets = [0, 0], sizes = [16, 256], strides = [1, 1]} : vector<16x512xf32> to vector<16x256xf32>
    %37 = vector.extract_strided_slice %35 {offsets = [0, 256], sizes = [16, 256], strides = [1, 1]} : vector<16x512xf32> to vector<16x256xf32>
    %38 = arith.maximumf %36, %37 : vector<16x256xf32>
    %39 = vector.shape_cast %38 : vector<16x256xf32> to vector<8x2x256xf32>
    %cst_14 = arith.constant dense<0xFF800000> : vector<8x256xf32>
    %40 = vector.multi_reduction <maximumf>, %39, %cst_14 [1] : vector<8x2x256xf32> to vector<8x256xf32>
    %41 = vector.shape_cast %40 : vector<8x256xf32> to vector<2x4x256xf32>
    %42 = arith.truncf %41 : vector<2x4x256xf32> to vector<2x4x256xbf16>
    %43 = vector.shape_cast %42 : vector<2x4x256xbf16> to vector<2x1024xbf16>
    %c0_15 = arith.constant 0 : index
    %c0_16 = arith.constant 0 : index
    %44 = vector.load %arg6[%c0_15, %c0_16] : memref<1024x512xbf16, #tpu.memory_space<vmem>>, vector<1024x512xbf16>
    %cst_17 = arith.constant dense<0.000000e+00> : vector<2x512xf32>
    %45 = tpu.matmul %43, %44, %cst_17 {dimension_numbers = #tpu.dot_dimension_numbers<[1], [0], [0], [1], [0, 0, 1, 1], [], []>} : vector<2x1024xbf16>, vector<1024x512xbf16>, vector<2x512xf32> -> vector<2x512xf32>
    %c0_18 = arith.constant 0 : index
    %c0_19 = arith.constant 0 : index
    %46 = vector.load %arg7[%c0_18, %c0_19] : memref<1x512xf32, #tpu.memory_space<vmem>>, vector<1x512xf32>
    %47 = vector.broadcast %46 : vector<1x512xf32> to vector<2x512xf32>
    %48 = arith.addf %45, %47 : vector<2x512xf32>
    %cst_20 = arith.constant 0.000000e+00 : f32
    %49 = vector.broadcast %cst_20 : f32 to vector<2x512xf32>
    %50 = arith.maximumf %48, %49 : vector<2x512xf32>
    %51 = arith.truncf %50 : vector<2x512xf32> to vector<2x512xbf16>
    %c0_21 = arith.constant 0 : index
    %c0_22 = arith.constant 0 : index
    %52 = vector.load %arg8[%c0_21, %c0_22] : memref<512x10xbf16, #tpu.memory_space<vmem>>, vector<512x10xbf16>
    %cst_23 = arith.constant dense<0.000000e+00> : vector<2x10xf32>
    %53 = tpu.matmul %51, %52, %cst_23 {dimension_numbers = #tpu.dot_dimension_numbers<[1], [0], [0], [1], [0, 0, 1, 1], [], []>} : vector<2x512xbf16>, vector<512x10xbf16>, vector<2x10xf32> -> vector<2x10xf32>
    %c0_24 = arith.constant 0 : index
    %c0_25 = arith.constant 0 : index
    %54 = vector.load %arg9[%c0_24, %c0_25] : memref<1x10xf32, #tpu.memory_space<vmem>>, vector<1x10xf32>
    %55 = vector.broadcast %54 : vector<1x10xf32> to vector<2x10xf32>
    %56 = arith.addf %53, %55 : vector<2x10xf32>
    %cst_26 = arith.constant dense<0xFF800000> : vector<2xf32>
    %57 = vector.multi_reduction <maximumf>, %56, %cst_26 [1] : vector<2x10xf32> to vector<2xf32>
    %58 = vector.shape_cast %57 : vector<2xf32> to vector<2x1xf32>
    %59 = vector.broadcast %58 : vector<2x1xf32> to vector<2x10xf32>
    %60 = arith.subf %56, %59 : vector<2x10xf32>
    %61 = math.exp %60 : vector<2x10xf32>
    %cst_27 = arith.constant dense<0.000000e+00> : vector<2xf32>
    %62 = vector.multi_reduction <add>, %61, %cst_27 [1] : vector<2x10xf32> to vector<2xf32>
    %63 = vector.shape_cast %62 : vector<2xf32> to vector<2x1xf32>
    %64 = math.log %63 : vector<2x1xf32>
    %65 = vector.broadcast %64 : vector<2x1xf32> to vector<2x10xf32>
    %66 = arith.subf %60, %65 : vector<2x10xf32>
    %c0_28 = arith.constant 0 : index
    %c0_29 = arith.constant 0 : index
    %67 = vector.load %arg10[%c0_28, %c0_29] : memref<2x10xf32, #tpu.memory_space<vmem>>, vector<2x10xf32>
    tpu.vector_store %arg10[%c0_28, %c0_29], %66 {strides = array<i32>} : memref<2x10xf32, #tpu.memory_space<vmem>>, vector<2x10xf32>,
    return
  }
  func.func @transform_0(%arg0: i32) -> (i32, i32, i32) {
    %c0_i32 = arith.constant 0 : i32
    %c0_i32_0 = arith.constant 0 : i32
    %c0_i32_1 = arith.constant 0 : i32
    return %arg0, %c0_i32, %c0_i32_0 : i32, i32, i32
  }
  func.func @transform_1(%arg0: i32) -> (i32, i32) {
    %c0_i32 = arith.constant 0 : i32
    %c0_i32_0 = arith.constant 0 : i32
    %c0_i32_1 = arith.constant 0 : i32
    return %c0_i32, %c0_i32_0 : i32, i32
  }
  func.func @transform_2(%arg0: i32) -> (i32, i32) {
    %c0_i32 = arith.constant 0 : i32
    %c0_i32_0 = arith.constant 0 : i32
    %c0_i32_1 = arith.constant 0 : i32
    return %c0_i32, %c0_i32_0 : i32, i32
  }
  func.func @transform_3(%arg0: i32) -> (i32, i32) {
    %c0_i32 = arith.constant 0 : i32
    %c0_i32_0 = arith.constant 0 : i32
    %c0_i32_1 = arith.constant 0 : i32
    return %c0_i32, %c0_i32_0 : i32, i32
  }
  func.func @transform_4(%arg0: i32) -> (i32, i32) {
    %c0_i32 = arith.constant 0 : i32
    %c0_i32_0 = arith.constant 0 : i32
    %c0_i32_1 = arith.constant 0 : i32
    return %c0_i32, %c0_i32_0 : i32, i32
  }
  func.func @transform_5(%arg0: i32) -> (i32, i32) {
    %c0_i32 = arith.constant 0 : i32
    %c0_i32_0 = arith.constant 0 : i32
    %c0_i32_1 = arith.constant 0 : i32
    return %c0_i32, %c0_i32_0 : i32, i32
  }
  func.func @transform_6(%arg0: i32) -> (i32, i32) {
    %c0_i32 = arith.constant 0 : i32
    %c0_i32_0 = arith.constant 0 : i32
    %c0_i32_1 = arith.constant 0 : i32
    return %c0_i32, %c0_i32_0 : i32, i32
  }
  func.func @transform_7(%arg0: i32) -> (i32, i32) {
    %c0_i32 = arith.constant 0 : i32
    %c0_i32_0 = arith.constant 0 : i32
    %c0_i32_1 = arith.constant 0 : i32
    return %c0_i32, %c0_i32_0 : i32, i32
  }
  func.func @transform_8(%arg0: i32) -> (i32, i32) {
    %c0_i32 = arith.constant 0 : i32
    %c0_i32_0 = arith.constant 0 : i32
    %c0_i32_1 = arith.constant 0 : i32
    return %c0_i32, %c0_i32_0 : i32, i32
  }
  func.func @transform_9(%arg0: i32) -> (i32, i32) {
    %c0_i32 = arith.constant 0 : i32
    %c0_i32_0 = arith.constant 0 : i32
    return %arg0, %c0_i32 : i32, i32
  }
}

</mosaic_0001>

<llo_original>
// kernel: tpu_custom_call.1
$region0: #{tpu_custom_call.1}
  #allocation0 [shape = 'u32[]', space=smem, size = 0x4, offset = 0x4, fixed_abs, tag = 'smem constant byte address 0x4 - core index']
  #allocation1 [shape = 'u32[72,128]{1,0:T(1,128)}', space=vmem, size = 0x9000, scoped, tag = 'internal scratch']
  %s0 = inlined_call_operand.vmem [shape: bf16[2,28,28], index: 0, kind: input, shape index: {}]
  %s1 = inlined_call_operand.hbm [shape: bf16[140,512], index: 1, kind: input, shape index: {}]
  %s2 = inlined_call_operand.hbm [shape: f32[1,512], index: 2, kind: input, shape index: {}]
  %s3 = inlined_call_operand.hbm [shape: bf16[1280,512], index: 3, kind: input, shape index: {}]
  %s4 = inlined_call_operand.hbm [shape: f32[1,512], index: 4, kind: input, shape index: {}]
  %s5 = inlined_call_operand.hbm [shape: bf16[1024,512], index: 5, kind: input, shape index: {}]
  %s6 = inlined_call_operand.hbm [shape: f32[1,512], index: 6, kind: input, shape index: {}]
  %s7 = inlined_call_operand.vmem [shape: bf16[512,10], index: 7, kind: input, shape index: {}]
  %s8 = inlined_call_operand.hbm [shape: f32[1,10], index: 8, kind: input, shape index: {}]
  %s9 = inlined_call_operand.hbm [shape: f32[2,10], index: 9, kind: output, shape index: {}]
  %s10 = sld [smem:[#allocation0]]
  $region74: #{tpu_custom_call.1} parent=0
    _
  %s12 = ssub.s32 1, %s10
  %s13 = scalar_select 0, %s12, %s10
  $region1: #{tpu_custom_call.1} parent=0
    #allocation2 [shape = 'u8[147456]{0}', space=vmem, size = 0x24000, scoped, tag = 'input window, operand 1, single buffered']
    #allocation3 [shape = 's32[1]{0}', space=sflag, size = 0x4, scoped, tag = 'scoped memory for tpu_custom_call.1']
    #allocation4 [shape = 's32[1]{0}', space=sflag, size = 0x4, scoped, tag = 'scoped memory for tpu_custom_call.1']
    #allocation5 [shape = 'u8[2048]{0}', space=vmem, size = 0x800, scoped, tag = 'input window, operand 2, single buffered']
    #allocation6 [shape = 's32[1]{0}', space=sflag, size = 0x4, scoped, tag = 'scoped memory for tpu_custom_call.1']
    #allocation7 [shape = 'u8[1310720]{0}', space=vmem, size = 0x140000, scoped, tag = 'input window, operand 3, single buffered']
    #allocation8 [shape = 'u8[2048]{0}', space=vmem, size = 0x800, scoped, tag = 'input window, operand 4, single buffered']
    #allocation9 [shape = 's32[1]{0}', space=sflag, size = 0x4, scoped, tag = 'scoped memory for tpu_custom_call.1']
    #allocation10 [shape = 'u8[1048576]{0}', space=vmem, size = 0x100000, scoped, tag = 'input window, operand 5, single buffered']
    #allocation11 [shape = 'u8[2048]{0}', space=vmem, size = 0x800, scoped, tag = 'input window, operand 6, single buffered']
    #allocation12 [shape = 's32[1]{0}', space=sflag, size = 0x4, scoped, tag = 'scoped memory for tpu_custom_call.1']
    #allocation13 [shape = 'u8[512]{0}', space=vmem, size = 0x400, scoped, tag = 'input window, operand 8, single buffered']
    #allocation14 [shape = 'u8[1024]{0}', space=vmem, size = 0x400, scoped, tag = 'output window, operand 0, single buffered']
    %14 = vsyncpa [#allocation3], 0
    %15 = vsyncpa [#allocation6], 0
    %16 = vsyncpa [#allocation9], 0
    %17 = vsyncpa [#allocation12], 0
    %18 = vsyncpa [#allocation4], 0
    // Predicated region
    $region2: #{tpu_custom_call.1} parent=1 // pred_check
      _
    $region3: #{tpu_custom_call.1} parent=1 // pred_check_branch
      %20 = sbr.rel (0) target = $region5
    $region4: #{tpu_custom_call.1} parent=1 // pred_region
      _
    $region5: #{tpu_custom_call.1} parent=1 // pred_fallthru
      _
    // Predicated region
    $region6: #{tpu_custom_call.1} parent=1 // pred_check
      _
    $region7: #{tpu_custom_call.1} parent=1 // pred_check_branch
      %22 = sbr.rel (0) target = $region9
    $region8: #{tpu_custom_call.1} parent=1 // pred_region
      %24 = vsyncadd [#allocation3], 0
      %s25 = sshll.u32 %s1, 4
      %s26 = int_to_ptr.hbm [resolvable:$true] %s25
      %s27 = sshll.u32 [#allocation2], 4
      %s28 = int_to_ptr.vmem [resolvable:$true] %s27
      %33 = dma.hbm_to_vmem [thread:$0]  %s26, 4608, %s28, [#allocation3], 256, 256, 16
    $region9: #{tpu_custom_call.1} parent=1 // pred_fallthru
      _
    // Predicated region
    $region10: #{tpu_custom_call.1} parent=1 // pred_check
      _
    $region11: #{tpu_custom_call.1} parent=1 // pred_check_branch
      %35 = sbr.rel (0) target = $region13
    $region12: #{tpu_custom_call.1} parent=1 // pred_region
      %37 = vsyncadd [#allocation6], 0
      %s39 = sshll.u32 %s2, 4
      %s40 = int_to_ptr.hbm [resolvable:$true] %s39
      %s41 = sshll.u32 [#allocation5], 4
      %s42 = int_to_ptr.vmem [resolvable:$true] %s41
      %44 = dma.hbm_to_vmem [thread:$0]  %s40, 64, %s42, [#allocation6]
    $region13: #{tpu_custom_call.1} parent=1 // pred_fallthru
      _
    // Predicated region
    $region14: #{tpu_custom_call.1} parent=1 // pred_check
      _
    $region15: #{tpu_custom_call.1} parent=1 // pred_check_branch
      %46 = sbr.rel (0) target = $region17
    $region16: #{tpu_custom_call.1} parent=1 // pred_region
      %48 = vsyncadd [#allocation6], 0
      %s49 = sshll.u32 %s3, 4
      %s50 = int_to_ptr.hbm [resolvable:$true] %s49
      %s51 = sshll.u32 [#allocation7], 4
      %s52 = int_to_ptr.vmem [resolvable:$true] %s51
      %57 = dma.hbm_to_vmem [thread:$0]  %s50, 40960, %s52, [#allocation6], 256, 256, 16
    $region17: #{tpu_custom_call.1} parent=1 // pred_fallthru
      _
    // Predicated region
    $region18: #{tpu_custom_call.1} parent=1 // pred_check
      _
    $region19: #{tpu_custom_call.1} parent=1 // pred_check_branch
      %59 = sbr.rel (0) target = $region21
    $region20: #{tpu_custom_call.1} parent=1 // pred_region
      %61 = vsyncadd [#allocation9], 0
      %s63 = sshll.u32 %s4, 4
      %s64 = int_to_ptr.hbm [resolvable:$true] %s63
      %s65 = sshll.u32 [#allocation8], 4
      %s66 = int_to_ptr.vmem [resolvable:$true] %s65
      %68 = dma.hbm_to_vmem [thread:$0]  %s64, 64, %s66, [#allocation9]
    $region21: #{tpu_custom_call.1} parent=1 // pred_fallthru
      _
    // Predicated region
    $region22: #{tpu_custom_call.1} parent=1 // pred_check
      _
    $region23: #{tpu_custom_call.1} parent=1 // pred_check_branch
      %70 = sbr.rel (0) target = $region25
    $region24: #{tpu_custom_call.1} parent=1 // pred_region
      %72 = vsyncadd [#allocation9], 0
      %s73 = sshll.u32 %s5, 4
      %s74 = int_to_ptr.hbm [resolvable:$true] %s73
      %s75 = sshll.u32 [#allocation10], 4
      %s76 = int_to_ptr.vmem [resolvable:$true] %s75
      %81 = dma.hbm_to_vmem [thread:$0]  %s74, 32768, %s76, [#allocation9], 256, 256, 16
    $region25: #{tpu_custom_call.1} parent=1 // pred_fallthru
      _
    // Predicated region
    $region26: #{tpu_custom_call.1} parent=1 // pred_check
      _
    $region27: #{tpu_custom_call.1} parent=1 // pred_check_branch
      %83 = sbr.rel (0) target = $region29
    $region28: #{tpu_custom_call.1} parent=1 // pred_region
      %85 = vsyncadd [#allocation12], 0
      %s87 = sshll.u32 %s6, 4
      %s88 = int_to_ptr.hbm [resolvable:$true] %s87
      %s89 = sshll.u32 [#allocation11], 4
      %s90 = int_to_ptr.vmem [resolvable:$true] %s89
      %92 = dma.hbm_to_vmem [thread:$0]  %s88, 64, %s90, [#allocation12]
    $region29: #{tpu_custom_call.1} parent=1 // pred_fallthru
      _
    // Predicated region
    $region30: #{tpu_custom_call.1} parent=1 // pred_check
      _
    $region31: #{tpu_custom_call.1} parent=1 // pred_check_branch
      %94 = sbr.rel (0) target = $region33
    $region32: #{tpu_custom_call.1} parent=1 // pred_region
      _
    $region33: #{tpu_custom_call.1} parent=1 // pred_fallthru
      _
    // Predicated region
    $region34: #{tpu_custom_call.1} parent=1 // pred_check
      _
    $region35: #{tpu_custom_call.1} parent=1 // pred_check_branch
      %96 = sbr.rel (0) target = $region37
    $region36: #{tpu_custom_call.1} parent=1 // pred_region
      %98 = vsyncadd [#allocation12], 0
      %s100 = sshll.u32 %s8, 4
      %s101 = int_to_ptr.hbm [resolvable:$true] %s100
      %s102 = sshll.u32 [#allocation13], 4
      %s103 = int_to_ptr.vmem [resolvable:$true] %s102
      %105 = dma.hbm_to_vmem [thread:$0]  %s101, 16, %s103, [#allocation12]
    $region37: #{tpu_custom_call.1} parent=1 // pred_fallthru
      _
    // Predicated region
    $region38: #{tpu_custom_call.1} parent=1 // pred_check
      _
    $region39: #{tpu_custom_call.1} parent=1 // pred_check_branch
      %107 = sbr.rel (0) target = $region41
    $region40: #{tpu_custom_call.1} parent=1 // pred_region
      %109 = dma.done [#allocation3], 4608
    $region41: #{tpu_custom_call.1} parent=1 // pred_fallthru
      _
    // Predicated region
    $region42: #{tpu_custom_call.1} parent=1 // pred_check
      _
    $region43: #{tpu_custom_call.1} parent=1 // pred_check_branch
      %111 = sbr.rel (0) target = $region45
    $region44: #{tpu_custom_call.1} parent=1 // pred_region
      %113 = dma.done [#allocation6], 64
    $region45: #{tpu_custom_call.1} parent=1 // pred_fallthru
      _
    // Predicated region
    $region46: #{tpu_custom_call.1} parent=1 // pred_check
      _
    $region47: #{tpu_custom_call.1} parent=1 // pred_check_branch
      %115 = sbr.rel (0) target = $region49
    $region48: #{tpu_custom_call.1} parent=1 // pred_region
      %117 = dma.done [#allocation6], 40960
    $region49: #{tpu_custom_call.1} parent=1 // pred_fallthru
      _
    // Predicated region
    $region50: #{tpu_custom_call.1} parent=1 // pred_check
      _
    $region51: #{tpu_custom_call.1} parent=1 // pred_check_branch
      %119 = sbr.rel (0) target = $region53
    $region52: #{tpu_custom_call.1} parent=1 // pred_region
      %121 = dma.done [#allocation9], 64
    $region53: #{tpu_custom_call.1} parent=1 // pred_fallthru
      _
    // Predicated region
    $region54: #{tpu_custom_call.1} parent=1 // pred_check
      _
    $region55: #{tpu_custom_call.1} parent=1 // pred_check_branch
      %123 = sbr.rel (0) target = $region57
    $region56: #{tpu_custom_call.1} parent=1 // pred_region
      %125 = dma.done [#allocation9], 32768
    $region57: #{tpu_custom_call.1} parent=1 // pred_fallthru
      _
    // Predicated region
    $region58: #{tpu_custom_call.1} parent=1 // pred_check
      _
    $region59: #{tpu_custom_call.1} parent=1 // pred_check_branch
      %127 = sbr.rel (0) target = $region61
    $region60: #{tpu_custom_call.1} parent=1 // pred_region
      %129 = dma.done [#allocation12], 64
    $region61: #{tpu_custom_call.1} parent=1 // pred_fallthru
      _
    // Predicated region
    $region62: #{tpu_custom_call.1} parent=1 // pred_check
      _
    $region63: #{tpu_custom_call.1} parent=1 // pred_check_branch
      %131 = sbr.rel (0) target = $region65
    $region64: #{tpu_custom_call.1} parent=1 // pred_region
      %133 = dma.done [#allocation12], 16
    $region65: #{tpu_custom_call.1} parent=1 // pred_fallthru
      _
    %v135 = vld [vmem:[%s0] sm:$0xf]
    %v136 = vld [vmem:[%s0 + $0x4] sm:$0xf]
    %v137 = vld [vmem:[%s0 + $0x8] sm:$0xf]
    %v138 = vld [vmem:[%s0 + $0xc] sm:$0x3]
    %v139 = vld [vmem:[%s0 + $0x10] sm:$0xf]
    %v140 = vld [vmem:[%s0 + $0x14] sm:$0xf]
    %v141 = vld [vmem:[%s0 + $0x18] sm:$0xf]
    %v142 = vld [vmem:[%s0 + $0x1c] sm:$0x3]
    %v149 = vunpack.c.l.b16 %v135
    %v150 = vunpack.c.l.b16 %v136
    %v151 = vunpack.c.l.b16 %v137
    %v152 = vunpack.c.l.b16 %v139
    %v153 = vunpack.c.l.b16 %v140
    %v154 = vunpack.c.l.b16 %v141
    %v155 = vpack.c.b16 %v150, %v149
    %v156 = vpack.c.b16 %v151, %v151
    %v157 = vpack.c.b16 %v153, %v152
    %v158 = vpack.c.b16 %v154, %v154
    %v161 = vunpack.c.l.b16 %v138
    %v162 = vunpack.c.l.b16 %v142
    %v163 = vpack.c.b16 %v161, %v151
    %v164 = vpack.c.b16 %v162, %v154
    %vm165 = vsmask.f32 7424
    %v167 = vshrl.u32 %v155, 16
    %v169 = vshll.u32 %v155, 16
    %v171 = vrot.slane %v169, 1
    %v172 = vor.u32 %v167, %v171
    %v174 = vshll.u32 %v163, 16
    %v176 = vrot.slane %v174, 1
    %v177 = vsel %vm165, %v172, %v176
    %v178 = vshrl.u32 %v163, 16
    %v180 = vor.u32 %v178, %v176
    %v182 = vshrl.u32 %v157, 16
    %v184 = vshll.u32 %v157, 16
    %v186 = vrot.slane %v184, 1
    %v187 = vor.u32 %v182, %v186
    %v189 = vshll.u32 %v164, 16
    %v191 = vrot.slane %v189, 1
    %v192 = vsel %vm165, %v187, %v191
    %v193 = vshrl.u32 %v164, 16
    %v195 = vor.u32 %v193, %v191
    %196 = vrot.lane.b32.xlu0 %v177, 28
    %v197 = vpop.permute.xlu0 %196
    %198 = vrot.lane.b32.xlu0 %v180, 28
    %v199 = vpop.permute.xlu0 %198
    %200 = vrot.lane.b32.xlu0 %v192, 28
    %v201 = vpop.permute.xlu0 %200
    %202 = vrot.lane.b32.xlu0 %v195, 28
    %v203 = vpop.permute.xlu0 %202
    %vm204 = vcmask 1046528
    %v205 = vrot.slane %v155, 1
    %v206 = vrot.slane %v163, 1
    %v207 = vsel %vm204, %v205, %v206
    %v208 = vrot.slane %v157, 1
    %v209 = vrot.slane %v164, 1
    %v210 = vsel %vm204, %v208, %v209
    %211 = vrot.lane.b32.xlu0 %v207, 56
    %v212 = vpop.permute.xlu0 %211
    %213 = vrot.lane.b32.xlu0 %v206, 56
    %v214 = vpop.permute.xlu0 %213
    %215 = vrot.lane.b32.xlu0 %v210, 56
    %v216 = vpop.permute.xlu0 %215
    %217 = vrot.lane.b32.xlu0 %v209, 56
    %v218 = vpop.permute.xlu0 %217
    %vm219 = vsmask.f32 6400
    %v220 = vrot.slane %v167, 1
    %v221 = vrot.slane %v169, 2
    %v222 = vor.u32 %v220, %v221
    %v223 = vrot.slane %v178, 1
    %v224 = vrot.slane %v174, 2
    %v225 = vor.u32 %v223, %v224
    %v226 = vsel %vm219, %v222, %v225
    %v227 = vrot.slane %v182, 1
    %v228 = vrot.slane %v184, 2
    %v229 = vor.u32 %v227, %v228
    %v230 = vrot.slane %v193, 1
    %v231 = vrot.slane %v189, 2
    %v232 = vor.u32 %v230, %v231
    %v233 = vsel %vm219, %v229, %v232
    %234 = vrot.lane.b32.xlu0 %v226, 84
    %v235 = vpop.permute.xlu0 %234
    %236 = vrot.lane.b32.xlu0 %v225, 84
    %v237 = vpop.permute.xlu0 %236
    %238 = vrot.lane.b32.xlu0 %v233, 84
    %v239 = vpop.permute.xlu0 %238
    %240 = vrot.lane.b32.xlu0 %v232, 84
    %v241 = vpop.permute.xlu0 %240
    %vm242 = vcmask 1045504
    %v243 = vrot.slane %v155, 2
    %v244 = vrot.slane %v163, 2
    %v245 = vsel %vm242, %v243, %v244
    %v246 = vrot.slane %v157, 2
    %v247 = vrot.slane %v164, 2
    %v248 = vsel %vm242, %v246, %v247
    %249 = vrot.lane.b32.xlu0 %v245, 112
    %v250 = vpop.permute.xlu0 %249
    %251 = vrot.lane.b32.xlu0 %v244, 112
    %v252 = vpop.permute.xlu0 %251
    %253 = vrot.lane.b32.xlu0 %v248, 112
    %v254 = vpop.permute.xlu0 %253
    %255 = vrot.lane.b32.xlu0 %v247, 112
    %v256 = vpop.permute.xlu0 %255
    %vm257 = vcmask 228352
    %v259 = vsel %vm257, %v155, %v197
    %v262 = vsel %vm257, %v156, %v199
    %v264 = vsel %vm257, %v157, %v201
    %v267 = vsel %vm257, %v158, %v203
    %vm268 = vcmask 457728
    %v270 = vsel %vm268, %v259, %v212
    %v272 = vsel %vm268, %v262, %v214
    %v274 = vsel %vm268, %v264, %v216
    %v276 = vsel %vm268, %v267, %v218
    %vm277 = vcmask 687104
    %v279 = vsel %vm277, %v270, %v235
    %v281 = vsel %vm277, %v272, %v237
    %v283 = vsel %vm277, %v274, %v239
    %v285 = vsel %vm277, %v276, %v241
    %vm286 = vcmask 916480
    %v288 = vsel %vm286, %v279, %v250
    %v290 = vsel %vm286, %v281, %v252
    %v292 = vsel %vm286, %v283, %v254
    %v294 = vsel %vm286, %v285, %v256
    %v299 = vunpack.c.l.b16 %v288
    %v300 = vunpack.c.l.b16 %v250
    %v301 = vunpack.c.h.b16 %v288
    %v302 = vunpack.c.h.b16 %v250
    %v303 = vunpack.c.l.b16 %v290
    %v304 = vunpack.c.l.b16 %v252
    %v305 = vunpack.c.l.b16 %v292
    %v306 = vunpack.c.l.b16 %v254
    %v307 = vunpack.c.h.b16 %v292
    %v308 = vunpack.c.h.b16 %v254
    %v309 = vunpack.c.l.b16 %v294
    %v310 = vunpack.c.l.b16 %v256
    %v311 = vld [vmem:[#allocation2] sm:$0xff]
    %v312 = vld [vmem:[#allocation2 + $0x8] sm:$0xff]
    %v313 = vld [vmem:[#allocation2 + $0x10] sm:$0xff]
    %v314 = vld [vmem:[#allocation2 + $0x18] sm:$0xff]
    %v315 = vld [vmem:[#allocation2 + $0x20] sm:$0xff]
    %v316 = vld [vmem:[#allocation2 + $0x28] sm:$0xff]
    %v317 = vld [vmem:[#allocation2 + $0x30] sm:$0xff]
    %v318 = vld [vmem:[#allocation2 + $0x38] sm:$0xff]
    %v319 = vld [vmem:[#allocation2 + $0x40] sm:$0xff]
    %v320 = vld [vmem:[#allocation2 + $0x48] sm:$0xff]
    %v321 = vld [vmem:[#allocation2 + $0x50] sm:$0xff]
    %v322 = vld [vmem:[#allocation2 + $0x58] sm:$0xff]
    %v323 = vld [vmem:[#allocation2 + $0x60] sm:$0xff]
    %v324 = vld [vmem:[#allocation2 + $0x68] sm:$0xff]
    %v325 = vld [vmem:[#allocation2 + $0x70] sm:$0xff]
    %v326 = vld [vmem:[#allocation2 + $0x78] sm:$0xff]
    %v327 = vld [vmem:[#allocation2 + $0x80] sm:$0xff]
    %v328 = vld [vmem:[#allocation2 + $0x88] sm:$0xff]
    %v329 = vld [vmem:[#allocation2 + $0x90] sm:$0xff]
    %v330 = vld [vmem:[#allocation2 + $0x98] sm:$0xff]
    %v331 = vld [vmem:[#allocation2 + $0xa0] sm:$0xff]
    %v332 = vld [vmem:[#allocation2 + $0xa8] sm:$0xff]
    %v333 = vld [vmem:[#allocation2 + $0xb0] sm:$0xff]
    %v334 = vld [vmem:[#allocation2 + $0xb8] sm:$0xff]
    %v335 = vld [vmem:[#allocation2 + $0xc0] sm:$0xff]
    %v336 = vld [vmem:[#allocation2 + $0xc8] sm:$0xff]
    %v337 = vld [vmem:[#allocation2 + $0xd0] sm:$0xff]
    %v338 = vld [vmem:[#allocation2 + $0xd8] sm:$0xff]
    %v339 = vld [vmem:[#allocation2 + $0xe0] sm:$0xff]
    %v340 = vld [vmem:[#allocation2 + $0xe8] sm:$0xff]
    %v341 = vld [vmem:[#allocation2 + $0xf0] sm:$0xff]
    %v342 = vld [vmem:[#allocation2 + $0xf8] sm:$0xff]
    %v343 = vld [vmem:[#allocation2 + $0x100] sm:$0xff]
    %v344 = vld [vmem:[#allocation2 + $0x108] sm:$0xff]
    %v345 = vld [vmem:[#allocation2 + $0x110] sm:$0x33]
    %v346 = vld [vmem:[#allocation2 + $0x118] sm:$0x33]
    %v347 = vld [vmem:[#allocation5] sm:$0xf]
    %v349 = vperm.slane %v347, 0
    %v350 = vperm.slane %v347, 1
    %v351 = vperm.slane %v347, 2
    %v352 = vperm.slane %v347, 3
    %v357 = vpack.c.b16 %v301, %v299
    %v358 = vpack.c.b16 %v302, %v300
    %v359 = vpack.c.b16 %v305, %v303
    %v360 = vpack.c.b16 %v306, %v304
    %v361 = vpack.c.b16 %v309, %v307
    %v362 = vpack.c.b16 %v310, %v308
    %v402 = vunpack.c.l.b16 %v311
    %v403 = vunpack.c.h.b16 %v311
    %v404 = vunpack.c.l.b16 %v312
    %v405 = vunpack.c.h.b16 %v312
    %v406 = vunpack.c.l.b16 %v313
    %v407 = vunpack.c.h.b16 %v313
    %v408 = vunpack.c.l.b16 %v314
    %v409 = vunpack.c.h.b16 %v314
    %v410 = vunpack.c.l.b16 %v315
    %v411 = vunpack.c.h.b16 %v315
    %v412 = vunpack.c.l.b16 %v316
    %v413 = vunpack.c.h.b16 %v316
    %v414 = vunpack.c.l.b16 %v317
    %v415 = vunpack.c.h.b16 %v317
    %v416 = vunpack.c.l.b16 %v318
    %v417 = vunpack.c.h.b16 %v318
    %v418 = vunpack.c.l.b16 %v319
    %v419 = vunpack.c.h.b16 %v319
    %v420 = vunpack.c.l.b16 %v320
    %v421 = vunpack.c.h.b16 %v320
    %v422 = vunpack.c.l.b16 %v321
    %v423 = vunpack.c.h.b16 %v321
    %v424 = vunpack.c.l.b16 %v322
    %v425 = vunpack.c.h.b16 %v322
    %v426 = vunpack.c.l.b16 %v323
    %v427 = vunpack.c.h.b16 %v323
    %v428 = vunpack.c.l.b16 %v324
    %v429 = vunpack.c.h.b16 %v324
    %v430 = vunpack.c.l.b16 %v325
    %v431 = vunpack.c.h.b16 %v325
    %v432 = vunpack.c.l.b16 %v326
    %v433 = vunpack.c.h.b16 %v326
    %v434 = vunpack.c.l.b16 %v327
    %v435 = vunpack.c.h.b16 %v327
    %v436 = vunpack.c.l.b16 %v328
    %v437 = vunpack.c.h.b16 %v328
    %v438 = vunpack.c.l.b16 %v329
    %v439 = vunpack.c.h.b16 %v329
    %v440 = vunpack.c.l.b16 %v330
    %v441 = vunpack.c.h.b16 %v330
    %v442 = vunpack.c.l.b16 %v331
    %v443 = vunpack.c.h.b16 %v331
    %v444 = vunpack.c.l.b16 %v332
    %v445 = vunpack.c.h.b16 %v332
    %v446 = vunpack.c.l.b16 %v333
    %v447 = vunpack.c.h.b16 %v333
    %v448 = vunpack.c.l.b16 %v334
    %v449 = vunpack.c.h.b16 %v334
    %v450 = vunpack.c.l.b16 %v335
    %v451 = vunpack.c.h.b16 %v335
    %v452 = vunpack.c.l.b16 %v336
    %v453 = vunpack.c.h.b16 %v336
    %v454 = vunpack.c.l.b16 %v337
    %v455 = vunpack.c.h.b16 %v337
    %v456 = vunpack.c.l.b16 %v338
    %v457 = vunpack.c.h.b16 %v338
    %v458 = vunpack.c.l.b16 %v339
    %v459 = vunpack.c.h.b16 %v339
    %v460 = vunpack.c.l.b16 %v340
    %v461 = vunpack.c.h.b16 %v340
    %v462 = vunpack.c.l.b16 %v341
    %v463 = vunpack.c.h.b16 %v341
    %v464 = vunpack.c.l.b16 %v342
    %v465 = vunpack.c.h.b16 %v342
    %v466 = vunpack.c.l.b16 %v343
    %v467 = vunpack.c.h.b16 %v343
    %v468 = vunpack.c.l.b16 %v344
    %v469 = vunpack.c.h.b16 %v344
    %v470 = vunpack.c.l.b16 %v345
    %v471 = vunpack.c.h.b16 %v345
    %v472 = vunpack.c.l.b16 %v346
    %v473 = vunpack.c.h.b16 %v346
    %v474 = vpack.c.b16 %v406, %v402
    %v475 = vpack.c.b16 %v407, %v403
    %v476 = vpack.c.b16 %v408, %v404
    %v477 = vpack.c.b16 %v409, %v405
    %v478 = vpack.c.b16 %v414, %v410
    %v479 = vpack.c.b16 %v415, %v411
    %v480 = vpack.c.b16 %v416, %v412
    %v481 = vpack.c.b16 %v417, %v413
    %v482 = vpack.c.b16 %v422, %v418
    %v483 = vpack.c.b16 %v423, %v419
    %v484 = vpack.c.b16 %v424, %v420
    %v485 = vpack.c.b16 %v425, %v421
    %v486 = vpack.c.b16 %v430, %v426
    %v487 = vpack.c.b16 %v431, %v427
    %v488 = vpack.c.b16 %v432, %v428
    %v489 = vpack.c.b16 %v433, %v429
    %v490 = vpack.c.b16 %v438, %v434
    %v491 = vpack.c.b16 %v439, %v435
    %v492 = vpack.c.b16 %v440, %v436
    %v493 = vpack.c.b16 %v441, %v437
    %v494 = vpack.c.b16 %v446, %v442
    %v495 = vpack.c.b16 %v447, %v443
    %v496 = vpack.c.b16 %v448, %v444
    %v497 = vpack.c.b16 %v449, %v445
    %v498 = vpack.c.b16 %v454, %v450
    %v499 = vpack.c.b16 %v455, %v451
    %v500 = vpack.c.b16 %v456, %v452
    %v501 = vpack.c.b16 %v457, %v453
    %v502 = vpack.c.b16 %v462, %v458
    %v503 = vpack.c.b16 %v463, %v459
    %v504 = vpack.c.b16 %v464, %v460
    %v505 = vpack.c.b16 %v465, %v461
    %v506 = vpack.c.b16 %v470, %v466
    %v507 = vpack.c.b16 %v471, %v467
    %v508 = vpack.c.b16 %v472, %v468
    %v509 = vpack.c.b16 %v473, %v469
    %vm542 = vcmask 97280
    %v544 = vsel %vm542, %v358, 0
    %v547 = vsel %vm542, %v360, 0
    %v550 = vsel %vm542, %v362, 0
    %vm552 = vcmask 1045504
    %v554 = vsel %vm552, %v506, 0
    %v557 = vsel %vm552, %v507, 0
    %v560 = vsel %vm552, %v508, 0
    %v563 = vsel %vm552, %v509, 0
    %565 = vmatpush.bf16.msra.mxu0 %v502
    %566 = vmatpush.bf16.msra.mxu0 %v498
    %567 = vmatpush.bf16.msra.mxu0 %v494
    %568 = vmatpush.bf16.msra.mxu0 %v490
    %569 = vmatpush.bf16.msra.mxu0 %v486
    %570 = vmatpush.bf16.msra.mxu0 %v482
    %571 = vmatpush.bf16.msra.mxu0 %v478
    %572 = vmatpush.bf16.msra.mxu0 %v474
    %573 = vmatmul.bf16.gmra.mxu0 %v357
    %v574 = vpop.f32.mrf.mxu0
    %v575 = vadd.f32 %v349, %v574
    %v576 = vpop.f32.mrf.mxu0
    %v577 = vadd.f32 %v349, %v576
    %578 = vmatmul.bf16.gmra.mxu0 %v359
    %v579 = vpop.f32.mrf.mxu0
    %v580 = vadd.f32 %v349, %v579
    %v581 = vpop.f32.mrf.mxu0
    %v582 = vadd.f32 %v349, %v581
    %583 = vmatmul.bf16.gmra.mxu0 %v361
    %v584 = vpop.f32.mrf.mxu0
    %v585 = vadd.f32 %v349, %v584
    %v586 = vpop.f32.mrf.mxu0
    %v587 = vadd.f32 %v349, %v586
    %588 = vdwg.mxu0
    %589 = vmatpush.bf16.msra.mxu0 0
    %590 = vmatpush.bf16.msra.mxu0 0
    %591 = vmatpush.bf16.msra.mxu0 0
    %592 = vmatpush.bf16.msra.mxu0 0
    %593 = vmatpush.bf16.msra.mxu0 0
    %594 = vmatpush.bf16.msra.mxu0 0
    %595 = vmatpush.bf16.msra.mxu0 0
    %596 = vmatpush.bf16.msra.mxu0 %v554
    %597 = vmatmul.bf16.gmra.mxu0 %v544
    %v598 = vpop.f32.mrf.mxu0
    %v599 = vadd.f32 %v575, %v598
    %v600 = vpop.f32.mrf.mxu0
    %v601 = vadd.f32 %v577, %v600
    %602 = vmatmul.bf16.gmra.mxu0 %v547
    %v603 = vpop.f32.mrf.mxu0
    %v604 = vadd.f32 %v580, %v603
    %v605 = vpop.f32.mrf.mxu0
    %v606 = vadd.f32 %v582, %v605
    %607 = vmatmul.bf16.gmra.mxu0 %v550
    %v608 = vpop.f32.mrf.mxu0
    %v609 = vadd.f32 %v585, %v608
    %v610 = vpop.f32.mrf.mxu0
    %v611 = vadd.f32 %v587, %v610
    %612 = vdwg.mxu0
    %613 = vmatpush.bf16.msra.mxu0 %v503
    %614 = vmatpush.bf16.msra.mxu0 %v499
    %615 = vmatpush.bf16.msra.mxu0 %v495
    %616 = vmatpush.bf16.msra.mxu0 %v491
    %617 = vmatpush.bf16.msra.mxu0 %v487
    %618 = vmatpush.bf16.msra.mxu0 %v483
    %619 = vmatpush.bf16.msra.mxu0 %v479
    %620 = vmatpush.bf16.msra.mxu0 %v475
    %621 = vmatmul.bf16.gmra.mxu0 %v357
    %v622 = vpop.f32.mrf.mxu0
    %v623 = vadd.f32 %v350, %v622
    %v624 = vpop.f32.mrf.mxu0
    %v625 = vadd.f32 %v350, %v624
    %626 = vmatmul.bf16.gmra.mxu0 %v359
    %v627 = vpop.f32.mrf.mxu0
    %v628 = vadd.f32 %v350, %v627
    %v629 = vpop.f32.mrf.mxu0
    %v630 = vadd.f32 %v350, %v629
    %631 = vmatmul.bf16.gmra.mxu0 %v361
    %v632 = vpop.f32.mrf.mxu0
    %v633 = vadd.f32 %v350, %v632
    %v634 = vpop.f32.mrf.mxu0
    %v635 = vadd.f32 %v350, %v634
    %636 = vdwg.mxu0
    %637 = vmatpush.bf16.msra.mxu0 0
    %638 = vmatpush.bf16.msra.mxu0 0
    %639 = vmatpush.bf16.msra.mxu0 0
    %640 = vmatpush.bf16.msra.mxu0 0
    %641 = vmatpush.bf16.msra.mxu0 0
    %642 = vmatpush.bf16.msra.mxu0 0
    %643 = vmatpush.bf16.msra.mxu0 0
    %644 = vmatpush.bf16.msra.mxu0 %v557
    %645 = vmatmul.bf16.gmra.mxu0 %v544
    %v646 = vpop.f32.mrf.mxu0
    %v647 = vadd.f32 %v623, %v646
    %v648 = vpop.f32.mrf.mxu0
    %v649 = vadd.f32 %v625, %v648
    %650 = vmatmul.bf16.gmra.mxu0 %v547
    %v651 = vpop.f32.mrf.mxu0
    %v652 = vadd.f32 %v628, %v651
    %v653 = vpop.f32.mrf.mxu0
    %v654 = vadd.f32 %v630, %v653
    %655 = vmatmul.bf16.gmra.mxu0 %v550
    %v656 = vpop.f32.mrf.mxu0
    %v657 = vadd.f32 %v633, %v656
    %v658 = vpop.f32.mrf.mxu0
    %v659 = vadd.f32 %v635, %v658
    %660 = vdwg.mxu0
    %661 = vmatpush.bf16.msra.mxu0 %v504
    %662 = vmatpush.bf16.msra.mxu0 %v500
    %663 = vmatpush.bf16.msra.mxu0 %v496
    %664 = vmatpush.bf16.msra.mxu0 %v492
    %665 = vmatpush.bf16.msra.mxu0 %v488
    %666 = vmatpush.bf16.msra.mxu0 %v484
    %667 = vmatpush.bf16.msra.mxu0 %v480
    %668 = vmatpush.bf16.msra.mxu0 %v476
    %669 = vmatmul.bf16.gmra.mxu0 %v357
    %v670 = vpop.f32.mrf.mxu0
    %v671 = vadd.f32 %v351, %v670
    %v672 = vpop.f32.mrf.mxu0
    %v673 = vadd.f32 %v351, %v672
    %674 = vmatmul.bf16.gmra.mxu0 %v359
    %v675 = vpop.f32.mrf.mxu0
    %v676 = vadd.f32 %v351, %v675
    %v677 = vpop.f32.mrf.mxu0
    %v678 = vadd.f32 %v351, %v677
    %679 = vmatmul.bf16.gmra.mxu0 %v361
    %v680 = vpop.f32.mrf.mxu0
    %v681 = vadd.f32 %v351, %v680
    %v682 = vpop.f32.mrf.mxu0
    %v683 = vadd.f32 %v351, %v682
    %684 = vdwg.mxu0
    %685 = vmatpush.bf16.msra.mxu0 0
    %686 = vmatpush.bf16.msra.mxu0 0
    %687 = vmatpush.bf16.msra.mxu0 0
    %688 = vmatpush.bf16.msra.mxu0 0
    %689 = vmatpush.bf16.msra.mxu0 0
    %690 = vmatpush.bf16.msra.mxu0 0
    %691 = vmatpush.bf16.msra.mxu0 0
    %692 = vmatpush.bf16.msra.mxu0 %v560
    %693 = vmatmul.bf16.gmra.mxu0 %v544
    %v694 = vpop.f32.mrf.mxu0
    %v695 = vadd.f32 %v671, %v694
    %v696 = vpop.f32.mrf.mxu0
    %v697 = vadd.f32 %v673, %v696
    %698 = vmatmul.bf16.gmra.mxu0 %v547
    %v699 = vpop.f32.mrf.mxu0
    %v700 = vadd.f32 %v676, %v699
    %v701 = vpop.f32.mrf.mxu0
    %v702 = vadd.f32 %v678, %v701
    %703 = vmatmul.bf16.gmra.mxu0 %v550
    %v704 = vpop.f32.mrf.mxu0
    %v705 = vadd.f32 %v681, %v704
    %v706 = vpop.f32.mrf.mxu0
    %v707 = vadd.f32 %v683, %v706
    %708 = vdwg.mxu0
    %709 = vmatpush.bf16.msra.mxu0 %v505
    %710 = vmatpush.bf16.msra.mxu0 %v501
    %711 = vmatpush.bf16.msra.mxu0 %v497
    %712 = vmatpush.bf16.msra.mxu0 %v493
    %713 = vmatpush.bf16.msra.mxu0 %v489
    %714 = vmatpush.bf16.msra.mxu0 %v485
    %715 = vmatpush.bf16.msra.mxu0 %v481
    %716 = vmatpush.bf16.msra.mxu0 %v477
    %717 = vmatmul.bf16.gmra.mxu0 %v357
    %v718 = vpop.f32.mrf.mxu0
    %v719 = vadd.f32 %v352, %v718
    %v720 = vpop.f32.mrf.mxu0
    %v721 = vadd.f32 %v352, %v720
    %722 = vmatmul.bf16.gmra.mxu0 %v359
    %v723 = vpop.f32.mrf.mxu0
    %v724 = vadd.f32 %v352, %v723
    %v725 = vpop.f32.mrf.mxu0
    %v726 = vadd.f32 %v352, %v725
    %727 = vmatmul.bf16.gmra.mxu0 %v361
    %v728 = vpop.f32.mrf.mxu0
    %v729 = vadd.f32 %v352, %v728
    %v730 = vpop.f32.mrf.mxu0
    %v731 = vadd.f32 %v352, %v730
    %732 = vdwg.mxu0
    %733 = vmatpush.bf16.msra.mxu0 0
    %734 = vmatpush.bf16.msra.mxu0 0
    %735 = vmatpush.bf16.msra.mxu0 0
    %736 = vmatpush.bf16.msra.mxu0 0
    %737 = vmatpush.bf16.msra.mxu0 0
    %738 = vmatpush.bf16.msra.mxu0 0
    %739 = vmatpush.bf16.msra.mxu0 0
    %740 = vmatpush.bf16.msra.mxu0 %v563
    %741 = vmatmul.bf16.gmra.mxu0 %v544
    %v742 = vpop.f32.mrf.mxu0
    %v743 = vadd.f32 %v719, %v742
    %v744 = vpop.f32.mrf.mxu0
    %v745 = vadd.f32 %v721, %v744
    %746 = vmatmul.bf16.gmra.mxu0 %v547
    %v747 = vpop.f32.mrf.mxu0
    %v748 = vadd.f32 %v724, %v747
    %v749 = vpop.f32.mrf.mxu0
    %v750 = vadd.f32 %v726, %v749
    %751 = vmatmul.bf16.gmra.mxu0 %v550
    %v752 = vpop.f32.mrf.mxu0
    %v753 = vadd.f32 %v729, %v752
    %v754 = vpop.f32.mrf.mxu0
    %v755 = vadd.f32 %v731, %v754
    %756 = vdwg.mxu0
    %v757 = vmax.f32 %v599, 0.0
    %v758 = vmax.f32 %v647, 0.0
    %v759 = vmax.f32 %v695, 0.0
    %v760 = vmax.f32 %v743, 0.0
    %v761 = vmax.f32 %v601, 0.0
    %v762 = vmax.f32 %v649, 0.0
    %v763 = vmax.f32 %v697, 0.0
    %v764 = vmax.f32 %v745, 0.0
    %v765 = vmax.f32 %v604, 0.0
    %v766 = vmax.f32 %v652, 0.0
    %v767 = vmax.f32 %v700, 0.0
    %v768 = vmax.f32 %v748, 0.0
    %v769 = vmax.f32 %v606, 0.0
    %v770 = vmax.f32 %v654, 0.0
    %v771 = vmax.f32 %v702, 0.0
    %v772 = vmax.f32 %v750, 0.0
    %v773 = vmax.f32 %v609, 0.0
    %v774 = vmax.f32 %v657, 0.0
    %v775 = vmax.f32 %v705, 0.0
    %v776 = vmax.f32 %v753, 0.0
    %v777 = vmax.f32 %v611, 0.0
    %v778 = vmax.f32 %v659, 0.0
    %v779 = vmax.f32 %v707, 0.0
    %v780 = vmax.f32 %v755, 0.0
    %v781 = vmax.f32 %v757, %v759
    %v782 = vmax.f32 %v758, %v760
    %v783 = vmax.f32 %v761, %v763
    %v784 = vmax.f32 %v762, %v764
    %v785 = vmax.f32 %v765, %v767
    %v786 = vmax.f32 %v766, %v768
    %v787 = vmax.f32 %v769, %v771
    %v788 = vmax.f32 %v770, %v772
    %v789 = vmax.f32 %v773, %v775
    %v790 = vmax.f32 %v774, %v776
    %v791 = vmax.f32 %v777, %v779
    %v792 = vmax.f32 %v778, %v780
    %v805 = vrot.slane %v782, 6
    %v806 = vrot.slane %v784, 6
    %v807 = vrot.slane %v786, 6
    %v808 = vrot.slane %v788, 6
    %v809 = vrot.slane %v790, 6
    %v810 = vrot.slane %v792, 6
    %vm811 = vcmask 1041408
    %v812 = vsel %vm811, %v781, %v805
    %vm813 = vcmask 1043458
    %v814 = vsel %vm813, %v781, %v805
    %v815 = vrot.slane %v814, 2
    %vm816 = vcmask 1045508
    %v817 = vsel %vm816, %v781, %v805
    %v818 = vrot.slane %v817, 4
    %v819 = vsel %vm552, %v805, %v781
    %v820 = vrot.slane %v819, 6
    %v821 = vsel %vm811, %v783, %v806
    %v822 = vsel %vm813, %v783, %v806
    %v823 = vrot.slane %v822, 2
    %v824 = vsel %vm816, %v783, %v806
    %v825 = vrot.slane %v824, 4
    %v826 = vsel %vm552, %v806, %v783
    %v827 = vrot.slane %v826, 6
    %v828 = vsel %vm811, %v785, %v807
    %v829 = vsel %vm813, %v785, %v807
    %v830 = vrot.slane %v829, 2
    %v831 = vsel %vm816, %v785, %v807
    %v832 = vrot.slane %v831, 4
    %v833 = vsel %vm552, %v807, %v785
    %v834 = vrot.slane %v833, 6
    %v835 = vsel %vm811, %v787, %v808
    %v836 = vsel %vm813, %v787, %v808
    %v837 = vrot.slane %v836, 2
    %v838 = vsel %vm816, %v787, %v808
    %v839 = vrot.slane %v838, 4
    %v840 = vsel %vm552, %v808, %v787
    %v841 = vrot.slane %v840, 6
    %v842 = vsel %vm811, %v789, %v809
    %v843 = vsel %vm813, %v789, %v809
    %v844 = vrot.slane %v843, 2
    %v845 = vsel %vm816, %v789, %v809
    %v846 = vrot.slane %v845, 4
    %v847 = vsel %vm552, %v809, %v789
    %v848 = vrot.slane %v847, 6
    %v849 = vsel %vm811, %v791, %v810
    %v850 = vsel %vm813, %v791, %v810
    %v851 = vrot.slane %v850, 2
    %v852 = vsel %vm816, %v791, %v810
    %v853 = vrot.slane %v852, 4
    %v854 = vsel %vm552, %v810, %v791
    %v855 = vrot.slane %v854, 6
    %856 = vst [vmem:[#allocation1] ss:$4 sm:$0xff] %v812
    %v857 = vld.sshfl [vmem:[#allocation1] sm:$0xff pattern:$0x73625140]
    %v858 = vld.sshfl [vmem:[#allocation1 + $0x8] sm:$0xff pattern:$0x73625140]
    %s859 = scalar_lea.vmem [#allocation1], 32
    %860 = vst [vmem:[%s859] ss:$4 sm:$0xff] %v815
    %v861 = vld.sshfl [vmem:[#allocation1 + $0x20] sm:$0xff pattern:$0x73625140]
    %v862 = vld.sshfl [vmem:[#allocation1 + $0x28] sm:$0xff pattern:$0x73625140]
    %863 = vst [vmem:[#allocation1] ss:$4 sm:$0xff] %v818
    %v864 = vld.sshfl [vmem:[#allocation1] sm:$0xff pattern:$0x73625140]
    %v865 = vld.sshfl [vmem:[#allocation1 + $0x8] sm:$0xff pattern:$0x73625140]
    %866 = vst [vmem:[%s859] ss:$4 sm:$0xff] %v820
    %v867 = vld.sshfl [vmem:[#allocation1 + $0x20] sm:$0xff pattern:$0x73625140]
    %v868 = vld.sshfl [vmem:[#allocation1 + $0x28] sm:$0xff pattern:$0x73625140]
    %869 = vst [vmem:[#allocation1] ss:$4 sm:$0xff] %v821
    %v870 = vld.sshfl [vmem:[#allocation1] sm:$0xff pattern:$0x73625140]
    %v871 = vld.sshfl [vmem:[#allocation1 + $0x8] sm:$0xff pattern:$0x73625140]
    %872 = vst [vmem:[%s859] ss:$4 sm:$0xff] %v823
    %v873 = vld.sshfl [vmem:[#allocation1 + $0x20] sm:$0xff pattern:$0x73625140]
    %v874 = vld.sshfl [vmem:[#allocation1 + $0x28] sm:$0xff pattern:$0x73625140]
    %875 = vst [vmem:[#allocation1] ss:$4 sm:$0xff] %v825
    %v876 = vld.sshfl [vmem:[#allocation1] sm:$0xff pattern:$0x73625140]
    %v877 = vld.sshfl [vmem:[#allocation1 + $0x8] sm:$0xff pattern:$0x73625140]
    %878 = vst [vmem:[%s859] ss:$4 sm:$0xff] %v827
    %v879 = vld.sshfl [vmem:[#allocation1 + $0x20] sm:$0xff pattern:$0x73625140]
    %v880 = vld.sshfl [vmem:[#allocation1 + $0x28] sm:$0xff pattern:$0x73625140]
    %881 = vst [vmem:[#allocation1] ss:$4 sm:$0xff] %v828
    %v882 = vld.sshfl [vmem:[#allocation1] sm:$0xff pattern:$0x73625140]
    %v883 = vld.sshfl [vmem:[#allocation1 + $0x8] sm:$0xff pattern:$0x73625140]
    %884 = vst [vmem:[%s859] ss:$4 sm:$0xff] %v830
    %v885 = vld.sshfl [vmem:[#allocation1 + $0x20] sm:$0xff pattern:$0x73625140]
    %v886 = vld.sshfl [vmem:[#allocation1 + $0x28] sm:$0xff pattern:$0x73625140]
    %887 = vst [vmem:[#allocation1] ss:$4 sm:$0xff] %v832
    %v888 = vld.sshfl [vmem:[#allocation1] sm:$0xff pattern:$0x73625140]
    %v889 = vld.sshfl [vmem:[#allocation1 + $0x8] sm:$0xff pattern:$0x73625140]
    %890 = vst [vmem:[%s859] ss:$4 sm:$0xff] %v834
    %v891 = vld.sshfl [vmem:[#allocation1 + $0x20] sm:$0xff pattern:$0x73625140]
    %v892 = vld.sshfl [vmem:[#allocation1 + $0x28] sm:$0xff pattern:$0x73625140]
    %893 = vst [vmem:[#allocation1] ss:$4 sm:$0xff] %v835
    %v894 = vld.sshfl [vmem:[#allocation1] sm:$0xff pattern:$0x73625140]
    %v895 = vld.sshfl [vmem:[#allocation1 + $0x8] sm:$0xff pattern:$0x73625140]
    %896 = vst [vmem:[%s859] ss:$4 sm:$0xff] %v837
    %v897 = vld.sshfl [vmem:[#allocation1 + $0x20] sm:$0xff pattern:$0x73625140]
    %v898 = vld.sshfl [vmem:[#allocation1 + $0x28] sm:$0xff pattern:$0x73625140]
    %899 = vst [vmem:[#allocation1] ss:$4 sm:$0xff] %v839
    %v900 = vld.sshfl [vmem:[#allocation1] sm:$0xff pattern:$0x73625140]
    %v901 = vld.sshfl [vmem:[#allocation1 + $0x8] sm:$0xff pattern:$0x73625140]
    %902 = vst [vmem:[%s859] ss:$4 sm:$0xff] %v841
    %v903 = vld.sshfl [vmem:[#allocation1 + $0x20] sm:$0xff pattern:$0x73625140]
    %v904 = vld.sshfl [vmem:[#allocation1 + $0x28] sm:$0xff pattern:$0x73625140]
    %905 = vst [vmem:[#allocation1] ss:$4 sm:$0xff] %v842
    %v906 = vld.sshfl [vmem:[#allocation1] sm:$0xff pattern:$0x73625140]
    %v907 = vld.sshfl [vmem:[#allocation1 + $0x8] sm:$0xff pattern:$0x73625140]
    %908 = vst [vmem:[%s859] ss:$4 sm:$0xff] %v844
    %v909 = vld.sshfl [vmem:[#allocation1 + $0x20] sm:$0xff pattern:$0x73625140]
    %v910 = vld.sshfl [vmem:[#allocation1 + $0x28] sm:$0xff pattern:$0x73625140]
    %911 = vst [vmem:[#allocation1] ss:$4 sm:$0xff] %v846
    %v912 = vld.sshfl [vmem:[#allocation1] sm:$0xff pattern:$0x73625140]
    %v913 = vld.sshfl [vmem:[#allocation1 + $0x8] sm:$0xff pattern:$0x73625140]
    %914 = vst [vmem:[%s859] ss:$4 sm:$0xff] %v848
    %v915 = vld.sshfl [vmem:[#allocation1 + $0x20] sm:$0xff pattern:$0x73625140]
    %v916 = vld.sshfl [vmem:[#allocation1 + $0x28] sm:$0xff pattern:$0x73625140]
    %917 = vst [vmem:[#allocation1] ss:$4 sm:$0xff] %v849
    %v918 = vld.sshfl [vmem:[#allocation1] sm:$0xff pattern:$0x73625140]
    %v919 = vld.sshfl [vmem:[#allocation1 + $0x8] sm:$0xff pattern:$0x73625140]
    %920 = vst [vmem:[%s859] ss:$4 sm:$0xff] %v851
    %v921 = vld.sshfl [vmem:[#allocation1 + $0x20] sm:$0xff pattern:$0x73625140]
    %v922 = vld.sshfl [vmem:[#allocation1 + $0x28] sm:$0xff pattern:$0x73625140]
    %923 = vst [vmem:[#allocation1] ss:$4 sm:$0xff] %v853
    %v924 = vld.sshfl [vmem:[#allocation1] sm:$0xff pattern:$0x73625140]
    %v925 = vld.sshfl [vmem:[#allocation1 + $0x8] sm:$0xff pattern:$0x73625140]
    %926 = vst [vmem:[%s859] ss:$4 sm:$0xff] %v855
    %v927 = vld.sshfl [vmem:[#allocation1 + $0x20] sm:$0xff pattern:$0x73625140]
    %v928 = vld.sshfl [vmem:[#allocation1 + $0x28] sm:$0xff pattern:$0x73625140]
    %v977 = vsel %vm811, %v857, -inf
    %v978 = vrot.slane %v977, 4
    %v979 = vmax.f32 %v977, %v978
    %v980 = vrot.slane %v979, 2
    %v981 = vmax.f32 %v979, %v980
    %v982 = vrot.slane %v981, 1
    %v983 = vmax.f32 %v981, %v982
    %v984 = vsel %vm811, %v858, -inf
    %v985 = vrot.slane %v984, 4
    %v986 = vmax.f32 %v984, %v985
    %v987 = vrot.slane %v986, 2
    %v988 = vmax.f32 %v986, %v987
    %v989 = vrot.slane %v988, 1
    %v990 = vmax.f32 %v988, %v989
    %v991 = vsel %vm811, %v861, -inf
    %v992 = vrot.slane %v991, 4
    %v993 = vmax.f32 %v991, %v992
    %v994 = vrot.slane %v993, 2
    %v995 = vmax.f32 %v993, %v994
    %v996 = vrot.slane %v995, 1
    %v997 = vmax.f32 %v995, %v996
    %v998 = vsel %vm811, %v862, -inf
    %v999 = vrot.slane %v998, 4
    %v1000 = vmax.f32 %v998, %v999
    %v1001 = vrot.slane %v1000, 2
    %v1002 = vmax.f32 %v1000, %v1001
    %v1003 = vrot.slane %v1002, 1
    %v1004 = vmax.f32 %v1002, %v1003
    %v1005 = vsel %vm811, %v864, -inf
    %v1006 = vrot.slane %v1005, 4
    %v1007 = vmax.f32 %v1005, %v1006
    %v1008 = vrot.slane %v1007, 2
    %v1009 = vmax.f32 %v1007, %v1008
    %v1010 = vrot.slane %v1009, 1
    %v1011 = vmax.f32 %v1009, %v1010
    %v1012 = vsel %vm811, %v865, -inf
    %v1013 = vrot.slane %v1012, 4
    %v1014 = vmax.f32 %v1012, %v1013
    %v1015 = vrot.slane %v1014, 2
    %v1016 = vmax.f32 %v1014, %v1015
    %v1017 = vrot.slane %v1016, 1
    %v1018 = vmax.f32 %v1016, %v1017
    %v1019 = vsel %vm811, %v867, -inf
    %v1020 = vrot.slane %v1019, 4
    %v1021 = vmax.f32 %v1019, %v1020
    %v1022 = vrot.slane %v1021, 2
    %v1023 = vmax.f32 %v1021, %v1022
    %v1024 = vrot.slane %v1023, 1
    %v1025 = vmax.f32 %v1023, %v1024
    %v1026 = vsel %vm811, %v868, -inf
    %v1027 = vrot.slane %v1026, 4
    %v1028 = vmax.f32 %v1026, %v1027
    %v1029 = vrot.slane %v1028, 2
    %v1030 = vmax.f32 %v1028, %v1029
    %v1031 = vrot.slane %v1030, 1
    %v1032 = vmax.f32 %v1030, %v1031
    %v1033 = vsel %vm811, %v870, -inf
    %v1034 = vrot.slane %v1033, 4
    %v1035 = vmax.f32 %v1033, %v1034
    %v1036 = vrot.slane %v1035, 2
    %v1037 = vmax.f32 %v1035, %v1036
    %v1038 = vrot.slane %v1037, 1
    %v1039 = vmax.f32 %v1037, %v1038
    %v1040 = vsel %vm811, %v871, -inf
    %v1041 = vrot.slane %v1040, 4
    %v1042 = vmax.f32 %v1040, %v1041
    %v1043 = vrot.slane %v1042, 2
    %v1044 = vmax.f32 %v1042, %v1043
    %v1045 = vrot.slane %v1044, 1
    %v1046 = vmax.f32 %v1044, %v1045
    %v1047 = vsel %vm811, %v873, -inf
    %v1048 = vrot.slane %v1047, 4
    %v1049 = vmax.f32 %v1047, %v1048
    %v1050 = vrot.slane %v1049, 2
    %v1051 = vmax.f32 %v1049, %v1050
    %v1052 = vrot.slane %v1051, 1
    %v1053 = vmax.f32 %v1051, %v1052
    %v1054 = vsel %vm811, %v874, -inf
    %v1055 = vrot.slane %v1054, 4
    %v1056 = vmax.f32 %v1054, %v1055
    %v1057 = vrot.slane %v1056, 2
    %v1058 = vmax.f32 %v1056, %v1057
    %v1059 = vrot.slane %v1058, 1
    %v1060 = vmax.f32 %v1058, %v1059
    %v1061 = vsel %vm811, %v876, -inf
    %v1062 = vrot.slane %v1061, 4
    %v1063 = vmax.f32 %v1061, %v1062
    %v1064 = vrot.slane %v1063, 2
    %v1065 = vmax.f32 %v1063, %v1064
    %v1066 = vrot.slane %v1065, 1
    %v1067 = vmax.f32 %v1065, %v1066
    %v1068 = vsel %vm811, %v877, -inf
    %v1069 = vrot.slane %v1068, 4
    %v1070 = vmax.f32 %v1068, %v1069
    %v1071 = vrot.slane %v1070, 2
    %v1072 = vmax.f32 %v1070, %v1071
    %v1073 = vrot.slane %v1072, 1
    %v1074 = vmax.f32 %v1072, %v1073
    %v1075 = vsel %vm811, %v879, -inf
    %v1076 = vrot.slane %v1075, 4
    %v1077 = vmax.f32 %v1075, %v1076
    %v1078 = vrot.slane %v1077, 2
    %v1079 = vmax.f32 %v1077, %v1078
    %v1080 = vrot.slane %v1079, 1
    %v1081 = vmax.f32 %v1079, %v1080
    %v1082 = vsel %vm811, %v880, -inf
    %v1083 = vrot.slane %v1082, 4
    %v1084 = vmax.f32 %v1082, %v1083
    %v1085 = vrot.slane %v1084, 2
    %v1086 = vmax.f32 %v1084, %v1085
    %v1087 = vrot.slane %v1086, 1
    %v1088 = vmax.f32 %v1086, %v1087
    %v1089 = vsel %vm811, %v882, -inf
    %v1090 = vrot.slane %v1089, 4
    %v1091 = vmax.f32 %v1089, %v1090
    %v1092 = vrot.slane %v1091, 2
    %v1093 = vmax.f32 %v1091, %v1092
    %v1094 = vrot.slane %v1093, 1
    %v1095 = vmax.f32 %v1093, %v1094
    %v1096 = vsel %vm811, %v883, -inf
    %v1097 = vrot.slane %v1096, 4
    %v1098 = vmax.f32 %v1096, %v1097
    %v1099 = vrot.slane %v1098, 2
    %v1100 = vmax.f32 %v1098, %v1099
    %v1101 = vrot.slane %v1100, 1
    %v1102 = vmax.f32 %v1100, %v1101
    %v1103 = vsel %vm811, %v885, -inf
    %v1104 = vrot.slane %v1103, 4
    %v1105 = vmax.f32 %v1103, %v1104
    %v1106 = vrot.slane %v1105, 2
    %v1107 = vmax.f32 %v1105, %v1106
    %v1108 = vrot.slane %v1107, 1
    %v1109 = vmax.f32 %v1107, %v1108
    %v1110 = vsel %vm811, %v886, -inf
    %v1111 = vrot.slane %v1110, 4
    %v1112 = vmax.f32 %v1110, %v1111
    %v1113 = vrot.slane %v1112, 2
    %v1114 = vmax.f32 %v1112, %v1113
    %v1115 = vrot.slane %v1114, 1
    %v1116 = vmax.f32 %v1114, %v1115
    %v1117 = vsel %vm811, %v888, -inf
    %v1118 = vrot.slane %v1117, 4
    %v1119 = vmax.f32 %v1117, %v1118
    %v1120 = vrot.slane %v1119, 2
    %v1121 = vmax.f32 %v1119, %v1120
    %v1122 = vrot.slane %v1121, 1
    %v1123 = vmax.f32 %v1121, %v1122
    %v1124 = vsel %vm811, %v889, -inf
    %v1125 = vrot.slane %v1124, 4
    %v1126 = vmax.f32 %v1124, %v1125
    %v1127 = vrot.slane %v1126, 2
    %v1128 = vmax.f32 %v1126, %v1127
    %v1129 = vrot.slane %v1128, 1
    %v1130 = vmax.f32 %v1128, %v1129
    %v1131 = vsel %vm811, %v891, -inf
    %v1132 = vrot.slane %v1131, 4
    %v1133 = vmax.f32 %v1131, %v1132
    %v1134 = vrot.slane %v1133, 2
    %v1135 = vmax.f32 %v1133, %v1134
    %v1136 = vrot.slane %v1135, 1
    %v1137 = vmax.f32 %v1135, %v1136
    %v1138 = vsel %vm811, %v892, -inf
    %v1139 = vrot.slane %v1138, 4
    %v1140 = vmax.f32 %v1138, %v1139
    %v1141 = vrot.slane %v1140, 2
    %v1142 = vmax.f32 %v1140, %v1141
    %v1143 = vrot.slane %v1142, 1
    %v1144 = vmax.f32 %v1142, %v1143
    %v1145 = vsel %vm811, %v894, -inf
    %v1146 = vrot.slane %v1145, 4
    %v1147 = vmax.f32 %v1145, %v1146
    %v1148 = vrot.slane %v1147, 2
    %v1149 = vmax.f32 %v1147, %v1148
    %v1150 = vrot.slane %v1149, 1
    %v1151 = vmax.f32 %v1149, %v1150
    %v1152 = vsel %vm811, %v895, -inf
    %v1153 = vrot.slane %v1152, 4
    %v1154 = vmax.f32 %v1152, %v1153
    %v1155 = vrot.slane %v1154, 2
    %v1156 = vmax.f32 %v1154, %v1155
    %v1157 = vrot.slane %v1156, 1
    %v1158 = vmax.f32 %v1156, %v1157
    %v1159 = vsel %vm811, %v897, -inf
    %v1160 = vrot.slane %v1159, 4
    %v1161 = vmax.f32 %v1159, %v1160
    %v1162 = vrot.slane %v1161, 2
    %v1163 = vmax.f32 %v1161, %v1162
    %v1164 = vrot.slane %v1163, 1
    %v1165 = vmax.f32 %v1163, %v1164
    %v1166 = vsel %vm811, %v898, -inf
    %v1167 = vrot.slane %v1166, 4
    %v1168 = vmax.f32 %v1166, %v1167
    %v1169 = vrot.slane %v1168, 2
    %v1170 = vmax.f32 %v1168, %v1169
    %v1171 = vrot.slane %v1170, 1
    %v1172 = vmax.f32 %v1170, %v1171
    %v1173 = vsel %vm811, %v900, -inf
    %v1174 = vrot.slane %v1173, 4
    %v1175 = vmax.f32 %v1173, %v1174
    %v1176 = vrot.slane %v1175, 2
    %v1177 = vmax.f32 %v1175, %v1176
    %v1178 = vrot.slane %v1177, 1
    %v1179 = vmax.f32 %v1177, %v1178
    %v1180 = vsel %vm811, %v901, -inf
    %v1181 = vrot.slane %v1180, 4
    %v1182 = vmax.f32 %v1180, %v1181
    %v1183 = vrot.slane %v1182, 2
    %v1184 = vmax.f32 %v1182, %v1183
    %v1185 = vrot.slane %v1184, 1
    %v1186 = vmax.f32 %v1184, %v1185
    %v1187 = vsel %vm811, %v903, -inf
    %v1188 = vrot.slane %v1187, 4
    %v1189 = vmax.f32 %v1187, %v1188
    %v1190 = vrot.slane %v1189, 2
    %v1191 = vmax.f32 %v1189, %v1190
    %v1192 = vrot.slane %v1191, 1
    %v1193 = vmax.f32 %v1191, %v1192
    %v1194 = vsel %vm811, %v904, -inf
    %v1195 = vrot.slane %v1194, 4
    %v1196 = vmax.f32 %v1194, %v1195
    %v1197 = vrot.slane %v1196, 2
    %v1198 = vmax.f32 %v1196, %v1197
    %v1199 = vrot.slane %v1198, 1
    %v1200 = vmax.f32 %v1198, %v1199
    %v1201 = vsel %vm811, %v906, -inf
    %v1202 = vrot.slane %v1201, 4
    %v1203 = vmax.f32 %v1201, %v1202
    %v1204 = vrot.slane %v1203, 2
    %v1205 = vmax.f32 %v1203, %v1204
    %v1206 = vrot.slane %v1205, 1
    %v1207 = vmax.f32 %v1205, %v1206
    %v1208 = vsel %vm811, %v907, -inf
    %v1209 = vrot.slane %v1208, 4
    %v1210 = vmax.f32 %v1208, %v1209
    %v1211 = vrot.slane %v1210, 2
    %v1212 = vmax.f32 %v1210, %v1211
    %v1213 = vrot.slane %v1212, 1
    %v1214 = vmax.f32 %v1212, %v1213
    %v1215 = vsel %vm811, %v909, -inf
    %v1216 = vrot.slane %v1215, 4
    %v1217 = vmax.f32 %v1215, %v1216
    %v1218 = vrot.slane %v1217, 2
    %v1219 = vmax.f32 %v1217, %v1218
    %v1220 = vrot.slane %v1219, 1
    %v1221 = vmax.f32 %v1219, %v1220
    %v1222 = vsel %vm811, %v910, -inf
    %v1223 = vrot.slane %v1222, 4
    %v1224 = vmax.f32 %v1222, %v1223
    %v1225 = vrot.slane %v1224, 2
    %v1226 = vmax.f32 %v1224, %v1225
    %v1227 = vrot.slane %v1226, 1
    %v1228 = vmax.f32 %v1226, %v1227
    %v1229 = vsel %vm811, %v912, -inf
    %v1230 = vrot.slane %v1229, 4
    %v1231 = vmax.f32 %v1229, %v1230
    %v1232 = vrot.slane %v1231, 2
    %v1233 = vmax.f32 %v1231, %v1232
    %v1234 = vrot.slane %v1233, 1
    %v1235 = vmax.f32 %v1233, %v1234
    %v1236 = vsel %vm811, %v913, -inf
    %v1237 = vrot.slane %v1236, 4
    %v1238 = vmax.f32 %v1236, %v1237
    %v1239 = vrot.slane %v1238, 2
    %v1240 = vmax.f32 %v1238, %v1239
    %v1241 = vrot.slane %v1240, 1
    %v1242 = vmax.f32 %v1240, %v1241
    %v1243 = vsel %vm811, %v915, -inf
    %v1244 = vrot.slane %v1243, 4
    %v1245 = vmax.f32 %v1243, %v1244
    %v1246 = vrot.slane %v1245, 2
    %v1247 = vmax.f32 %v1245, %v1246
    %v1248 = vrot.slane %v1247, 1
    %v1249 = vmax.f32 %v1247, %v1248
    %v1250 = vsel %vm811, %v916, -inf
    %v1251 = vrot.slane %v1250, 4
    %v1252 = vmax.f32 %v1250, %v1251
    %v1253 = vrot.slane %v1252, 2
    %v1254 = vmax.f32 %v1252, %v1253
    %v1255 = vrot.slane %v1254, 1
    %v1256 = vmax.f32 %v1254, %v1255
    %v1257 = vsel %vm811, %v918, -inf
    %v1258 = vrot.slane %v1257, 4
    %v1259 = vmax.f32 %v1257, %v1258
    %v1260 = vrot.slane %v1259, 2
    %v1261 = vmax.f32 %v1259, %v1260
    %v1262 = vrot.slane %v1261, 1
    %v1263 = vmax.f32 %v1261, %v1262
    %v1264 = vsel %vm811, %v919, -inf
    %v1265 = vrot.slane %v1264, 4
    %v1266 = vmax.f32 %v1264, %v1265
    %v1267 = vrot.slane %v1266, 2
    %v1268 = vmax.f32 %v1266, %v1267
    %v1269 = vrot.slane %v1268, 1
    %v1270 = vmax.f32 %v1268, %v1269
    %v1271 = vsel %vm811, %v921, -inf
    %v1272 = vrot.slane %v1271, 4
    %v1273 = vmax.f32 %v1271, %v1272
    %v1274 = vrot.slane %v1273, 2
    %v1275 = vmax.f32 %v1273, %v1274
    %v1276 = vrot.slane %v1275, 1
    %v1277 = vmax.f32 %v1275, %v1276
    %v1278 = vsel %vm811, %v922, -inf
    %v1279 = vrot.slane %v1278, 4
    %v1280 = vmax.f32 %v1278, %v1279
    %v1281 = vrot.slane %v1280, 2
    %v1282 = vmax.f32 %v1280, %v1281
    %v1283 = vrot.slane %v1282, 1
    %v1284 = vmax.f32 %v1282, %v1283
    %v1285 = vsel %vm811, %v924, -inf
    %v1286 = vrot.slane %v1285, 4
    %v1287 = vmax.f32 %v1285, %v1286
    %v1288 = vrot.slane %v1287, 2
    %v1289 = vmax.f32 %v1287, %v1288
    %v1290 = vrot.slane %v1289, 1
    %v1291 = vmax.f32 %v1289, %v1290
    %v1292 = vsel %vm811, %v925, -inf
    %v1293 = vrot.slane %v1292, 4
    %v1294 = vmax.f32 %v1292, %v1293
    %v1295 = vrot.slane %v1294, 2
    %v1296 = vmax.f32 %v1294, %v1295
    %v1297 = vrot.slane %v1296, 1
    %v1298 = vmax.f32 %v1296, %v1297
    %v1299 = vsel %vm811, %v927, -inf
    %v1300 = vrot.slane %v1299, 4
    %v1301 = vmax.f32 %v1299, %v1300
    %v1302 = vrot.slane %v1301, 2
    %v1303 = vmax.f32 %v1301, %v1302
    %v1304 = vrot.slane %v1303, 1
    %v1305 = vmax.f32 %v1303, %v1304
    %v1306 = vsel %vm811, %v928, -inf
    %v1307 = vrot.slane %v1306, 4
    %v1308 = vmax.f32 %v1306, %v1307
    %v1309 = vrot.slane %v1308, 2
    %v1310 = vmax.f32 %v1308, %v1309
    %v1311 = vrot.slane %v1310, 1
    %v1312 = vmax.f32 %v1310, %v1311
    %v1313 = vpack.c.bf16 %v990, %v983
    %v1314 = vpack.c.bf16 %v1004, %v997
    %v1315 = vpack.c.bf16 %v1018, %v1011
    %v1316 = vpack.c.bf16 %v1032, %v1025
    %v1317 = vpack.c.bf16 %v1046, %v1039
    %v1318 = vpack.c.bf16 %v1060, %v1053
    %v1319 = vpack.c.bf16 %v1074, %v1067
    %v1320 = vpack.c.bf16 %v1088, %v1081
    %v1321 = vpack.c.bf16 %v1102, %v1095
    %v1322 = vpack.c.bf16 %v1116, %v1109
    %v1323 = vpack.c.bf16 %v1130, %v1123
    %v1324 = vpack.c.bf16 %v1144, %v1137
    %v1325 = vpack.c.bf16 %v1158, %v1151
    %v1326 = vpack.c.bf16 %v1172, %v1165
    %v1327 = vpack.c.bf16 %v1186, %v1179
    %v1328 = vpack.c.bf16 %v1200, %v1193
    %v1329 = vpack.c.bf16 %v1214, %v1207
    %v1330 = vpack.c.bf16 %v1228, %v1221
    %v1331 = vpack.c.bf16 %v1242, %v1235
    %v1332 = vpack.c.bf16 %v1256, %v1249
    %v1333 = vpack.c.bf16 %v1270, %v1263
    %v1334 = vpack.c.bf16 %v1284, %v1277
    %v1335 = vpack.c.bf16 %v1298, %v1291
    %v1336 = vpack.c.bf16 %v1312, %v1305
    %v1353 = vperm.slane %v1313, 0
    %v1354 = vperm.slane %v1313, 4
    %v1355 = vperm.slane %v1314, 0
    %v1356 = vperm.slane %v1314, 4
    %v1357 = vperm.slane %v1315, 0
    %v1358 = vperm.slane %v1315, 4
    %v1359 = vperm.slane %v1316, 0
    %v1360 = vperm.slane %v1316, 4
    %v1361 = vperm.slane %v1317, 0
    %v1362 = vperm.slane %v1317, 4
    %v1363 = vperm.slane %v1318, 0
    %v1364 = vperm.slane %v1318, 4
    %v1365 = vperm.slane %v1319, 0
    %v1366 = vperm.slane %v1319, 4
    %v1367 = vperm.slane %v1320, 0
    %v1368 = vperm.slane %v1320, 4
    %v1369 = vperm.slane %v1325, 0
    %v1370 = vperm.slane %v1325, 4
    %v1371 = vperm.slane %v1326, 0
    %v1372 = vperm.slane %v1326, 4
    %v1373 = vperm.slane %v1327, 0
    %v1374 = vperm.slane %v1327, 4
    %v1375 = vperm.slane %v1328, 0
    %v1376 = vperm.slane %v1328, 4
    %v1377 = vperm.slane %v1329, 0
    %v1378 = vperm.slane %v1329, 4
    %v1379 = vperm.slane %v1330, 0
    %v1380 = vperm.slane %v1330, 4
    %v1381 = vperm.slane %v1331, 0
    %v1382 = vperm.slane %v1331, 4
    %v1383 = vperm.slane %v1332, 0
    %v1384 = vperm.slane %v1332, 4
    %v1385 = vunpack.c.l.b16 %v1353
    %v1386 = vunpack.c.l.b16 %v1354
    %v1387 = vunpack.c.l.b16 %v1355
    %v1388 = vunpack.c.l.b16 %v1356
    %v1389 = vunpack.c.l.b16 %v1357
    %v1390 = vunpack.c.l.b16 %v1358
    %v1391 = vunpack.c.l.b16 %v1359
    %v1392 = vunpack.c.l.b16 %v1360
    %v1393 = vunpack.c.l.b16 %v1361
    %v1394 = vunpack.c.l.b16 %v1362
    %v1395 = vunpack.c.l.b16 %v1363
    %v1396 = vunpack.c.l.b16 %v1364
    %v1397 = vunpack.c.l.b16 %v1365
    %v1398 = vunpack.c.l.b16 %v1366
    %v1399 = vunpack.c.l.b16 %v1367
    %v1400 = vunpack.c.l.b16 %v1368
    %v1401 = vunpack.c.l.b16 %v1369
    %v1402 = vunpack.c.l.b16 %v1370
    %v1403 = vunpack.c.l.b16 %v1371
    %v1404 = vunpack.c.l.b16 %v1372
    %v1405 = vunpack.c.l.b16 %v1373
    %v1406 = vunpack.c.l.b16 %v1374
    %v1407 = vunpack.c.l.b16 %v1375
    %v1408 = vunpack.c.l.b16 %v1376
    %v1409 = vunpack.c.l.b16 %v1377
    %v1410 = vunpack.c.l.b16 %v1378
    %v1411 = vunpack.c.l.b16 %v1379
    %v1412 = vunpack.c.l.b16 %v1380
    %v1413 = vunpack.c.l.b16 %v1381
    %v1414 = vunpack.c.l.b16 %v1382
    %v1415 = vunpack.c.l.b16 %v1383
    %v1416 = vunpack.c.l.b16 %v1384
    %vm1417 = vcmask 1041409
    %v1418 = vsel %vm1417, %v1387, %v1385
    %vm1419 = vcmask 1042434
    %v1420 = vsel %vm1419, %v1389, %v1418
    %vm1421 = vcmask 1043459
    %v1422 = vsel %vm1421, %v1391, %v1420
    %vm1423 = vcmask 1044484
    %v1424 = vsel %vm1423, %v1393, %v1422
    %vm1425 = vcmask 1045509
    %v1426 = vsel %vm1425, %v1395, %v1424
    %vm1427 = vcmask 1046534
    %v1428 = vsel %vm1427, %v1397, %v1426
    %vm1429 = vcmask 1047559
    %v1430 = vsel %vm1429, %v1399, %v1428
    %v1431 = vsel %vm1417, %v1388, %v1386
    %v1432 = vsel %vm1419, %v1390, %v1431
    %v1433 = vsel %vm1421, %v1392, %v1432
    %v1434 = vsel %vm1423, %v1394, %v1433
    %v1435 = vsel %vm1425, %v1396, %v1434
    %v1436 = vsel %vm1427, %v1398, %v1435
    %v1437 = vsel %vm1429, %v1400, %v1436
    %v1438 = vsel %vm1417, %v1403, %v1401
    %v1439 = vsel %vm1419, %v1405, %v1438
    %v1440 = vsel %vm1421, %v1407, %v1439
    %v1441 = vsel %vm1423, %v1409, %v1440
    %v1442 = vsel %vm1425, %v1411, %v1441
    %v1443 = vsel %vm1427, %v1413, %v1442
    %v1444 = vsel %vm1429, %v1415, %v1443
    %v1445 = vsel %vm1417, %v1404, %v1402
    %v1446 = vsel %vm1419, %v1406, %v1445
    %v1447 = vsel %vm1421, %v1408, %v1446
    %v1448 = vsel %vm1423, %v1410, %v1447
    %v1449 = vsel %vm1425, %v1412, %v1448
    %v1450 = vsel %vm1427, %v1414, %v1449
    %v1451 = vsel %vm1429, %v1416, %v1450
    %v1454 = vperm.slane %v1321, 0
    %v1455 = vperm.slane %v1321, 4
    %v1456 = vperm.slane %v1333, 0
    %v1457 = vperm.slane %v1333, 4
    %v1458 = vunpack.c.l.b16 %v1454
    %v1459 = vunpack.c.l.b16 %v1455
    %v1460 = vunpack.c.l.b16 %v1456
    %v1461 = vunpack.c.l.b16 %v1457
    %v1462 = vsel %vm1417, %v1389, %v1387
    %v1463 = vsel %vm1419, %v1391, %v1462
    %v1464 = vsel %vm1421, %v1393, %v1463
    %v1465 = vsel %vm1423, %v1395, %v1464
    %v1466 = vsel %vm1425, %v1397, %v1465
    %v1467 = vsel %vm1427, %v1399, %v1466
    %v1468 = vsel %vm1429, %v1458, %v1467
    %v1469 = vsel %vm1417, %v1390, %v1388
    %v1470 = vsel %vm1419, %v1392, %v1469
    %v1471 = vsel %vm1421, %v1394, %v1470
    %v1472 = vsel %vm1423, %v1396, %v1471
    %v1473 = vsel %vm1425, %v1398, %v1472
    %v1474 = vsel %vm1427, %v1400, %v1473
    %v1475 = vsel %vm1429, %v1459, %v1474
    %v1476 = vsel %vm1417, %v1405, %v1403
    %v1477 = vsel %vm1419, %v1407, %v1476
    %v1478 = vsel %vm1421, %v1409, %v1477
    %v1479 = vsel %vm1423, %v1411, %v1478
    %v1480 = vsel %vm1425, %v1413, %v1479
    %v1481 = vsel %vm1427, %v1415, %v1480
    %v1482 = vsel %vm1429, %v1460, %v1481
    %v1483 = vsel %vm1417, %v1406, %v1404
    %v1484 = vsel %vm1419, %v1408, %v1483
    %v1485 = vsel %vm1421, %v1410, %v1484
    %v1486 = vsel %vm1423, %v1412, %v1485
    %v1487 = vsel %vm1425, %v1414, %v1486
    %v1488 = vsel %vm1427, %v1416, %v1487
    %v1489 = vsel %vm1429, %v1461, %v1488
    %v1492 = vperm.slane %v1322, 0
    %v1493 = vperm.slane %v1322, 4
    %v1494 = vperm.slane %v1334, 0
    %v1495 = vperm.slane %v1334, 4
    %v1496 = vunpack.c.l.b16 %v1492
    %v1497 = vunpack.c.l.b16 %v1493
    %v1498 = vunpack.c.l.b16 %v1494
    %v1499 = vunpack.c.l.b16 %v1495
    %v1500 = vsel %vm1417, %v1391, %v1389
    %v1501 = vsel %vm1419, %v1393, %v1500
    %v1502 = vsel %vm1421, %v1395, %v1501
    %v1503 = vsel %vm1423, %v1397, %v1502
    %v1504 = vsel %vm1425, %v1399, %v1503
    %v1505 = vsel %vm1427, %v1458, %v1504
    %v1506 = vsel %vm1429, %v1496, %v1505
    %v1507 = vsel %vm1417, %v1392, %v1390
    %v1508 = vsel %vm1419, %v1394, %v1507
    %v1509 = vsel %vm1421, %v1396, %v1508
    %v1510 = vsel %vm1423, %v1398, %v1509
    %v1511 = vsel %vm1425, %v1400, %v1510
    %v1512 = vsel %vm1427, %v1459, %v1511
    %v1513 = vsel %vm1429, %v1497, %v1512
    %v1514 = vsel %vm1417, %v1407, %v1405
    %v1515 = vsel %vm1419, %v1409, %v1514
    %v1516 = vsel %vm1421, %v1411, %v1515
    %v1517 = vsel %vm1423, %v1413, %v1516
    %v1518 = vsel %vm1425, %v1415, %v1517
    %v1519 = vsel %vm1427, %v1460, %v1518
    %v1520 = vsel %vm1429, %v1498, %v1519
    %v1521 = vsel %vm1417, %v1408, %v1406
    %v1522 = vsel %vm1419, %v1410, %v1521
    %v1523 = vsel %vm1421, %v1412, %v1522
    %v1524 = vsel %vm1423, %v1414, %v1523
    %v1525 = vsel %vm1425, %v1416, %v1524
    %v1526 = vsel %vm1427, %v1461, %v1525
    %v1527 = vsel %vm1429, %v1499, %v1526
    %v1530 = vperm.slane %v1323, 0
    %v1531 = vperm.slane %v1323, 4
    %v1532 = vperm.slane %v1335, 0
    %v1533 = vperm.slane %v1335, 4
    %v1534 = vunpack.c.l.b16 %v1530
    %v1535 = vunpack.c.l.b16 %v1531
    %v1536 = vunpack.c.l.b16 %v1532
    %v1537 = vunpack.c.l.b16 %v1533
    %v1538 = vsel %vm1417, %v1393, %v1391
    %v1539 = vsel %vm1419, %v1395, %v1538
    %v1540 = vsel %vm1421, %v1397, %v1539
    %v1541 = vsel %vm1423, %v1399, %v1540
    %v1542 = vsel %vm1425, %v1458, %v1541
    %v1543 = vsel %vm1427, %v1496, %v1542
    %v1544 = vsel %vm1429, %v1534, %v1543
    %v1545 = vsel %vm1417, %v1394, %v1392
    %v1546 = vsel %vm1419, %v1396, %v1545
    %v1547 = vsel %vm1421, %v1398, %v1546
    %v1548 = vsel %vm1423, %v1400, %v1547
    %v1549 = vsel %vm1425, %v1459, %v1548
    %v1550 = vsel %vm1427, %v1497, %v1549
    %v1551 = vsel %vm1429, %v1535, %v1550
    %v1552 = vsel %vm1417, %v1409, %v1407
    %v1553 = vsel %vm1419, %v1411, %v1552
    %v1554 = vsel %vm1421, %v1413, %v1553
    %v1555 = vsel %vm1423, %v1415, %v1554
    %v1556 = vsel %vm1425, %v1460, %v1555
    %v1557 = vsel %vm1427, %v1498, %v1556
    %v1558 = vsel %vm1429, %v1536, %v1557
    %v1559 = vsel %vm1417, %v1410, %v1408
    %v1560 = vsel %vm1419, %v1412, %v1559
    %v1561 = vsel %vm1421, %v1414, %v1560
    %v1562 = vsel %vm1423, %v1416, %v1561
    %v1563 = vsel %vm1425, %v1461, %v1562
    %v1564 = vsel %vm1427, %v1499, %v1563
    %v1565 = vsel %vm1429, %v1537, %v1564
    %v1568 = vperm.slane %v1324, 0
    %v1569 = vperm.slane %v1324, 4
    %v1570 = vperm.slane %v1336, 0
    %v1571 = vperm.slane %v1336, 4
    %v1572 = vunpack.c.l.b16 %v1568
    %v1573 = vunpack.c.l.b16 %v1569
    %v1574 = vunpack.c.l.b16 %v1570
    %v1575 = vunpack.c.l.b16 %v1571
    %v1576 = vsel %vm1417, %v1395, %v1393
    %v1577 = vsel %vm1419, %v1397, %v1576
    %v1578 = vsel %vm1421, %v1399, %v1577
    %v1579 = vsel %vm1423, %v1458, %v1578
    %v1580 = vsel %vm1425, %v1496, %v1579
    %v1581 = vsel %vm1427, %v1534, %v1580
    %v1582 = vsel %vm1429, %v1572, %v1581
    %v1583 = vsel %vm1417, %v1396, %v1394
    %v1584 = vsel %vm1419, %v1398, %v1583
    %v1585 = vsel %vm1421, %v1400, %v1584
    %v1586 = vsel %vm1423, %v1459, %v1585
    %v1587 = vsel %vm1425, %v1497, %v1586
    %v1588 = vsel %vm1427, %v1535, %v1587
    %v1589 = vsel %vm1429, %v1573, %v1588
    %v1590 = vsel %vm1417, %v1411, %v1409
    %v1591 = vsel %vm1419, %v1413, %v1590
    %v1592 = vsel %vm1421, %v1415, %v1591
    %v1593 = vsel %vm1423, %v1460, %v1592
    %v1594 = vsel %vm1425, %v1498, %v1593
    %v1595 = vsel %vm1427, %v1536, %v1594
    %v1596 = vsel %vm1429, %v1574, %v1595
    %v1597 = vsel %vm1417, %v1412, %v1410
    %v1598 = vsel %vm1419, %v1414, %v1597
    %v1599 = vsel %vm1421, %v1416, %v1598
    %v1600 = vsel %vm1423, %v1461, %v1599
    %v1601 = vsel %vm1425, %v1499, %v1600
    %v1602 = vsel %vm1427, %v1537, %v1601
    %v1603 = vsel %vm1429, %v1575, %v1602
    %v1604 = vld [vmem:[#allocation7] sm:$0xff]
    %v1605 = vld [vmem:[#allocation7 + $0x8] sm:$0xff]
    %v1606 = vld [vmem:[#allocation7 + $0x10] sm:$0xff]
    %v1607 = vld [vmem:[#allocation7 + $0x18] sm:$0xff]
    %v1608 = vld [vmem:[#allocation7 + $0x20] sm:$0xff]
    %v1609 = vld [vmem:[#allocation7 + $0x28] sm:$0xff]
    %v1610 = vld [vmem:[#allocation7 + $0x30] sm:$0xff]
    %v1611 = vld [vmem:[#allocation7 + $0x38] sm:$0xff]
    %v1612 = vld [vmem:[#allocation7 + $0x40] sm:$0xff]
    %v1613 = vld [vmem:[#allocation7 + $0x48] sm:$0xff]
    %v1614 = vld [vmem:[#allocation7 + $0x50] sm:$0xff]
    %v1615 = vld [vmem:[#allocation7 + $0x58] sm:$0xff]
    %v1616 = vld [vmem:[#allocation7 + $0x60] sm:$0xff]
    %v1617 = vld [vmem:[#allocation7 + $0x68] sm:$0xff]
    %v1618 = vld [vmem:[#allocation7 + $0x70] sm:$0xff]
    %v1619 = vld [vmem:[#allocation7 + $0x78] sm:$0xff]
    %v1620 = vld [vmem:[#allocation7 + $0x80] sm:$0xff]
    %v1621 = vld [vmem:[#allocation7 + $0x88] sm:$0xff]
    %v1622 = vld [vmem:[#allocation7 + $0x90] sm:$0xff]
    %v1623 = vld [vmem:[#allocation7 + $0x98] sm:$0xff]
    %v1624 = vld [vmem:[#allocation7 + $0xa0] sm:$0xff]
    %v1625 = vld [vmem:[#allocation7 + $0xa8] sm:$0xff]
    %v1626 = vld [vmem:[#allocation7 + $0xb0] sm:$0xff]
    %v1627 = vld [vmem:[#allocation7 + $0xb8] sm:$0xff]
    %v1628 = vld [vmem:[#allocation7 + $0xc0] sm:$0xff]
    %v1629 = vld [vmem:[#allocation7 + $0xc8] sm:$0xff]
    %v1630 = vld [vmem:[#allocation7 + $0xd0] sm:$0xff]
    %v1631 = vld [vmem:[#allocation7 + $0xd8] sm:$0xff]
    %v1632 = vld [vmem:[#allocation7 + $0xe0] sm:$0xff]
    %v1633 = vld [vmem:[#allocation7 + $0xe8] sm:$0xff]
    %v1634 = vld [vmem:[#allocation7 + $0xf0] sm:$0xff]
    %v1635 = vld [vmem:[#allocation7 + $0xf8] sm:$0xff]
    %v1636 = vld [vmem:[#allocation7 + $0x100] sm:$0xff]
    %v1637 = vld [vmem:[#allocation7 + $0x108] sm:$0xff]
    %v1638 = vld [vmem:[#allocation7 + $0x110] sm:$0xff]
    %v1639 = vld [vmem:[#allocation7 + $0x118] sm:$0xff]
    %v1640 = vld [vmem:[#allocation7 + $0x120] sm:$0xff]
    %v1641 = vld [vmem:[#allocation7 + $0x128] sm:$0xff]
    %v1642 = vld [vmem:[#allocation7 + $0x130] sm:$0xff]
    %v1643 = vld [vmem:[#allocation7 + $0x138] sm:$0xff]
    %v1644 = vld [vmem:[#allocation7 + $0x140] sm:$0xff]
    %v1645 = vld [vmem:[#allocation7 + $0x148] sm:$0xff]
    %v1646 = vld [vmem:[#allocation7 + $0x150] sm:$0xff]
    %v1647 = vld [vmem:[#allocation7 + $0x158] sm:$0xff]
    %v1648 = vld [vmem:[#allocation7 + $0x160] sm:$0xff]
    %v1649 = vld [vmem:[#allocation7 + $0x168] sm:$0xff]
    %v1650 = vld [vmem:[#allocation7 + $0x170] sm:$0xff]
    %v1651 = vld [vmem:[#allocation7 + $0x178] sm:$0xff]
    %v1652 = vld [vmem:[#allocation7 + $0x180] sm:$0xff]
    %v1653 = vld [vmem:[#allocation7 + $0x188] sm:$0xff]
    %v1654 = vld [vmem:[#allocation7 + $0x190] sm:$0xff]
    %v1655 = vld [vmem:[#allocation7 + $0x198] sm:$0xff]
    %v1656 = vld [vmem:[#allocation7 + $0x1a0] sm:$0xff]
    %v1657 = vld [vmem:[#allocation7 + $0x1a8] sm:$0xff]
    %v1658 = vld [vmem:[#allocation7 + $0x1b0] sm:$0xff]
    %v1659 = vld [vmem:[#allocation7 + $0x1b8] sm:$0xff]
    %v1660 = vld [vmem:[#allocation7 + $0x1c0] sm:$0xff]
    %v1661 = vld [vmem:[#allocation7 + $0x1c8] sm:$0xff]
    %v1662 = vld [vmem:[#allocation7 + $0x1d0] sm:$0xff]
    %v1663 = vld [vmem:[#allocation7 + $0x1d8] sm:$0xff]
    %v1664 = vld [vmem:[#allocation7 + $0x1e0] sm:$0xff]
    %v1665 = vld [vmem:[#allocation7 + $0x1e8] sm:$0xff]
    %v1666 = vld [vmem:[#allocation7 + $0x1f0] sm:$0xff]
    %v1667 = vld [vmem:[#allocation7 + $0x1f8] sm:$0xff]
    %v1668 = vld [vmem:[#allocation7 + $0x200] sm:$0xff]
    %v1669 = vld [vmem:[#allocation7 + $0x208] sm:$0xff]
    %v1670 = vld [vmem:[#allocation7 + $0x210] sm:$0xff]
    %v1671 = vld [vmem:[#allocation7 + $0x218] sm:$0xff]
    %v1672 = vld [vmem:[#allocation7 + $0x220] sm:$0xff]
    %v1673 = vld [vmem:[#allocation7 + $0x228] sm:$0xff]
    %v1674 = vld [vmem:[#allocation7 + $0x230] sm:$0xff]
    %v1675 = vld [vmem:[#allocation7 + $0x238] sm:$0xff]
    %v1676 = vld [vmem:[#allocation7 + $0x240] sm:$0xff]
    %v1677 = vld [vmem:[#allocation7 + $0x248] sm:$0xff]
    %v1678 = vld [vmem:[#allocation7 + $0x250] sm:$0xff]
    %v1679 = vld [vmem:[#allocation7 + $0x258] sm:$0xff]
    %v1680 = vld [vmem:[#allocation7 + $0x260] sm:$0xff]
    %v1681 = vld [vmem:[#allocation7 + $0x268] sm:$0xff]
    %v1682 = vld [vmem:[#allocation7 + $0x270] sm:$0xff]
    %v1683 = vld [vmem:[#allocation7 + $0x278] sm:$0xff]
    %v1684 = vld [vmem:[#allocation7 + $0x280] sm:$0xff]
    %v1685 = vld [vmem:[#allocation7 + $0x288] sm:$0xff]
    %v1686 = vld [vmem:[#allocation7 + $0x290] sm:$0xff]
    %v1687 = vld [vmem:[#allocation7 + $0x298] sm:$0xff]
    %v1688 = vld [vmem:[#allocation7 + $0x2a0] sm:$0xff]
    %v1689 = vld [vmem:[#allocation7 + $0x2a8] sm:$0xff]
    %v1690 = vld [vmem:[#allocation7 + $0x2b0] sm:$0xff]
    %v1691 = vld [vmem:[#allocation7 + $0x2b8] sm:$0xff]
    %v1692 = vld [vmem:[#allocation7 + $0x2c0] sm:$0xff]
    %v1693 = vld [vmem:[#allocation7 + $0x2c8] sm:$0xff]
    %v1694 = vld [vmem:[#allocation7 + $0x2d0] sm:$0xff]
    %v1695 = vld [vmem:[#allocation7 + $0x2d8] sm:$0xff]
    %v1696 = vld [vmem:[#allocation7 + $0x2e0] sm:$0xff]
    %v1697 = vld [vmem:[#allocation7 + $0x2e8] sm:$0xff]
    %v1698 = vld [vmem:[#allocation7 + $0x2f0] sm:$0xff]
    %v1699 = vld [vmem:[#allocation7 + $0x2f8] sm:$0xff]
    %v1700 = vld [vmem:[#allocation7 + $0x300] sm:$0xff]
    %v1701 = vld [vmem:[#allocation7 + $0x308] sm:$0xff]
    %v1702 = vld [vmem:[#allocation7 + $0x310] sm:$0xff]
    %v1703 = vld [vmem:[#allocation7 + $0x318] sm:$0xff]
    %v1704 = vld [vmem:[#allocation7 + $0x320] sm:$0xff]
    %v1705 = vld [vmem:[#allocation7 + $0x328] sm:$0xff]
    %v1706 = vld [vmem:[#allocation7 + $0x330] sm:$0xff]
    %v1707 = vld [vmem:[#allocation7 + $0x338] sm:$0xff]
    %v1708 = vld [vmem:[#allocation7 + $0x340] sm:$0xff]
    %v1709 = vld [vmem:[#allocation7 + $0x348] sm:$0xff]
    %v1710 = vld [vmem:[#allocation7 + $0x350] sm:$0xff]
    %v1711 = vld [vmem:[#allocation7 + $0x358] sm:$0xff]
    %v1712 = vld [vmem:[#allocation7 + $0x360] sm:$0xff]
    %v1713 = vld [vmem:[#allocation7 + $0x368] sm:$0xff]
    %v1714 = vld [vmem:[#allocation7 + $0x370] sm:$0xff]
    %v1715 = vld [vmem:[#allocation7 + $0x378] sm:$0xff]
    %v1716 = vld [vmem:[#allocation7 + $0x380] sm:$0xff]
    %v1717 = vld [vmem:[#allocation7 + $0x388] sm:$0xff]
    %v1718 = vld [vmem:[#allocation7 + $0x390] sm:$0xff]
    %v1719 = vld [vmem:[#allocation7 + $0x398] sm:$0xff]
    %v1720 = vld [vmem:[#allocation7 + $0x3a0] sm:$0xff]
    %v1721 = vld [vmem:[#allocation7 + $0x3a8] sm:$0xff]
    %v1722 = vld [vmem:[#allocation7 + $0x3b0] sm:$0xff]
    %v1723 = vld [vmem:[#allocation7 + $0x3b8] sm:$0xff]
    %v1724 = vld [vmem:[#allocation7 + $0x3c0] sm:$0xff]
    %v1725 = vld [vmem:[#allocation7 + $0x3c8] sm:$0xff]
    %v1726 = vld [vmem:[#allocation7 + $0x3d0] sm:$0xff]
    %v1727 = vld [vmem:[#allocation7 + $0x3d8] sm:$0xff]
    %v1728 = vld [vmem:[#allocation7 + $0x3e0] sm:$0xff]
    %v1729 = vld [vmem:[#allocation7 + $0x3e8] sm:$0xff]
    %v1730 = vld [vmem:[#allocation7 + $0x3f0] sm:$0xff]
    %v1731 = vld [vmem:[#allocation7 + $0x3f8] sm:$0xff]
    %v1732 = vld [vmem:[#allocation7 + $0x400] sm:$0xff]
    %v1733 = vld [vmem:[#allocation7 + $0x408] sm:$0xff]
    %v1734 = vld [vmem:[#allocation7 + $0x410] sm:$0xff]
    %v1735 = vld [vmem:[#allocation7 + $0x418] sm:$0xff]
    %v1736 = vld [vmem:[#allocation7 + $0x420] sm:$0xff]
    %v1737 = vld [vmem:[#allocation7 + $0x428] sm:$0xff]
    %v1738 = vld [vmem:[#allocation7 + $0x430] sm:$0xff]
    %v1739 = vld [vmem:[#allocation7 + $0x438] sm:$0xff]
    %v1740 = vld [vmem:[#allocation7 + $0x440] sm:$0xff]
    %v1741 = vld [vmem:[#allocation7 + $0x448] sm:$0xff]
    %v1742 = vld [vmem:[#allocation7 + $0x450] sm:$0xff]
    %v1743 = vld [vmem:[#allocation7 + $0x458] sm:$0xff]
    %v1744 = vld [vmem:[#allocation7 + $0x460] sm:$0xff]
    %v1745 = vld [vmem:[#allocation7 + $0x468] sm:$0xff]
    %v1746 = vld [vmem:[#allocation7 + $0x470] sm:$0xff]
    %v1747 = vld [vmem:[#allocation7 + $0x478] sm:$0xff]
    %v1748 = vld [vmem:[#allocation7 + $0x480] sm:$0xff]
    %v1749 = vld [vmem:[#allocation7 + $0x488] sm:$0xff]
    %v1750 = vld [vmem:[#allocation7 + $0x490] sm:$0xff]
    %v1751 = vld [vmem:[#allocation7 + $0x498] sm:$0xff]
    %v1752 = vld [vmem:[#allocation7 + $0x4a0] sm:$0xff]
    %v1753 = vld [vmem:[#allocation7 + $0x4a8] sm:$0xff]
    %v1754 = vld [vmem:[#allocation7 + $0x4b0] sm:$0xff]
    %v1755 = vld [vmem:[#allocation7 + $0x4b8] sm:$0xff]
    %v1756 = vld [vmem:[#allocation7 + $0x4c0] sm:$0xff]
    %v1757 = vld [vmem:[#allocation7 + $0x4c8] sm:$0xff]
    %v1758 = vld [vmem:[#allocation7 + $0x4d0] sm:$0xff]
    %v1759 = vld [vmem:[#allocation7 + $0x4d8] sm:$0xff]
    %v1760 = vld [vmem:[#allocation7 + $0x4e0] sm:$0xff]
    %v1761 = vld [vmem:[#allocation7 + $0x4e8] sm:$0xff]
    %v1762 = vld [vmem:[#allocation7 + $0x4f0] sm:$0xff]
    %v1763 = vld [vmem:[#allocation7 + $0x4f8] sm:$0xff]
    %v1764 = vld [vmem:[#allocation7 + $0x500] sm:$0xff]
    %v1765 = vld [vmem:[#allocation7 + $0x508] sm:$0xff]
    %v1766 = vld [vmem:[#allocation7 + $0x510] sm:$0xff]
    %v1767 = vld [vmem:[#allocation7 + $0x518] sm:$0xff]
    %v1768 = vld [vmem:[#allocation7 + $0x520] sm:$0xff]
    %v1769 = vld [vmem:[#allocation7 + $0x528] sm:$0xff]
    %v1770 = vld [vmem:[#allocation7 + $0x530] sm:$0xff]
    %v1771 = vld [vmem:[#allocation7 + $0x538] sm:$0xff]
    %v1772 = vld [vmem:[#allocation7 + $0x540] sm:$0xff]
    %v1773 = vld [vmem:[#allocation7 + $0x548] sm:$0xff]
    %v1774 = vld [vmem:[#allocation7 + $0x550] sm:$0xff]
    %v1775 = vld [vmem:[#allocation7 + $0x558] sm:$0xff]
    %v1776 = vld [vmem:[#allocation7 + $0x560] sm:$0xff]
    %v1777 = vld [vmem:[#allocation7 + $0x568] sm:$0xff]
    %v1778 = vld [vmem:[#allocation7 + $0x570] sm:$0xff]
    %v1779 = vld [vmem:[#allocation7 + $0x578] sm:$0xff]
    %v1780 = vld [vmem:[#allocation7 + $0x580] sm:$0xff]
    %v1781 = vld [vmem:[#allocation7 + $0x588] sm:$0xff]
    %v1782 = vld [vmem:[#allocation7 + $0x590] sm:$0xff]
    %v1783 = vld [vmem:[#allocation7 + $0x598] sm:$0xff]
    %v1784 = vld [vmem:[#allocation7 + $0x5a0] sm:$0xff]
    %v1785 = vld [vmem:[#allocation7 + $0x5a8] sm:$0xff]
    %v1786 = vld [vmem:[#allocation7 + $0x5b0] sm:$0xff]
    %v1787 = vld [vmem:[#allocation7 + $0x5b8] sm:$0xff]
    %v1788 = vld [vmem:[#allocation7 + $0x5c0] sm:$0xff]
    %v1789 = vld [vmem:[#allocation7 + $0x5c8] sm:$0xff]
    %v1790 = vld [vmem:[#allocation7 + $0x5d0] sm:$0xff]
    %v1791 = vld [vmem:[#allocation7 + $0x5d8] sm:$0xff]
    %v1792 = vld [vmem:[#allocation7 + $0x5e0] sm:$0xff]
    %v1793 = vld [vmem:[#allocation7 + $0x5e8] sm:$0xff]
    %v1794 = vld [vmem:[#allocation7 + $0x5f0] sm:$0xff]
    %v1795 = vld [vmem:[#allocation7 + $0x5f8] sm:$0xff]
    %v1796 = vld [vmem:[#allocation7 + $0x600] sm:$0xff]
    %v1797 = vld [vmem:[#allocation7 + $0x608] sm:$0xff]
    %v1798 = vld [vmem:[#allocation7 + $0x610] sm:$0xff]
    %v1799 = vld [vmem:[#allocation7 + $0x618] sm:$0xff]
    %v1800 = vld [vmem:[#allocation7 + $0x620] sm:$0xff]
    %v1801 = vld [vmem:[#allocation7 + $0x628] sm:$0xff]
    %v1802 = vld [vmem:[#allocation7 + $0x630] sm:$0xff]
    %v1803 = vld [vmem:[#allocation7 + $0x638] sm:$0xff]
    %v1804 = vld [vmem:[#allocation7 + $0x640] sm:$0xff]
    %v1805 = vld [vmem:[#allocation7 + $0x648] sm:$0xff]
    %v1806 = vld [vmem:[#allocation7 + $0x650] sm:$0xff]
    %v1807 = vld [vmem:[#allocation7 + $0x658] sm:$0xff]
    %v1808 = vld [vmem:[#allocation7 + $0x660] sm:$0xff]
    %v1809 = vld [vmem:[#allocation7 + $0x668] sm:$0xff]
    %v1810 = vld [vmem:[#allocation7 + $0x670] sm:$0xff]
    %v1811 = vld [vmem:[#allocation7 + $0x678] sm:$0xff]
    %v1812 = vld [vmem:[#allocation7 + $0x680] sm:$0xff]
    %v1813 = vld [vmem:[#allocation7 + $0x688] sm:$0xff]
    %v1814 = vld [vmem:[#allocation7 + $0x690] sm:$0xff]
    %v1815 = vld [vmem:[#allocation7 + $0x698] sm:$0xff]
    %v1816 = vld [vmem:[#allocation7 + $0x6a0] sm:$0xff]
    %v1817 = vld [vmem:[#allocation7 + $0x6a8] sm:$0xff]
    %v1818 = vld [vmem:[#allocation7 + $0x6b0] sm:$0xff]
    %v1819 = vld [vmem:[#allocation7 + $0x6b8] sm:$0xff]
    %v1820 = vld [vmem:[#allocation7 + $0x6c0] sm:$0xff]
    %v1821 = vld [vmem:[#allocation7 + $0x6c8] sm:$0xff]
    %v1822 = vld [vmem:[#allocation7 + $0x6d0] sm:$0xff]
    %v1823 = vld [vmem:[#allocation7 + $0x6d8] sm:$0xff]
    %v1824 = vld [vmem:[#allocation7 + $0x6e0] sm:$0xff]
    %v1825 = vld [vmem:[#allocation7 + $0x6e8] sm:$0xff]
    %v1826 = vld [vmem:[#allocation7 + $0x6f0] sm:$0xff]
    %v1827 = vld [vmem:[#allocation7 + $0x6f8] sm:$0xff]
    %v1828 = vld [vmem:[#allocation7 + $0x700] sm:$0xff]
    %v1829 = vld [vmem:[#allocation7 + $0x708] sm:$0xff]
    %v1830 = vld [vmem:[#allocation7 + $0x710] sm:$0xff]
    %v1831 = vld [vmem:[#allocation7 + $0x718] sm:$0xff]
    %v1832 = vld [vmem:[#allocation7 + $0x720] sm:$0xff]
    %v1833 = vld [vmem:[#allocation7 + $0x728] sm:$0xff]
    %v1834 = vld [vmem:[#allocation7 + $0x730] sm:$0xff]
    %v1835 = vld [vmem:[#allocation7 + $0x738] sm:$0xff]
    %v1836 = vld [vmem:[#allocation7 + $0x740] sm:$0xff]
    %v1837 = vld [vmem:[#allocation7 + $0x748] sm:$0xff]
    %v1838 = vld [vmem:[#allocation7 + $0x750] sm:$0xff]
    %v1839 = vld [vmem:[#allocation7 + $0x758] sm:$0xff]
    %v1840 = vld [vmem:[#allocation7 + $0x760] sm:$0xff]
    %v1841 = vld [vmem:[#allocation7 + $0x768] sm:$0xff]
    %v1842 = vld [vmem:[#allocation7 + $0x770] sm:$0xff]
    %v1843 = vld [vmem:[#allocation7 + $0x778] sm:$0xff]
    %v1844 = vld [vmem:[#allocation7 + $0x780] sm:$0xff]
    %v1845 = vld [vmem:[#allocation7 + $0x788] sm:$0xff]
    %v1846 = vld [vmem:[#allocation7 + $0x790] sm:$0xff]
    %v1847 = vld [vmem:[#allocation7 + $0x798] sm:$0xff]
    %v1848 = vld [vmem:[#allocation7 + $0x7a0] sm:$0xff]
    %v1849 = vld [vmem:[#allocation7 + $0x7a8] sm:$0xff]
    %v1850 = vld [vmem:[#allocation7 + $0x7b0] sm:$0xff]
    %v1851 = vld [vmem:[#allocation7 + $0x7b8] sm:$0xff]
    %v1852 = vld [vmem:[#allocation7 + $0x7c0] sm:$0xff]
    %v1853 = vld [vmem:[#allocation7 + $0x7c8] sm:$0xff]
    %v1854 = vld [vmem:[#allocation7 + $0x7d0] sm:$0xff]
    %v1855 = vld [vmem:[#allocation7 + $0x7d8] sm:$0xff]
    %v1856 = vld [vmem:[#allocation7 + $0x7e0] sm:$0xff]
    %v1857 = vld [vmem:[#allocation7 + $0x7e8] sm:$0xff]
    %v1858 = vld [vmem:[#allocation7 + $0x7f0] sm:$0xff]
    %v1859 = vld [vmem:[#allocation7 + $0x7f8] sm:$0xff]
    %v1860 = vld [vmem:[#allocation7 + $0x800] sm:$0xff]
    %v1861 = vld [vmem:[#allocation7 + $0x808] sm:$0xff]
    %v1862 = vld [vmem:[#allocation7 + $0x810] sm:$0xff]
    %v1863 = vld [vmem:[#allocation7 + $0x818] sm:$0xff]
    %v1864 = vld [vmem:[#allocation7 + $0x820] sm:$0xff]
    %v1865 = vld [vmem:[#allocation7 + $0x828] sm:$0xff]
    %v1866 = vld [vmem:[#allocation7 + $0x830] sm:$0xff]
    %v1867 = vld [vmem:[#allocation7 + $0x838] sm:$0xff]
    %v1868 = vld [vmem:[#allocation7 + $0x840] sm:$0xff]
    %v1869 = vld [vmem:[#allocation7 + $0x848] sm:$0xff]
    %v1870 = vld [vmem:[#allocation7 + $0x850] sm:$0xff]
    %v1871 = vld [vmem:[#allocation7 + $0x858] sm:$0xff]
    %v1872 = vld [vmem:[#allocation7 + $0x860] sm:$0xff]
    %v1873 = vld [vmem:[#allocation7 + $0x868] sm:$0xff]
    %v1874 = vld [vmem:[#allocation7 + $0x870] sm:$0xff]
    %v1875 = vld [vmem:[#allocation7 + $0x878] sm:$0xff]
    %v1876 = vld [vmem:[#allocation7 + $0x880] sm:$0xff]
    %v1877 = vld [vmem:[#allocation7 + $0x888] sm:$0xff]
    %v1878 = vld [vmem:[#allocation7 + $0x890] sm:$0xff]
    %v1879 = vld [vmem:[#allocation7 + $0x898] sm:$0xff]
    %v1880 = vld [vmem:[#allocation7 + $0x8a0] sm:$0xff]
    %v1881 = vld [vmem:[#allocation7 + $0x8a8] sm:$0xff]
    %v1882 = vld [vmem:[#allocation7 + $0x8b0] sm:$0xff]
    %v1883 = vld [vmem:[#allocation7 + $0x8b8] sm:$0xff]
    %v1884 = vld [vmem:[#allocation7 + $0x8c0] sm:$0xff]
    %v1885 = vld [vmem:[#allocation7 + $0x8c8] sm:$0xff]
    %v1886 = vld [vmem:[#allocation7 + $0x8d0] sm:$0xff]
    %v1887 = vld [vmem:[#allocation7 + $0x8d8] sm:$0xff]
    %v1888 = vld [vmem:[#allocation7 + $0x8e0] sm:$0xff]
    %v1889 = vld [vmem:[#allocation7 + $0x8e8] sm:$0xff]
    %v1890 = vld [vmem:[#allocation7 + $0x8f0] sm:$0xff]
    %v1891 = vld [vmem:[#allocation7 + $0x8f8] sm:$0xff]
    %v1892 = vld [vmem:[#allocation7 + $0x900] sm:$0xff]
    %v1893 = vld [vmem:[#allocation7 + $0x908] sm:$0xff]
    %v1894 = vld [vmem:[#allocation7 + $0x910] sm:$0xff]
    %v1895 = vld [vmem:[#allocation7 + $0x918] sm:$0xff]
    %v1896 = vld [vmem:[#allocation7 + $0x920] sm:$0xff]
    %v1897 = vld [vmem:[#allocation7 + $0x928] sm:$0xff]
    %v1898 = vld [vmem:[#allocation7 + $0x930] sm:$0xff]
    %v1899 = vld [vmem:[#allocation7 + $0x938] sm:$0xff]
    %v1900 = vld [vmem:[#allocation7 + $0x940] sm:$0xff]
    %v1901 = vld [vmem:[#allocation7 + $0x948] sm:$0xff]
    %v1902 = vld [vmem:[#allocation7 + $0x950] sm:$0xff]
    %v1903 = vld [vmem:[#allocation7 + $0x958] sm:$0xff]
    %v1904 = vld [vmem:[#allocation7 + $0x960] sm:$0xff]
    %v1905 = vld [vmem:[#allocation7 + $0x968] sm:$0xff]
    %v1906 = vld [vmem:[#allocation7 + $0x970] sm:$0xff]
    %v1907 = vld [vmem:[#allocation7 + $0x978] sm:$0xff]
    %v1908 = vld [vmem:[#allocation7 + $0x980] sm:$0xff]
    %v1909 = vld [vmem:[#allocation7 + $0x988] sm:$0xff]
    %v1910 = vld [vmem:[#allocation7 + $0x990] sm:$0xff]
    %v1911 = vld [vmem:[#allocation7 + $0x998] sm:$0xff]
    %v1912 = vld [vmem:[#allocation7 + $0x9a0] sm:$0xff]
    %v1913 = vld [vmem:[#allocation7 + $0x9a8] sm:$0xff]
    %v1914 = vld [vmem:[#allocation7 + $0x9b0] sm:$0xff]
    %v1915 = vld [vmem:[#allocation7 + $0x9b8] sm:$0xff]
    %v1916 = vld [vmem:[#allocation7 + $0x9c0] sm:$0xff]
    %v1917 = vld [vmem:[#allocation7 + $0x9c8] sm:$0xff]
    %v1918 = vld [vmem:[#allocation7 + $0x9d0] sm:$0xff]
    %v1919 = vld [vmem:[#allocation7 + $0x9d8] sm:$0xff]
    %v1920 = vld [vmem:[#allocation7 + $0x9e0] sm:$0xff]
    %v1921 = vld [vmem:[#allocation7 + $0x9e8] sm:$0xff]
    %v1922 = vld [vmem:[#allocation7 + $0x9f0] sm:$0xff]
    %v1923 = vld [vmem:[#allocation7 + $0x9f8] sm:$0xff]
    %v1924 = vld [vmem:[#allocation8] sm:$0xf]
    %v1926 = vperm.slane %v1924, 0
    %v1927 = vperm.slane %v1924, 1
    %v1928 = vperm.slane %v1924, 2
    %v1929 = vperm.slane %v1924, 3
    %v1934 = vpack.c.b16 %v1444, %v1430
    %v1935 = vpack.c.b16 %v1451, %v1437
    %v1936 = vpack.c.b16 %v1482, %v1468
    %v1937 = vpack.c.b16 %v1489, %v1475
    %v1938 = vpack.c.b16 %v1520, %v1506
    %v1939 = vpack.c.b16 %v1527, %v1513
    %v1940 = vpack.c.b16 %v1558, %v1544
    %v1941 = vpack.c.b16 %v1565, %v1551
    %v1942 = vpack.c.b16 %v1596, %v1582
    %v1943 = vpack.c.b16 %v1603, %v1589
    %v2274 = vunpack.c.l.b16 %v1604
    %v2275 = vunpack.c.h.b16 %v1604
    %v2276 = vunpack.c.l.b16 %v1605
    %v2277 = vunpack.c.h.b16 %v1605
    %v2278 = vunpack.c.l.b16 %v1606
    %v2279 = vunpack.c.h.b16 %v1606
    %v2280 = vunpack.c.l.b16 %v1607
    %v2281 = vunpack.c.h.b16 %v1607
    %v2282 = vunpack.c.l.b16 %v1608
    %v2283 = vunpack.c.h.b16 %v1608
    %v2284 = vunpack.c.l.b16 %v1609
    %v2285 = vunpack.c.h.b16 %v1609
    %v2286 = vunpack.c.l.b16 %v1610
    %v2287 = vunpack.c.h.b16 %v1610
    %v2288 = vunpack.c.l.b16 %v1611
    %v2289 = vunpack.c.h.b16 %v1611
    %v2290 = vunpack.c.l.b16 %v1612
    %v2291 = vunpack.c.h.b16 %v1612
    %v2292 = vunpack.c.l.b16 %v1613
    %v2293 = vunpack.c.h.b16 %v1613
    %v2294 = vunpack.c.l.b16 %v1614
    %v2295 = vunpack.c.h.b16 %v1614
    %v2296 = vunpack.c.l.b16 %v1615
    %v2297 = vunpack.c.h.b16 %v1615
    %v2298 = vunpack.c.l.b16 %v1616
    %v2299 = vunpack.c.h.b16 %v1616
    %v2300 = vunpack.c.l.b16 %v1617
    %v2301 = vunpack.c.h.b16 %v1617
    %v2302 = vunpack.c.l.b16 %v1618
    %v2303 = vunpack.c.h.b16 %v1618
    %v2304 = vunpack.c.l.b16 %v1619
    %v2305 = vunpack.c.h.b16 %v1619
    %v2306 = vunpack.c.l.b16 %v1620
    %v2307 = vunpack.c.h.b16 %v1620
    %v2308 = vunpack.c.l.b16 %v1621
    %v2309 = vunpack.c.h.b16 %v1621
    %v2310 = vunpack.c.l.b16 %v1622
    %v2311 = vunpack.c.h.b16 %v1622
    %v2312 = vunpack.c.l.b16 %v1623
    %v2313 = vunpack.c.h.b16 %v1623
    %v2314 = vunpack.c.l.b16 %v1624
    %v2315 = vunpack.c.h.b16 %v1624
    %v2316 = vunpack.c.l.b16 %v1625
    %v2317 = vunpack.c.h.b16 %v1625
    %v2318 = vunpack.c.l.b16 %v1626
    %v2319 = vunpack.c.h.b16 %v1626
    %v2320 = vunpack.c.l.b16 %v1627
    %v2321 = vunpack.c.h.b16 %v1627
    %v2322 = vunpack.c.l.b16 %v1628
    %v2323 = vunpack.c.h.b16 %v1628
    %v2324 = vunpack.c.l.b16 %v1629
    %v2325 = vunpack.c.h.b16 %v1629
    %v2326 = vunpack.c.l.b16 %v1630
    %v2327 = vunpack.c.h.b16 %v1630
    %v2328 = vunpack.c.l.b16 %v1631
    %v2329 = vunpack.c.h.b16 %v1631
    %v2330 = vunpack.c.l.b16 %v1632
    %v2331 = vunpack.c.h.b16 %v1632
    %v2332 = vunpack.c.l.b16 %v1633
    %v2333 = vunpack.c.h.b16 %v1633
    %v2334 = vunpack.c.l.b16 %v1634
    %v2335 = vunpack.c.h.b16 %v1634
    %v2336 = vunpack.c.l.b16 %v1635
    %v2337 = vunpack.c.h.b16 %v1635
    %v2338 = vunpack.c.l.b16 %v1636
    %v2339 = vunpack.c.h.b16 %v1636
    %v2340 = vunpack.c.l.b16 %v1637
    %v2341 = vunpack.c.h.b16 %v1637
    %v2342 = vunpack.c.l.b16 %v1638
    %v2343 = vunpack.c.h.b16 %v1638
    %v2344 = vunpack.c.l.b16 %v1639
    %v2345 = vunpack.c.h.b16 %v1639
    %v2346 = vunpack.c.l.b16 %v1640
    %v2347 = vunpack.c.h.b16 %v1640
    %v2348 = vunpack.c.l.b16 %v1641
    %v2349 = vunpack.c.h.b16 %v1641
    %v2350 = vunpack.c.l.b16 %v1642
    %v2351 = vunpack.c.h.b16 %v1642
    %v2352 = vunpack.c.l.b16 %v1643
    %v2353 = vunpack.c.h.b16 %v1643
    %v2354 = vunpack.c.l.b16 %v1644
    %v2355 = vunpack.c.h.b16 %v1644
    %v2356 = vunpack.c.l.b16 %v1645
    %v2357 = vunpack.c.h.b16 %v1645
    %v2358 = vunpack.c.l.b16 %v1646
    %v2359 = vunpack.c.h.b16 %v1646
    %v2360 = vunpack.c.l.b16 %v1647
    %v2361 = vunpack.c.h.b16 %v1647
    %v2362 = vunpack.c.l.b16 %v1648
    %v2363 = vunpack.c.h.b16 %v1648
    %v2364 = vunpack.c.l.b16 %v1649
    %v2365 = vunpack.c.h.b16 %v1649
    %v2366 = vunpack.c.l.b16 %v1650
    %v2367 = vunpack.c.h.b16 %v1650
    %v2368 = vunpack.c.l.b16 %v1651
    %v2369 = vunpack.c.h.b16 %v1651
    %v2370 = vunpack.c.l.b16 %v1652
    %v2371 = vunpack.c.h.b16 %v1652
    %v2372 = vunpack.c.l.b16 %v1653
    %v2373 = vunpack.c.h.b16 %v1653
    %v2374 = vunpack.c.l.b16 %v1654
    %v2375 = vunpack.c.h.b16 %v1654
    %v2376 = vunpack.c.l.b16 %v1655
    %v2377 = vunpack.c.h.b16 %v1655
    %v2378 = vunpack.c.l.b16 %v1656
    %v2379 = vunpack.c.h.b16 %v1656
    %v2380 = vunpack.c.l.b16 %v1657
    %v2381 = vunpack.c.h.b16 %v1657
    %v2382 = vunpack.c.l.b16 %v1658
    %v2383 = vunpack.c.h.b16 %v1658
    %v2384 = vunpack.c.l.b16 %v1659
    %v2385 = vunpack.c.h.b16 %v1659
    %v2386 = vunpack.c.l.b16 %v1660
    %v2387 = vunpack.c.h.b16 %v1660
    %v2388 = vunpack.c.l.b16 %v1661
    %v2389 = vunpack.c.h.b16 %v1661
    %v2390 = vunpack.c.l.b16 %v1662
    %v2391 = vunpack.c.h.b16 %v1662
    %v2392 = vunpack.c.l.b16 %v1663
    %v2393 = vunpack.c.h.b16 %v1663
    %v2394 = vunpack.c.l.b16 %v1664
    %v2395 = vunpack.c.h.b16 %v1664
    %v2396 = vunpack.c.l.b16 %v1665
    %v2397 = vunpack.c.h.b16 %v1665
    %v2398 = vunpack.c.l.b16 %v1666
    %v2399 = vunpack.c.h.b16 %v1666
    %v2400 = vunpack.c.l.b16 %v1667
    %v2401 = vunpack.c.h.b16 %v1667
    %v2402 = vunpack.c.l.b16 %v1668
    %v2403 = vunpack.c.h.b16 %v1668
    %v2404 = vunpack.c.l.b16 %v1669
    %v2405 = vunpack.c.h.b16 %v1669
    %v2406 = vunpack.c.l.b16 %v1670
    %v2407 = vunpack.c.h.b16 %v1670
    %v2408 = vunpack.c.l.b16 %v1671
    %v2409 = vunpack.c.h.b16 %v1671
    %v2410 = vunpack.c.l.b16 %v1672
    %v2411 = vunpack.c.h.b16 %v1672
    %v2412 = vunpack.c.l.b16 %v1673
    %v2413 = vunpack.c.h.b16 %v1673
    %v2414 = vunpack.c.l.b16 %v1674
    %v2415 = vunpack.c.h.b16 %v1674
    %v2416 = vunpack.c.l.b16 %v1675
    %v2417 = vunpack.c.h.b16 %v1675
    %v2418 = vunpack.c.l.b16 %v1676
    %v2419 = vunpack.c.h.b16 %v1676
    %v2420 = vunpack.c.l.b16 %v1677
    %v2421 = vunpack.c.h.b16 %v1677
    %v2422 = vunpack.c.l.b16 %v1678
    %v2423 = vunpack.c.h.b16 %v1678
    %v2424 = vunpack.c.l.b16 %v1679
    %v2425 = vunpack.c.h.b16 %v1679
    %v2426 = vunpack.c.l.b16 %v1680
    %v2427 = vunpack.c.h.b16 %v1680
    %v2428 = vunpack.c.l.b16 %v1681
    %v2429 = vunpack.c.h.b16 %v1681
    %v2430 = vunpack.c.l.b16 %v1682
    %v2431 = vunpack.c.h.b16 %v1682
    %v2432 = vunpack.c.l.b16 %v1683
    %v2433 = vunpack.c.h.b16 %v1683
    %v2434 = vunpack.c.l.b16 %v1684
    %v2435 = vunpack.c.h.b16 %v1684
    %v2436 = vunpack.c.l.b16 %v1685
    %v2437 = vunpack.c.h.b16 %v1685
    %v2438 = vunpack.c.l.b16 %v1686
    %v2439 = vunpack.c.h.b16 %v1686
    %v2440 = vunpack.c.l.b16 %v1687
    %v2441 = vunpack.c.h.b16 %v1687
    %v2442 = vunpack.c.l.b16 %v1688
    %v2443 = vunpack.c.h.b16 %v1688
    %v2444 = vunpack.c.l.b16 %v1689
    %v2445 = vunpack.c.h.b16 %v1689
    %v2446 = vunpack.c.l.b16 %v1690
    %v2447 = vunpack.c.h.b16 %v1690
    %v2448 = vunpack.c.l.b16 %v1691
    %v2449 = vunpack.c.h.b16 %v1691
    %v2450 = vunpack.c.l.b16 %v1692
    %v2451 = vunpack.c.h.b16 %v1692
    %v2452 = vunpack.c.l.b16 %v1693
    %v2453 = vunpack.c.h.b16 %v1693
    %v2454 = vunpack.c.l.b16 %v1694
    %v2455 = vunpack.c.h.b16 %v1694
    %v2456 = vunpack.c.l.b16 %v1695
    %v2457 = vunpack.c.h.b16 %v1695
    %v2458 = vunpack.c.l.b16 %v1696
    %v2459 = vunpack.c.h.b16 %v1696
    %v2460 = vunpack.c.l.b16 %v1697
    %v2461 = vunpack.c.h.b16 %v1697
    %v2462 = vunpack.c.l.b16 %v1698
    %v2463 = vunpack.c.h.b16 %v1698
    %v2464 = vunpack.c.l.b16 %v1699
    %v2465 = vunpack.c.h.b16 %v1699
    %v2466 = vunpack.c.l.b16 %v1700
    %v2467 = vunpack.c.h.b16 %v1700
    %v2468 = vunpack.c.l.b16 %v1701
    %v2469 = vunpack.c.h.b16 %v1701
    %v2470 = vunpack.c.l.b16 %v1702
    %v2471 = vunpack.c.h.b16 %v1702
    %v2472 = vunpack.c.l.b16 %v1703
    %v2473 = vunpack.c.h.b16 %v1703
    %v2474 = vunpack.c.l.b16 %v1704
    %v2475 = vunpack.c.h.b16 %v1704
    %v2476 = vunpack.c.l.b16 %v1705
    %v2477 = vunpack.c.h.b16 %v1705
    %v2478 = vunpack.c.l.b16 %v1706
    %v2479 = vunpack.c.h.b16 %v1706
    %v2480 = vunpack.c.l.b16 %v1707
    %v2481 = vunpack.c.h.b16 %v1707
    %v2482 = vunpack.c.l.b16 %v1708
    %v2483 = vunpack.c.h.b16 %v1708
    %v2484 = vunpack.c.l.b16 %v1709
    %v2485 = vunpack.c.h.b16 %v1709
    %v2486 = vunpack.c.l.b16 %v1710
    %v2487 = vunpack.c.h.b16 %v1710
    %v2488 = vunpack.c.l.b16 %v1711
    %v2489 = vunpack.c.h.b16 %v1711
    %v2490 = vunpack.c.l.b16 %v1712
    %v2491 = vunpack.c.h.b16 %v1712
    %v2492 = vunpack.c.l.b16 %v1713
    %v2493 = vunpack.c.h.b16 %v1713
    %v2494 = vunpack.c.l.b16 %v1714
    %v2495 = vunpack.c.h.b16 %v1714
    %v2496 = vunpack.c.l.b16 %v1715
    %v2497 = vunpack.c.h.b16 %v1715
    %v2498 = vunpack.c.l.b16 %v1716
    %v2499 = vunpack.c.h.b16 %v1716
    %v2500 = vunpack.c.l.b16 %v1717
    %v2501 = vunpack.c.h.b16 %v1717
    %v2502 = vunpack.c.l.b16 %v1718
    %v2503 = vunpack.c.h.b16 %v1718
    %v2504 = vunpack.c.l.b16 %v1719
    %v2505 = vunpack.c.h.b16 %v1719
    %v2506 = vunpack.c.l.b16 %v1720
    %v2507 = vunpack.c.h.b16 %v1720
    %v2508 = vunpack.c.l.b16 %v1721
    %v2509 = vunpack.c.h.b16 %v1721
    %v2510 = vunpack.c.l.b16 %v1722
    %v2511 = vunpack.c.h.b16 %v1722
    %v2512 = vunpack.c.l.b16 %v1723
    %v2513 = vunpack.c.h.b16 %v1723
    %v2514 = vunpack.c.l.b16 %v1724
    %v2515 = vunpack.c.h.b16 %v1724
    %v2516 = vunpack.c.l.b16 %v1725
    %v2517 = vunpack.c.h.b16 %v1725
    %v2518 = vunpack.c.l.b16 %v1726
    %v2519 = vunpack.c.h.b16 %v1726
    %v2520 = vunpack.c.l.b16 %v1727
    %v2521 = vunpack.c.h.b16 %v1727
    %v2522 = vunpack.c.l.b16 %v1728
    %v2523 = vunpack.c.h.b16 %v1728
    %v2524 = vunpack.c.l.b16 %v1729
    %v2525 = vunpack.c.h.b16 %v1729
    %v2526 = vunpack.c.l.b16 %v1730
    %v2527 = vunpack.c.h.b16 %v1730
    %v2528 = vunpack.c.l.b16 %v1731
    %v2529 = vunpack.c.h.b16 %v1731
    %v2530 = vunpack.c.l.b16 %v1732
    %v2531 = vunpack.c.h.b16 %v1732
    %v2532 = vunpack.c.l.b16 %v1733
    %v2533 = vunpack.c.h.b16 %v1733
    %v2534 = vunpack.c.l.b16 %v1734
    %v2535 = vunpack.c.h.b16 %v1734
    %v2536 = vunpack.c.l.b16 %v1735
    %v2537 = vunpack.c.h.b16 %v1735
    %v2538 = vunpack.c.l.b16 %v1736
    %v2539 = vunpack.c.h.b16 %v1736
    %v2540 = vunpack.c.l.b16 %v1737
    %v2541 = vunpack.c.h.b16 %v1737
    %v2542 = vunpack.c.l.b16 %v1738
    %v2543 = vunpack.c.h.b16 %v1738
    %v2544 = vunpack.c.l.b16 %v1739
    %v2545 = vunpack.c.h.b16 %v1739
    %v2546 = vunpack.c.l.b16 %v1740
    %v2547 = vunpack.c.h.b16 %v1740
    %v2548 = vunpack.c.l.b16 %v1741
    %v2549 = vunpack.c.h.b16 %v1741
    %v2550 = vunpack.c.l.b16 %v1742
    %v2551 = vunpack.c.h.b16 %v1742
    %v2552 = vunpack.c.l.b16 %v1743
    %v2553 = vunpack.c.h.b16 %v1743
    %v2554 = vunpack.c.l.b16 %v1744
    %v2555 = vunpack.c.h.b16 %v1744
    %v2556 = vunpack.c.l.b16 %v1745
    %v2557 = vunpack.c.h.b16 %v1745
    %v2558 = vunpack.c.l.b16 %v1746
    %v2559 = vunpack.c.h.b16 %v1746
    %v2560 = vunpack.c.l.b16 %v1747
    %v2561 = vunpack.c.h.b16 %v1747
    %v2562 = vunpack.c.l.b16 %v1748
    %v2563 = vunpack.c.h.b16 %v1748
    %v2564 = vunpack.c.l.b16 %v1749
    %v2565 = vunpack.c.h.b16 %v1749
    %v2566 = vunpack.c.l.b16 %v1750
    %v2567 = vunpack.c.h.b16 %v1750
    %v2568 = vunpack.c.l.b16 %v1751
    %v2569 = vunpack.c.h.b16 %v1751
    %v2570 = vunpack.c.l.b16 %v1752
    %v2571 = vunpack.c.h.b16 %v1752
    %v2572 = vunpack.c.l.b16 %v1753
    %v2573 = vunpack.c.h.b16 %v1753
    %v2574 = vunpack.c.l.b16 %v1754
    %v2575 = vunpack.c.h.b16 %v1754
    %v2576 = vunpack.c.l.b16 %v1755
    %v2577 = vunpack.c.h.b16 %v1755
    %v2578 = vunpack.c.l.b16 %v1756
    %v2579 = vunpack.c.h.b16 %v1756
    %v2580 = vunpack.c.l.b16 %v1757
    %v2581 = vunpack.c.h.b16 %v1757
    %v2582 = vunpack.c.l.b16 %v1758
    %v2583 = vunpack.c.h.b16 %v1758
    %v2584 = vunpack.c.l.b16 %v1759
    %v2585 = vunpack.c.h.b16 %v1759
    %v2586 = vunpack.c.l.b16 %v1760
    %v2587 = vunpack.c.h.b16 %v1760
    %v2588 = vunpack.c.l.b16 %v1761
    %v2589 = vunpack.c.h.b16 %v1761
    %v2590 = vunpack.c.l.b16 %v1762
    %v2591 = vunpack.c.h.b16 %v1762
    %v2592 = vunpack.c.l.b16 %v1763
    %v2593 = vunpack.c.h.b16 %v1763
    %v2594 = vunpack.c.l.b16 %v1764
    %v2595 = vunpack.c.h.b16 %v1764
    %v2596 = vunpack.c.l.b16 %v1765
    %v2597 = vunpack.c.h.b16 %v1765
    %v2598 = vunpack.c.l.b16 %v1766
    %v2599 = vunpack.c.h.b16 %v1766
    %v2600 = vunpack.c.l.b16 %v1767
    %v2601 = vunpack.c.h.b16 %v1767
    %v2602 = vunpack.c.l.b16 %v1768
    %v2603 = vunpack.c.h.b16 %v1768
    %v2604 = vunpack.c.l.b16 %v1769
    %v2605 = vunpack.c.h.b16 %v1769
    %v2606 = vunpack.c.l.b16 %v1770
    %v2607 = vunpack.c.h.b16 %v1770
    %v2608 = vunpack.c.l.b16 %v1771
    %v2609 = vunpack.c.h.b16 %v1771
    %v2610 = vunpack.c.l.b16 %v1772
    %v2611 = vunpack.c.h.b16 %v1772
    %v2612 = vunpack.c.l.b16 %v1773
    %v2613 = vunpack.c.h.b16 %v1773
    %v2614 = vunpack.c.l.b16 %v1774
    %v2615 = vunpack.c.h.b16 %v1774
    %v2616 = vunpack.c.l.b16 %v1775
    %v2617 = vunpack.c.h.b16 %v1775
    %v2618 = vunpack.c.l.b16 %v1776
    %v2619 = vunpack.c.h.b16 %v1776
    %v2620 = vunpack.c.l.b16 %v1777
    %v2621 = vunpack.c.h.b16 %v1777
    %v2622 = vunpack.c.l.b16 %v1778
    %v2623 = vunpack.c.h.b16 %v1778
    %v2624 = vunpack.c.l.b16 %v1779
    %v2625 = vunpack.c.h.b16 %v1779
    %v2626 = vunpack.c.l.b16 %v1780
    %v2627 = vunpack.c.h.b16 %v1780
    %v2628 = vunpack.c.l.b16 %v1781
    %v2629 = vunpack.c.h.b16 %v1781
    %v2630 = vunpack.c.l.b16 %v1782
    %v2631 = vunpack.c.h.b16 %v1782
    %v2632 = vunpack.c.l.b16 %v1783
    %v2633 = vunpack.c.h.b16 %v1783
    %v2634 = vunpack.c.l.b16 %v1784
    %v2635 = vunpack.c.h.b16 %v1784
    %v2636 = vunpack.c.l.b16 %v1785
    %v2637 = vunpack.c.h.b16 %v1785
    %v2638 = vunpack.c.l.b16 %v1786
    %v2639 = vunpack.c.h.b16 %v1786
    %v2640 = vunpack.c.l.b16 %v1787
    %v2641 = vunpack.c.h.b16 %v1787
    %v2642 = vunpack.c.l.b16 %v1788
    %v2643 = vunpack.c.h.b16 %v1788
    %v2644 = vunpack.c.l.b16 %v1789
    %v2645 = vunpack.c.h.b16 %v1789
    %v2646 = vunpack.c.l.b16 %v1790
    %v2647 = vunpack.c.h.b16 %v1790
    %v2648 = vunpack.c.l.b16 %v1791
    %v2649 = vunpack.c.h.b16 %v1791
    %v2650 = vunpack.c.l.b16 %v1792
    %v2651 = vunpack.c.h.b16 %v1792
    %v2652 = vunpack.c.l.b16 %v1793
    %v2653 = vunpack.c.h.b16 %v1793
    %v2654 = vunpack.c.l.b16 %v1794
    %v2655 = vunpack.c.h.b16 %v1794
    %v2656 = vunpack.c.l.b16 %v1795
    %v2657 = vunpack.c.h.b16 %v1795
    %v2658 = vunpack.c.l.b16 %v1796
    %v2659 = vunpack.c.h.b16 %v1796
    %v2660 = vunpack.c.l.b16 %v1797
    %v2661 = vunpack.c.h.b16 %v1797
    %v2662 = vunpack.c.l.b16 %v1798
    %v2663 = vunpack.c.h.b16 %v1798
    %v2664 = vunpack.c.l.b16 %v1799
    %v2665 = vunpack.c.h.b16 %v1799
    %v2666 = vunpack.c.l.b16 %v1800
    %v2667 = vunpack.c.h.b16 %v1800
    %v2668 = vunpack.c.l.b16 %v1801
    %v2669 = vunpack.c.h.b16 %v1801
    %v2670 = vunpack.c.l.b16 %v1802
    %v2671 = vunpack.c.h.b16 %v1802
    %v2672 = vunpack.c.l.b16 %v1803
    %v2673 = vunpack.c.h.b16 %v1803
    %v2674 = vunpack.c.l.b16 %v1804
    %v2675 = vunpack.c.h.b16 %v1804
    %v2676 = vunpack.c.l.b16 %v1805
    %v2677 = vunpack.c.h.b16 %v1805
    %v2678 = vunpack.c.l.b16 %v1806
    %v2679 = vunpack.c.h.b16 %v1806
    %v2680 = vunpack.c.l.b16 %v1807
    %v2681 = vunpack.c.h.b16 %v1807
    %v2682 = vunpack.c.l.b16 %v1808
    %v2683 = vunpack.c.h.b16 %v1808
    %v2684 = vunpack.c.l.b16 %v1809
    %v2685 = vunpack.c.h.b16 %v1809
    %v2686 = vunpack.c.l.b16 %v1810
    %v2687 = vunpack.c.h.b16 %v1810
    %v2688 = vunpack.c.l.b16 %v1811
    %v2689 = vunpack.c.h.b16 %v1811
    %v2690 = vunpack.c.l.b16 %v1812
    %v2691 = vunpack.c.h.b16 %v1812
    %v2692 = vunpack.c.l.b16 %v1813
    %v2693 = vunpack.c.h.b16 %v1813
    %v2694 = vunpack.c.l.b16 %v1814
    %v2695 = vunpack.c.h.b16 %v1814
    %v2696 = vunpack.c.l.b16 %v1815
    %v2697 = vunpack.c.h.b16 %v1815
    %v2698 = vunpack.c.l.b16 %v1816
    %v2699 = vunpack.c.h.b16 %v1816
    %v2700 = vunpack.c.l.b16 %v1817
    %v2701 = vunpack.c.h.b16 %v1817
    %v2702 = vunpack.c.l.b16 %v1818
    %v2703 = vunpack.c.h.b16 %v1818
    %v2704 = vunpack.c.l.b16 %v1819
    %v2705 = vunpack.c.h.b16 %v1819
    %v2706 = vunpack.c.l.b16 %v1820
    %v2707 = vunpack.c.h.b16 %v1820
    %v2708 = vunpack.c.l.b16 %v1821
    %v2709 = vunpack.c.h.b16 %v1821
    %v2710 = vunpack.c.l.b16 %v1822
    %v2711 = vunpack.c.h.b16 %v1822
    %v2712 = vunpack.c.l.b16 %v1823
    %v2713 = vunpack.c.h.b16 %v1823
    %v2714 = vunpack.c.l.b16 %v1824
    %v2715 = vunpack.c.h.b16 %v1824
    %v2716 = vunpack.c.l.b16 %v1825
    %v2717 = vunpack.c.h.b16 %v1825
    %v2718 = vunpack.c.l.b16 %v1826
    %v2719 = vunpack.c.h.b16 %v1826
    %v2720 = vunpack.c.l.b16 %v1827
    %v2721 = vunpack.c.h.b16 %v1827
    %v2722 = vunpack.c.l.b16 %v1828
    %v2723 = vunpack.c.h.b16 %v1828
    %v2724 = vunpack.c.l.b16 %v1829
    %v2725 = vunpack.c.h.b16 %v1829
    %v2726 = vunpack.c.l.b16 %v1830
    %v2727 = vunpack.c.h.b16 %v1830
    %v2728 = vunpack.c.l.b16 %v1831
    %v2729 = vunpack.c.h.b16 %v1831
    %v2730 = vunpack.c.l.b16 %v1832
    %v2731 = vunpack.c.h.b16 %v1832
    %v2732 = vunpack.c.l.b16 %v1833
    %v2733 = vunpack.c.h.b16 %v1833
    %v2734 = vunpack.c.l.b16 %v1834
    %v2735 = vunpack.c.h.b16 %v1834
    %v2736 = vunpack.c.l.b16 %v1835
    %v2737 = vunpack.c.h.b16 %v1835
    %v2738 = vunpack.c.l.b16 %v1836
    %v2739 = vunpack.c.h.b16 %v1836
    %v2740 = vunpack.c.l.b16 %v1837
    %v2741 = vunpack.c.h.b16 %v1837
    %v2742 = vunpack.c.l.b16 %v1838
    %v2743 = vunpack.c.h.b16 %v1838
    %v2744 = vunpack.c.l.b16 %v1839
    %v2745 = vunpack.c.h.b16 %v1839
    %v2746 = vunpack.c.l.b16 %v1840
    %v2747 = vunpack.c.h.b16 %v1840
    %v2748 = vunpack.c.l.b16 %v1841
    %v2749 = vunpack.c.h.b16 %v1841
    %v2750 = vunpack.c.l.b16 %v1842
    %v2751 = vunpack.c.h.b16 %v1842
    %v2752 = vunpack.c.l.b16 %v1843
    %v2753 = vunpack.c.h.b16 %v1843
    %v2754 = vunpack.c.l.b16 %v1844
    %v2755 = vunpack.c.h.b16 %v1844
    %v2756 = vunpack.c.l.b16 %v1845
    %v2757 = vunpack.c.h.b16 %v1845
    %v2758 = vunpack.c.l.b16 %v1846
    %v2759 = vunpack.c.h.b16 %v1846
    %v2760 = vunpack.c.l.b16 %v1847
    %v2761 = vunpack.c.h.b16 %v1847
    %v2762 = vunpack.c.l.b16 %v1848
    %v2763 = vunpack.c.h.b16 %v1848
    %v2764 = vunpack.c.l.b16 %v1849
    %v2765 = vunpack.c.h.b16 %v1849
    %v2766 = vunpack.c.l.b16 %v1850
    %v2767 = vunpack.c.h.b16 %v1850
    %v2768 = vunpack.c.l.b16 %v1851
    %v2769 = vunpack.c.h.b16 %v1851
    %v2770 = vunpack.c.l.b16 %v1852
    %v2771 = vunpack.c.h.b16 %v1852
    %v2772 = vunpack.c.l.b16 %v1853
    %v2773 = vunpack.c.h.b16 %v1853
    %v2774 = vunpack.c.l.b16 %v1854
    %v2775 = vunpack.c.h.b16 %v1854
    %v2776 = vunpack.c.l.b16 %v1855
    %v2777 = vunpack.c.h.b16 %v1855
    %v2778 = vunpack.c.l.b16 %v1856
    %v2779 = vunpack.c.h.b16 %v1856
    %v2780 = vunpack.c.l.b16 %v1857
    %v2781 = vunpack.c.h.b16 %v1857
    %v2782 = vunpack.c.l.b16 %v1858
    %v2783 = vunpack.c.h.b16 %v1858
    %v2784 = vunpack.c.l.b16 %v1859
    %v2785 = vunpack.c.h.b16 %v1859
    %v2786 = vunpack.c.l.b16 %v1860
    %v2787 = vunpack.c.h.b16 %v1860
    %v2788 = vunpack.c.l.b16 %v1861
    %v2789 = vunpack.c.h.b16 %v1861
    %v2790 = vunpack.c.l.b16 %v1862
    %v2791 = vunpack.c.h.b16 %v1862
    %v2792 = vunpack.c.l.b16 %v1863
    %v2793 = vunpack.c.h.b16 %v1863
    %v2794 = vunpack.c.l.b16 %v1864
    %v2795 = vunpack.c.h.b16 %v1864
    %v2796 = vunpack.c.l.b16 %v1865
    %v2797 = vunpack.c.h.b16 %v1865
    %v2798 = vunpack.c.l.b16 %v1866
    %v2799 = vunpack.c.h.b16 %v1866
    %v2800 = vunpack.c.l.b16 %v1867
    %v2801 = vunpack.c.h.b16 %v1867
    %v2802 = vunpack.c.l.b16 %v1868
    %v2803 = vunpack.c.h.b16 %v1868
    %v2804 = vunpack.c.l.b16 %v1869
    %v2805 = vunpack.c.h.b16 %v1869
    %v2806 = vunpack.c.l.b16 %v1870
    %v2807 = vunpack.c.h.b16 %v1870
    %v2808 = vunpack.c.l.b16 %v1871
    %v2809 = vunpack.c.h.b16 %v1871
    %v2810 = vunpack.c.l.b16 %v1872
    %v2811 = vunpack.c.h.b16 %v1872
    %v2812 = vunpack.c.l.b16 %v1873
    %v2813 = vunpack.c.h.b16 %v1873
    %v2814 = vunpack.c.l.b16 %v1874
    %v2815 = vunpack.c.h.b16 %v1874
    %v2816 = vunpack.c.l.b16 %v1875
    %v2817 = vunpack.c.h.b16 %v1875
    %v2818 = vunpack.c.l.b16 %v1876
    %v2819 = vunpack.c.h.b16 %v1876
    %v2820 = vunpack.c.l.b16 %v1877
    %v2821 = vunpack.c.h.b16 %v1877
    %v2822 = vunpack.c.l.b16 %v1878
    %v2823 = vunpack.c.h.b16 %v1878
    %v2824 = vunpack.c.l.b16 %v1879
    %v2825 = vunpack.c.h.b16 %v1879
    %v2826 = vunpack.c.l.b16 %v1880
    %v2827 = vunpack.c.h.b16 %v1880
    %v2828 = vunpack.c.l.b16 %v1881
    %v2829 = vunpack.c.h.b16 %v1881
    %v2830 = vunpack.c.l.b16 %v1882
    %v2831 = vunpack.c.h.b16 %v1882
    %v2832 = vunpack.c.l.b16 %v1883
    %v2833 = vunpack.c.h.b16 %v1883
    %v2834 = vunpack.c.l.b16 %v1884
    %v2835 = vunpack.c.h.b16 %v1884
    %v2836 = vunpack.c.l.b16 %v1885
    %v2837 = vunpack.c.h.b16 %v1885
    %v2838 = vunpack.c.l.b16 %v1886
    %v2839 = vunpack.c.h.b16 %v1886
    %v2840 = vunpack.c.l.b16 %v1887
    %v2841 = vunpack.c.h.b16 %v1887
    %v2842 = vunpack.c.l.b16 %v1888
    %v2843 = vunpack.c.h.b16 %v1888
    %v2844 = vunpack.c.l.b16 %v1889
    %v2845 = vunpack.c.h.b16 %v1889
    %v2846 = vunpack.c.l.b16 %v1890
    %v2847 = vunpack.c.h.b16 %v1890
    %v2848 = vunpack.c.l.b16 %v1891
    %v2849 = vunpack.c.h.b16 %v1891
    %v2850 = vunpack.c.l.b16 %v1892
    %v2851 = vunpack.c.h.b16 %v1892
    %v2852 = vunpack.c.l.b16 %v1893
    %v2853 = vunpack.c.h.b16 %v1893
    %v2854 = vunpack.c.l.b16 %v1894
    %v2855 = vunpack.c.h.b16 %v1894
    %v2856 = vunpack.c.l.b16 %v1895
    %v2857 = vunpack.c.h.b16 %v1895
    %v2858 = vunpack.c.l.b16 %v1896
    %v2859 = vunpack.c.h.b16 %v1896
    %v2860 = vunpack.c.l.b16 %v1897
    %v2861 = vunpack.c.h.b16 %v1897
    %v2862 = vunpack.c.l.b16 %v1898
    %v2863 = vunpack.c.h.b16 %v1898
    %v2864 = vunpack.c.l.b16 %v1899
    %v2865 = vunpack.c.h.b16 %v1899
    %v2866 = vunpack.c.l.b16 %v1900
    %v2867 = vunpack.c.h.b16 %v1900
    %v2868 = vunpack.c.l.b16 %v1901
    %v2869 = vunpack.c.h.b16 %v1901
    %v2870 = vunpack.c.l.b16 %v1902
    %v2871 = vunpack.c.h.b16 %v1902
    %v2872 = vunpack.c.l.b16 %v1903
    %v2873 = vunpack.c.h.b16 %v1903
    %v2874 = vunpack.c.l.b16 %v1904
    %v2875 = vunpack.c.h.b16 %v1904
    %v2876 = vunpack.c.l.b16 %v1905
    %v2877 = vunpack.c.h.b16 %v1905
    %v2878 = vunpack.c.l.b16 %v1906
    %v2879 = vunpack.c.h.b16 %v1906
    %v2880 = vunpack.c.l.b16 %v1907
    %v2881 = vunpack.c.h.b16 %v1907
    %v2882 = vunpack.c.l.b16 %v1908
    %v2883 = vunpack.c.h.b16 %v1908
    %v2884 = vunpack.c.l.b16 %v1909
    %v2885 = vunpack.c.h.b16 %v1909
    %v2886 = vunpack.c.l.b16 %v1910
    %v2887 = vunpack.c.h.b16 %v1910
    %v2888 = vunpack.c.l.b16 %v1911
    %v2889 = vunpack.c.h.b16 %v1911
    %v2890 = vunpack.c.l.b16 %v1912
    %v2891 = vunpack.c.h.b16 %v1912
    %v2892 = vunpack.c.l.b16 %v1913
    %v2893 = vunpack.c.h.b16 %v1913
    %v2894 = vunpack.c.l.b16 %v1914
    %v2895 = vunpack.c.h.b16 %v1914
    %v2896 = vunpack.c.l.b16 %v1915
    %v2897 = vunpack.c.h.b16 %v1915
    %v2898 = vunpack.c.l.b16 %v1916
    %v2899 = vunpack.c.h.b16 %v1916
    %v2900 = vunpack.c.l.b16 %v1917
    %v2901 = vunpack.c.h.b16 %v1917
    %v2902 = vunpack.c.l.b16 %v1918
    %v2903 = vunpack.c.h.b16 %v1918
    %v2904 = vunpack.c.l.b16 %v1919
    %v2905 = vunpack.c.h.b16 %v1919
    %v2906 = vunpack.c.l.b16 %v1920
    %v2907 = vunpack.c.h.b16 %v1920
    %v2908 = vunpack.c.l.b16 %v1921
    %v2909 = vunpack.c.h.b16 %v1921
    %v2910 = vunpack.c.l.b16 %v1922
    %v2911 = vunpack.c.h.b16 %v1922
    %v2912 = vunpack.c.l.b16 %v1923
    %v2913 = vunpack.c.h.b16 %v1923
    %v2914 = vpack.c.b16 %v2278, %v2274
    %v2915 = vpack.c.b16 %v2279, %v2275
    %v2916 = vpack.c.b16 %v2280, %v2276
    %v2917 = vpack.c.b16 %v2281, %v2277
    %v2918 = vpack.c.b16 %v2286, %v2282
    %v2919 = vpack.c.b16 %v2287, %v2283
    %v2920 = vpack.c.b16 %v2288, %v2284
    %v2921 = vpack.c.b16 %v2289, %v2285
    %v2922 = vpack.c.b16 %v2294, %v2290
    %v2923 = vpack.c.b16 %v2295, %v2291
    %v2924 = vpack.c.b16 %v2296, %v2292
    %v2925 = vpack.c.b16 %v2297, %v2293
    %v2926 = vpack.c.b16 %v2302, %v2298
    %v2927 = vpack.c.b16 %v2303, %v2299
    %v2928 = vpack.c.b16 %v2304, %v2300
    %v2929 = vpack.c.b16 %v2305, %v2301
    %v2930 = vpack.c.b16 %v2310, %v2306
    %v2931 = vpack.c.b16 %v2311, %v2307
    %v2932 = vpack.c.b16 %v2312, %v2308
    %v2933 = vpack.c.b16 %v2313, %v2309
    %v2934 = vpack.c.b16 %v2318, %v2314
    %v2935 = vpack.c.b16 %v2319, %v2315
    %v2936 = vpack.c.b16 %v2320, %v2316
    %v2937 = vpack.c.b16 %v2321, %v2317
    %v2938 = vpack.c.b16 %v2326, %v2322
    %v2939 = vpack.c.b16 %v2327, %v2323
    %v2940 = vpack.c.b16 %v2328, %v2324
    %v2941 = vpack.c.b16 %v2329, %v2325
    %v2942 = vpack.c.b16 %v2334, %v2330
    %v2943 = vpack.c.b16 %v2335, %v2331
    %v2944 = vpack.c.b16 %v2336, %v2332
    %v2945 = vpack.c.b16 %v2337, %v2333
    %v2946 = vpack.c.b16 %v2342, %v2338
    %v2947 = vpack.c.b16 %v2343, %v2339
    %v2948 = vpack.c.b16 %v2344, %v2340
    %v2949 = vpack.c.b16 %v2345, %v2341
    %v2950 = vpack.c.b16 %v2350, %v2346
    %v2951 = vpack.c.b16 %v2351, %v2347
    %v2952 = vpack.c.b16 %v2352, %v2348
    %v2953 = vpack.c.b16 %v2353, %v2349
    %v2954 = vpack.c.b16 %v2358, %v2354
    %v2955 = vpack.c.b16 %v2359, %v2355
    %v2956 = vpack.c.b16 %v2360, %v2356
    %v2957 = vpack.c.b16 %v2361, %v2357
    %v2958 = vpack.c.b16 %v2366, %v2362
    %v2959 = vpack.c.b16 %v2367, %v2363
    %v2960 = vpack.c.b16 %v2368, %v2364
    %v2961 = vpack.c.b16 %v2369, %v2365
    %v2962 = vpack.c.b16 %v2374, %v2370
    %v2963 = vpack.c.b16 %v2375, %v2371
    %v2964 = vpack.c.b16 %v2376, %v2372
    %v2965 = vpack.c.b16 %v2377, %v2373
    %v2966 = vpack.c.b16 %v2382, %v2378
    %v2967 = vpack.c.b16 %v2383, %v2379
    %v2968 = vpack.c.b16 %v2384, %v2380
    %v2969 = vpack.c.b16 %v2385, %v2381
    %v2970 = vpack.c.b16 %v2390, %v2386
    %v2971 = vpack.c.b16 %v2391, %v2387
    %v2972 = vpack.c.b16 %v2392, %v2388
    %v2973 = vpack.c.b16 %v2393, %v2389
    %v2974 = vpack.c.b16 %v2398, %v2394
    %v2975 = vpack.c.b16 %v2399, %v2395
    %v2976 = vpack.c.b16 %v2400, %v2396
    %v2977 = vpack.c.b16 %v2401, %v2397
    %v2978 = vpack.c.b16 %v2406, %v2402
    %v2979 = vpack.c.b16 %v2407, %v2403
    %v2980 = vpack.c.b16 %v2408, %v2404
    %v2981 = vpack.c.b16 %v2409, %v2405
    %v2982 = vpack.c.b16 %v2414, %v2410
    %v2983 = vpack.c.b16 %v2415, %v2411
    %v2984 = vpack.c.b16 %v2416, %v2412
    %v2985 = vpack.c.b16 %v2417, %v2413
    %v2986 = vpack.c.b16 %v2422, %v2418
    %v2987 = vpack.c.b16 %v2423, %v2419
    %v2988 = vpack.c.b16 %v2424, %v2420
    %v2989 = vpack.c.b16 %v2425, %v2421
    %v2990 = vpack.c.b16 %v2430, %v2426
    %v2991 = vpack.c.b16 %v2431, %v2427
    %v2992 = vpack.c.b16 %v2432, %v2428
    %v2993 = vpack.c.b16 %v2433, %v2429
    %v2994 = vpack.c.b16 %v2438, %v2434
    %v2995 = vpack.c.b16 %v2439, %v2435
    %v2996 = vpack.c.b16 %v2440, %v2436
    %v2997 = vpack.c.b16 %v2441, %v2437
    %v2998 = vpack.c.b16 %v2446, %v2442
    %v2999 = vpack.c.b16 %v2447, %v2443
    %v3000 = vpack.c.b16 %v2448, %v2444
    %v3001 = vpack.c.b16 %v2449, %v2445
    %v3002 = vpack.c.b16 %v2454, %v2450
    %v3003 = vpack.c.b16 %v2455, %v2451
    %v3004 = vpack.c.b16 %v2456, %v2452
    %v3005 = vpack.c.b16 %v2457, %v2453
    %v3006 = vpack.c.b16 %v2462, %v2458
    %v3007 = vpack.c.b16 %v2463, %v2459
    %v3008 = vpack.c.b16 %v2464, %v2460
    %v3009 = vpack.c.b16 %v2465, %v2461
    %v3010 = vpack.c.b16 %v2470, %v2466
    %v3011 = vpack.c.b16 %v2471, %v2467
    %v3012 = vpack.c.b16 %v2472, %v2468
    %v3013 = vpack.c.b16 %v2473, %v2469
    %v3014 = vpack.c.b16 %v2478, %v2474
    %v3015 = vpack.c.b16 %v2479, %v2475
    %v3016 = vpack.c.b16 %v2480, %v2476
    %v3017 = vpack.c.b16 %v2481, %v2477
    %v3018 = vpack.c.b16 %v2486, %v2482
    %v3019 = vpack.c.b16 %v2487, %v2483
    %v3020 = vpack.c.b16 %v2488, %v2484
    %v3021 = vpack.c.b16 %v2489, %v2485
    %v3022 = vpack.c.b16 %v2494, %v2490
    %v3023 = vpack.c.b16 %v2495, %v2491
    %v3024 = vpack.c.b16 %v2496, %v2492
    %v3025 = vpack.c.b16 %v2497, %v2493
    %v3026 = vpack.c.b16 %v2502, %v2498
    %v3027 = vpack.c.b16 %v2503, %v2499
    %v3028 = vpack.c.b16 %v2504, %v2500
    %v3029 = vpack.c.b16 %v2505, %v2501
    %v3030 = vpack.c.b16 %v2510, %v2506
    %v3031 = vpack.c.b16 %v2511, %v2507
    %v3032 = vpack.c.b16 %v2512, %v2508
    %v3033 = vpack.c.b16 %v2513, %v2509
    %v3034 = vpack.c.b16 %v2518, %v2514
    %v3035 = vpack.c.b16 %v2519, %v2515
    %v3036 = vpack.c.b16 %v2520, %v2516
    %v3037 = vpack.c.b16 %v2521, %v2517
    %v3038 = vpack.c.b16 %v2526, %v2522
    %v3039 = vpack.c.b16 %v2527, %v2523
    %v3040 = vpack.c.b16 %v2528, %v2524
    %v3041 = vpack.c.b16 %v2529, %v2525
    %v3042 = vpack.c.b16 %v2534, %v2530
    %v3043 = vpack.c.b16 %v2535, %v2531
    %v3044 = vpack.c.b16 %v2536, %v2532
    %v3045 = vpack.c.b16 %v2537, %v2533
    %v3046 = vpack.c.b16 %v2542, %v2538
    %v3047 = vpack.c.b16 %v2543, %v2539
    %v3048 = vpack.c.b16 %v2544, %v2540
    %v3049 = vpack.c.b16 %v2545, %v2541
    %v3050 = vpack.c.b16 %v2550, %v2546
    %v3051 = vpack.c.b16 %v2551, %v2547
    %v3052 = vpack.c.b16 %v2552, %v2548
    %v3053 = vpack.c.b16 %v2553, %v2549
    %v3054 = vpack.c.b16 %v2558, %v2554
    %v3055 = vpack.c.b16 %v2559, %v2555
    %v3056 = vpack.c.b16 %v2560, %v2556
    %v3057 = vpack.c.b16 %v2561, %v2557
    %v3058 = vpack.c.b16 %v2566, %v2562
    %v3059 = vpack.c.b16 %v2567, %v2563
    %v3060 = vpack.c.b16 %v2568, %v2564
    %v3061 = vpack.c.b16 %v2569, %v2565
    %v3062 = vpack.c.b16 %v2574, %v2570
    %v3063 = vpack.c.b16 %v2575, %v2571
    %v3064 = vpack.c.b16 %v2576, %v2572
    %v3065 = vpack.c.b16 %v2577, %v2573
    %v3066 = vpack.c.b16 %v2582, %v2578
    %v3067 = vpack.c.b16 %v2583, %v2579
    %v3068 = vpack.c.b16 %v2584, %v2580
    %v3069 = vpack.c.b16 %v2585, %v2581
    %v3070 = vpack.c.b16 %v2590, %v2586
    %v3071 = vpack.c.b16 %v2591, %v2587
    %v3072 = vpack.c.b16 %v2592, %v2588
    %v3073 = vpack.c.b16 %v2593, %v2589
    %v3074 = vpack.c.b16 %v2598, %v2594
    %v3075 = vpack.c.b16 %v2599, %v2595
    %v3076 = vpack.c.b16 %v2600, %v2596
    %v3077 = vpack.c.b16 %v2601, %v2597
    %v3078 = vpack.c.b16 %v2606, %v2602
    %v3079 = vpack.c.b16 %v2607, %v2603
    %v3080 = vpack.c.b16 %v2608, %v2604
    %v3081 = vpack.c.b16 %v2609, %v2605
    %v3082 = vpack.c.b16 %v2614, %v2610
    %v3083 = vpack.c.b16 %v2615, %v2611
    %v3084 = vpack.c.b16 %v2616, %v2612
    %v3085 = vpack.c.b16 %v2617, %v2613
    %v3086 = vpack.c.b16 %v2622, %v2618
    %v3087 = vpack.c.b16 %v2623, %v2619
    %v3088 = vpack.c.b16 %v2624, %v2620
    %v3089 = vpack.c.b16 %v2625, %v2621
    %v3090 = vpack.c.b16 %v2630, %v2626
    %v3091 = vpack.c.b16 %v2631, %v2627
    %v3092 = vpack.c.b16 %v2632, %v2628
    %v3093 = vpack.c.b16 %v2633, %v2629
    %v3094 = vpack.c.b16 %v2638, %v2634
    %v3095 = vpack.c.b16 %v2639, %v2635
    %v3096 = vpack.c.b16 %v2640, %v2636
    %v3097 = vpack.c.b16 %v2641, %v2637
    %v3098 = vpack.c.b16 %v2646, %v2642
    %v3099 = vpack.c.b16 %v2647, %v2643
    %v3100 = vpack.c.b16 %v2648, %v2644
    %v3101 = vpack.c.b16 %v2649, %v2645
    %v3102 = vpack.c.b16 %v2654, %v2650
    %v3103 = vpack.c.b16 %v2655, %v2651
    %v3104 = vpack.c.b16 %v2656, %v2652
    %v3105 = vpack.c.b16 %v2657, %v2653
    %v3106 = vpack.c.b16 %v2662, %v2658
    %v3107 = vpack.c.b16 %v2663, %v2659
    %v3108 = vpack.c.b16 %v2664, %v2660
    %v3109 = vpack.c.b16 %v2665, %v2661
    %v3110 = vpack.c.b16 %v2670, %v2666
    %v3111 = vpack.c.b16 %v2671, %v2667
    %v3112 = vpack.c.b16 %v2672, %v2668
    %v3113 = vpack.c.b16 %v2673, %v2669
    %v3114 = vpack.c.b16 %v2678, %v2674
    %v3115 = vpack.c.b16 %v2679, %v2675
    %v3116 = vpack.c.b16 %v2680, %v2676
    %v3117 = vpack.c.b16 %v2681, %v2677
    %v3118 = vpack.c.b16 %v2686, %v2682
    %v3119 = vpack.c.b16 %v2687, %v2683
    %v3120 = vpack.c.b16 %v2688, %v2684
    %v3121 = vpack.c.b16 %v2689, %v2685
    %v3122 = vpack.c.b16 %v2694, %v2690
    %v3123 = vpack.c.b16 %v2695, %v2691
    %v3124 = vpack.c.b16 %v2696, %v2692
    %v3125 = vpack.c.b16 %v2697, %v2693
    %v3126 = vpack.c.b16 %v2702, %v2698
    %v3127 = vpack.c.b16 %v2703, %v2699
    %v3128 = vpack.c.b16 %v2704, %v2700
    %v3129 = vpack.c.b16 %v2705, %v2701
    %v3130 = vpack.c.b16 %v2710, %v2706
    %v3131 = vpack.c.b16 %v2711, %v2707
    %v3132 = vpack.c.b16 %v2712, %v2708
    %v3133 = vpack.c.b16 %v2713, %v2709
    %v3134 = vpack.c.b16 %v2718, %v2714
    %v3135 = vpack.c.b16 %v2719, %v2715
    %v3136 = vpack.c.b16 %v2720, %v2716
    %v3137 = vpack.c.b16 %v2721, %v2717
    %v3138 = vpack.c.b16 %v2726, %v2722
    %v3139 = vpack.c.b16 %v2727, %v2723
    %v3140 = vpack.c.b16 %v2728, %v2724
    %v3141 = vpack.c.b16 %v2729, %v2725
    %v3142 = vpack.c.b16 %v2734, %v2730
    %v3143 = vpack.c.b16 %v2735, %v2731
    %v3144 = vpack.c.b16 %v2736, %v2732
    %v3145 = vpack.c.b16 %v2737, %v2733
    %v3146 = vpack.c.b16 %v2742, %v2738
    %v3147 = vpack.c.b16 %v2743, %v2739
    %v3148 = vpack.c.b16 %v2744, %v2740
    %v3149 = vpack.c.b16 %v2745, %v2741
    %v3150 = vpack.c.b16 %v2750, %v2746
    %v3151 = vpack.c.b16 %v2751, %v2747
    %v3152 = vpack.c.b16 %v2752, %v2748
    %v3153 = vpack.c.b16 %v2753, %v2749
    %v3154 = vpack.c.b16 %v2758, %v2754
    %v3155 = vpack.c.b16 %v2759, %v2755
    %v3156 = vpack.c.b16 %v2760, %v2756
    %v3157 = vpack.c.b16 %v2761, %v2757
    %v3158 = vpack.c.b16 %v2766, %v2762
    %v3159 = vpack.c.b16 %v2767, %v2763
    %v3160 = vpack.c.b16 %v2768, %v2764
    %v3161 = vpack.c.b16 %v2769, %v2765
    %v3162 = vpack.c.b16 %v2774, %v2770
    %v3163 = vpack.c.b16 %v2775, %v2771
    %v3164 = vpack.c.b16 %v2776, %v2772
    %v3165 = vpack.c.b16 %v2777, %v2773
    %v3166 = vpack.c.b16 %v2782, %v2778
    %v3167 = vpack.c.b16 %v2783, %v2779
    %v3168 = vpack.c.b16 %v2784, %v2780
    %v3169 = vpack.c.b16 %v2785, %v2781
    %v3170 = vpack.c.b16 %v2790, %v2786
    %v3171 = vpack.c.b16 %v2791, %v2787
    %v3172 = vpack.c.b16 %v2792, %v2788
    %v3173 = vpack.c.b16 %v2793, %v2789
    %v3174 = vpack.c.b16 %v2798, %v2794
    %v3175 = vpack.c.b16 %v2799, %v2795
    %v3176 = vpack.c.b16 %v2800, %v2796
    %v3177 = vpack.c.b16 %v2801, %v2797
    %v3178 = vpack.c.b16 %v2806, %v2802
    %v3179 = vpack.c.b16 %v2807, %v2803
    %v3180 = vpack.c.b16 %v2808, %v2804
    %v3181 = vpack.c.b16 %v2809, %v2805
    %v3182 = vpack.c.b16 %v2814, %v2810
    %v3183 = vpack.c.b16 %v2815, %v2811
    %v3184 = vpack.c.b16 %v2816, %v2812
    %v3185 = vpack.c.b16 %v2817, %v2813
    %v3186 = vpack.c.b16 %v2822, %v2818
    %v3187 = vpack.c.b16 %v2823, %v2819
    %v3188 = vpack.c.b16 %v2824, %v2820
    %v3189 = vpack.c.b16 %v2825, %v2821
    %v3190 = vpack.c.b16 %v2830, %v2826
    %v3191 = vpack.c.b16 %v2831, %v2827
    %v3192 = vpack.c.b16 %v2832, %v2828
    %v3193 = vpack.c.b16 %v2833, %v2829
    %v3194 = vpack.c.b16 %v2838, %v2834
    %v3195 = vpack.c.b16 %v2839, %v2835
    %v3196 = vpack.c.b16 %v2840, %v2836
    %v3197 = vpack.c.b16 %v2841, %v2837
    %v3198 = vpack.c.b16 %v2846, %v2842
    %v3199 = vpack.c.b16 %v2847, %v2843
    %v3200 = vpack.c.b16 %v2848, %v2844
    %v3201 = vpack.c.b16 %v2849, %v2845
    %v3202 = vpack.c.b16 %v2854, %v2850
    %v3203 = vpack.c.b16 %v2855, %v2851
    %v3204 = vpack.c.b16 %v2856, %v2852
    %v3205 = vpack.c.b16 %v2857, %v2853
    %v3206 = vpack.c.b16 %v2862, %v2858
    %v3207 = vpack.c.b16 %v2863, %v2859
    %v3208 = vpack.c.b16 %v2864, %v2860
    %v3209 = vpack.c.b16 %v2865, %v2861
    %v3210 = vpack.c.b16 %v2870, %v2866
    %v3211 = vpack.c.b16 %v2871, %v2867
    %v3212 = vpack.c.b16 %v2872, %v2868
    %v3213 = vpack.c.b16 %v2873, %v2869
    %v3214 = vpack.c.b16 %v2878, %v2874
    %v3215 = vpack.c.b16 %v2879, %v2875
    %v3216 = vpack.c.b16 %v2880, %v2876
    %v3217 = vpack.c.b16 %v2881, %v2877
    %v3218 = vpack.c.b16 %v2886, %v2882
    %v3219 = vpack.c.b16 %v2887, %v2883
    %v3220 = vpack.c.b16 %v2888, %v2884
    %v3221 = vpack.c.b16 %v2889, %v2885
    %v3222 = vpack.c.b16 %v2894, %v2890
    %v3223 = vpack.c.b16 %v2895, %v2891
    %v3224 = vpack.c.b16 %v2896, %v2892
    %v3225 = vpack.c.b16 %v2897, %v2893
    %v3226 = vpack.c.b16 %v2902, %v2898
    %v3227 = vpack.c.b16 %v2903, %v2899
    %v3228 = vpack.c.b16 %v2904, %v2900
    %v3229 = vpack.c.b16 %v2905, %v2901
    %v3230 = vpack.c.b16 %v2910, %v2906
    %v3231 = vpack.c.b16 %v2911, %v2907
    %v3232 = vpack.c.b16 %v2912, %v2908
    %v3233 = vpack.c.b16 %v2913, %v2909
    %3554 = vmatpush.bf16.msra.mxu0 %v2942
    %3555 = vmatpush.bf16.msra.mxu0 %v2938
    %3556 = vmatpush.bf16.msra.mxu0 %v2934
    %3557 = vmatpush.bf16.msra.mxu0 %v2930
    %3558 = vmatpush.bf16.msra.mxu0 %v2926
    %3559 = vmatpush.bf16.msra.mxu0 %v2922
    %3560 = vmatpush.bf16.msra.mxu0 %v2918
    %3561 = vmatpush.bf16.msra.mxu0 %v2914
    %3562 = vmatmul.bf16.gmra.mxu0 %v1934
    %v3563 = vpop.f32.mrf.mxu0
    %v3564 = vadd.f32 %v1926, %v3563
    %v3565 = vpop.f32.mrf.mxu0
    %v3566 = vadd.f32 %v1926, %v3565
    %3567 = vdwg.mxu0
    %3568 = vmatpush.bf16.msra.mxu0 %v2974
    %3569 = vmatpush.bf16.msra.mxu0 %v2970
    %3570 = vmatpush.bf16.msra.mxu0 %v2966
    %3571 = vmatpush.bf16.msra.mxu0 %v2962
    %3572 = vmatpush.bf16.msra.mxu0 %v2958
    %3573 = vmatpush.bf16.msra.mxu0 %v2954
    %3574 = vmatpush.bf16.msra.mxu0 %v2950
    %3575 = vmatpush.bf16.msra.mxu0 %v2946
    %3576 = vmatmul.bf16.gmra.mxu0 %v1935
    %v3577 = vpop.f32.mrf.mxu0
    %v3578 = vadd.f32 %v3564, %v3577
    %v3579 = vpop.f32.mrf.mxu0
    %v3580 = vadd.f32 %v3566, %v3579
    %3581 = vdwg.mxu0
    %3582 = vmatpush.bf16.msra.mxu0 %v3006
    %3583 = vmatpush.bf16.msra.mxu0 %v3002
    %3584 = vmatpush.bf16.msra.mxu0 %v2998
    %3585 = vmatpush.bf16.msra.mxu0 %v2994
    %3586 = vmatpush.bf16.msra.mxu0 %v2990
    %3587 = vmatpush.bf16.msra.mxu0 %v2986
    %3588 = vmatpush.bf16.msra.mxu0 %v2982
    %3589 = vmatpush.bf16.msra.mxu0 %v2978
    %3590 = vmatmul.bf16.gmra.mxu0 %v1936
    %v3591 = vpop.f32.mrf.mxu0
    %v3592 = vadd.f32 %v3578, %v3591
    %v3593 = vpop.f32.mrf.mxu0
    %v3594 = vadd.f32 %v3580, %v3593
    %3595 = vdwg.mxu0
    %3596 = vmatpush.bf16.msra.mxu0 %v3038
    %3597 = vmatpush.bf16.msra.mxu0 %v3034
    %3598 = vmatpush.bf16.msra.mxu0 %v3030
    %3599 = vmatpush.bf16.msra.mxu0 %v3026
    %3600 = vmatpush.bf16.msra.mxu0 %v3022
    %3601 = vmatpush.bf16.msra.mxu0 %v3018
    %3602 = vmatpush.bf16.msra.mxu0 %v3014
    %3603 = vmatpush.bf16.msra.mxu0 %v3010
    %3604 = vmatmul.bf16.gmra.mxu0 %v1937
    %v3605 = vpop.f32.mrf.mxu0
    %v3606 = vadd.f32 %v3592, %v3605
    %v3607 = vpop.f32.mrf.mxu0
    %v3608 = vadd.f32 %v3594, %v3607
    %3609 = vdwg.mxu0
    %3610 = vmatpush.bf16.msra.mxu0 %v3070
    %3611 = vmatpush.bf16.msra.mxu0 %v3066
    %3612 = vmatpush.bf16.msra.mxu0 %v3062
    %3613 = vmatpush.bf16.msra.mxu0 %v3058
    %3614 = vmatpush.bf16.msra.mxu0 %v3054
    %3615 = vmatpush.bf16.msra.mxu0 %v3050
    %3616 = vmatpush.bf16.msra.mxu0 %v3046
    %3617 = vmatpush.bf16.msra.mxu0 %v3042
    %3618 = vmatmul.bf16.gmra.mxu0 %v1938
    %v3619 = vpop.f32.mrf.mxu0
    %v3620 = vadd.f32 %v3606, %v3619
    %v3621 = vpop.f32.mrf.mxu0
    %v3622 = vadd.f32 %v3608, %v3621
    %3623 = vdwg.mxu0
    %3624 = vmatpush.bf16.msra.mxu0 %v3102
    %3625 = vmatpush.bf16.msra.mxu0 %v3098
    %3626 = vmatpush.bf16.msra.mxu0 %v3094
    %3627 = vmatpush.bf16.msra.mxu0 %v3090
    %3628 = vmatpush.bf16.msra.mxu0 %v3086
    %3629 = vmatpush.bf16.msra.mxu0 %v3082
    %3630 = vmatpush.bf16.msra.mxu0 %v3078
    %3631 = vmatpush.bf16.msra.mxu0 %v3074
    %3632 = vmatmul.bf16.gmra.mxu0 %v1939
    %v3633 = vpop.f32.mrf.mxu0
    %v3634 = vadd.f32 %v3620, %v3633
    %v3635 = vpop.f32.mrf.mxu0
    %v3636 = vadd.f32 %v3622, %v3635
    %3637 = vdwg.mxu0
    %3638 = vmatpush.bf16.msra.mxu0 %v3134
    %3639 = vmatpush.bf16.msra.mxu0 %v3130
    %3640 = vmatpush.bf16.msra.mxu0 %v3126
    %3641 = vmatpush.bf16.msra.mxu0 %v3122
    %3642 = vmatpush.bf16.msra.mxu0 %v3118
    %3643 = vmatpush.bf16.msra.mxu0 %v3114
    %3644 = vmatpush.bf16.msra.mxu0 %v3110
    %3645 = vmatpush.bf16.msra.mxu0 %v3106
    %3646 = vmatmul.bf16.gmra.mxu0 %v1940
    %v3647 = vpop.f32.mrf.mxu0
    %v3648 = vadd.f32 %v3634, %v3647
    %v3649 = vpop.f32.mrf.mxu0
    %v3650 = vadd.f32 %v3636, %v3649
    %3651 = vdwg.mxu0
    %3652 = vmatpush.bf16.msra.mxu0 %v3166
    %3653 = vmatpush.bf16.msra.mxu0 %v3162
    %3654 = vmatpush.bf16.msra.mxu0 %v3158
    %3655 = vmatpush.bf16.msra.mxu0 %v3154
    %3656 = vmatpush.bf16.msra.mxu0 %v3150
    %3657 = vmatpush.bf16.msra.mxu0 %v3146
    %3658 = vmatpush.bf16.msra.mxu0 %v3142
    %3659 = vmatpush.bf16.msra.mxu0 %v3138
    %3660 = vmatmul.bf16.gmra.mxu0 %v1941
    %v3661 = vpop.f32.mrf.mxu0
    %v3662 = vadd.f32 %v3648, %v3661
    %v3663 = vpop.f32.mrf.mxu0
    %v3664 = vadd.f32 %v3650, %v3663
    %3665 = vdwg.mxu0
    %3666 = vmatpush.bf16.msra.mxu0 %v3198
    %3667 = vmatpush.bf16.msra.mxu0 %v3194
    %3668 = vmatpush.bf16.msra.mxu0 %v3190
    %3669 = vmatpush.bf16.msra.mxu0 %v3186
    %3670 = vmatpush.bf16.msra.mxu0 %v3182
    %3671 = vmatpush.bf16.msra.mxu0 %v3178
    %3672 = vmatpush.bf16.msra.mxu0 %v3174
    %3673 = vmatpush.bf16.msra.mxu0 %v3170
    %3674 = vmatmul.bf16.gmra.mxu0 %v1942
    %v3675 = vpop.f32.mrf.mxu0
    %v3676 = vadd.f32 %v3662, %v3675
    %v3677 = vpop.f32.mrf.mxu0
    %v3678 = vadd.f32 %v3664, %v3677
    %3679 = vdwg.mxu0
    %3680 = vmatpush.bf16.msra.mxu0 %v3230
    %3681 = vmatpush.bf16.msra.mxu0 %v3226
    %3682 = vmatpush.bf16.msra.mxu0 %v3222
    %3683 = vmatpush.bf16.msra.mxu0 %v3218
    %3684 = vmatpush.bf16.msra.mxu0 %v3214
    %3685 = vmatpush.bf16.msra.mxu0 %v3210
    %3686 = vmatpush.bf16.msra.mxu0 %v3206
    %3687 = vmatpush.bf16.msra.mxu0 %v3202
    %3688 = vmatmul.bf16.gmra.mxu0 %v1943
    %v3689 = vpop.f32.mrf.mxu0
    %v3690 = vadd.f32 %v3676, %v3689
    %v3691 = vpop.f32.mrf.mxu0
    %v3692 = vadd.f32 %v3678, %v3691
    %3693 = vdwg.mxu0
    %3694 = vmatpush.bf16.msra.mxu0 %v2943
    %3695 = vmatpush.bf16.msra.mxu0 %v2939
    %3696 = vmatpush.bf16.msra.mxu0 %v2935
    %3697 = vmatpush.bf16.msra.mxu0 %v2931
    %3698 = vmatpush.bf16.msra.mxu0 %v2927
    %3699 = vmatpush.bf16.msra.mxu0 %v2923
    %3700 = vmatpush.bf16.msra.mxu0 %v2919
    %3701 = vmatpush.bf16.msra.mxu0 %v2915
    %3702 = vmatmul.bf16.gmra.mxu0 %v1934
    %v3703 = vpop.f32.mrf.mxu0
    %v3704 = vadd.f32 %v1927, %v3703
    %v3705 = vpop.f32.mrf.mxu0
    %v3706 = vadd.f32 %v1927, %v3705
    %3707 = vdwg.mxu0
    %3708 = vmatpush.bf16.msra.mxu0 %v2975
    %3709 = vmatpush.bf16.msra.mxu0 %v2971
    %3710 = vmatpush.bf16.msra.mxu0 %v2967
    %3711 = vmatpush.bf16.msra.mxu0 %v2963
    %3712 = vmatpush.bf16.msra.mxu0 %v2959
    %3713 = vmatpush.bf16.msra.mxu0 %v2955
    %3714 = vmatpush.bf16.msra.mxu0 %v2951
    %3715 = vmatpush.bf16.msra.mxu0 %v2947
    %3716 = vmatmul.bf16.gmra.mxu0 %v1935
    %v3717 = vpop.f32.mrf.mxu0
    %v3718 = vadd.f32 %v3704, %v3717
    %v3719 = vpop.f32.mrf.mxu0
    %v3720 = vadd.f32 %v3706, %v3719
    %3721 = vdwg.mxu0
    %3722 = vmatpush.bf16.msra.mxu0 %v3007
    %3723 = vmatpush.bf16.msra.mxu0 %v3003
    %3724 = vmatpush.bf16.msra.mxu0 %v2999
    %3725 = vmatpush.bf16.msra.mxu0 %v2995
    %3726 = vmatpush.bf16.msra.mxu0 %v2991
    %3727 = vmatpush.bf16.msra.mxu0 %v2987
    %3728 = vmatpush.bf16.msra.mxu0 %v2983
    %3729 = vmatpush.bf16.msra.mxu0 %v2979
    %3730 = vmatmul.bf16.gmra.mxu0 %v1936
    %v3731 = vpop.f32.mrf.mxu0
    %v3732 = vadd.f32 %v3718, %v3731
    %v3733 = vpop.f32.mrf.mxu0
    %v3734 = vadd.f32 %v3720, %v3733
    %3735 = vdwg.mxu0
    %3736 = vmatpush.bf16.msra.mxu0 %v3039
    %3737 = vmatpush.bf16.msra.mxu0 %v3035
    %3738 = vmatpush.bf16.msra.mxu0 %v3031
    %3739 = vmatpush.bf16.msra.mxu0 %v3027
    %3740 = vmatpush.bf16.msra.mxu0 %v3023
    %3741 = vmatpush.bf16.msra.mxu0 %v3019
    %3742 = vmatpush.bf16.msra.mxu0 %v3015
    %3743 = vmatpush.bf16.msra.mxu0 %v3011
    %3744 = vmatmul.bf16.gmra.mxu0 %v1937
    %v3745 = vpop.f32.mrf.mxu0
    %v3746 = vadd.f32 %v3732, %v3745
    %v3747 = vpop.f32.mrf.mxu0
    %v3748 = vadd.f32 %v3734, %v3747
    %3749 = vdwg.mxu0
    %3750 = vmatpush.bf16.msra.mxu0 %v3071
    %3751 = vmatpush.bf16.msra.mxu0 %v3067
    %3752 = vmatpush.bf16.msra.mxu0 %v3063
    %3753 = vmatpush.bf16.msra.mxu0 %v3059
    %3754 = vmatpush.bf16.msra.mxu0 %v3055
    %3755 = vmatpush.bf16.msra.mxu0 %v3051
    %3756 = vmatpush.bf16.msra.mxu0 %v3047
    %3757 = vmatpush.bf16.msra.mxu0 %v3043
    %3758 = vmatmul.bf16.gmra.mxu0 %v1938
    %v3759 = vpop.f32.mrf.mxu0
    %v3760 = vadd.f32 %v3746, %v3759
    %v3761 = vpop.f32.mrf.mxu0
    %v3762 = vadd.f32 %v3748, %v3761
    %3763 = vdwg.mxu0
    %3764 = vmatpush.bf16.msra.mxu0 %v3103
    %3765 = vmatpush.bf16.msra.mxu0 %v3099
    %3766 = vmatpush.bf16.msra.mxu0 %v3095
    %3767 = vmatpush.bf16.msra.mxu0 %v3091
    %3768 = vmatpush.bf16.msra.mxu0 %v3087
    %3769 = vmatpush.bf16.msra.mxu0 %v3083
    %3770 = vmatpush.bf16.msra.mxu0 %v3079
    %3771 = vmatpush.bf16.msra.mxu0 %v3075
    %3772 = vmatmul.bf16.gmra.mxu0 %v1939
    %v3773 = vpop.f32.mrf.mxu0
    %v3774 = vadd.f32 %v3760, %v3773
    %v3775 = vpop.f32.mrf.mxu0
    %v3776 = vadd.f32 %v3762, %v3775
    %3777 = vdwg.mxu0
    %3778 = vmatpush.bf16.msra.mxu0 %v3135
    %3779 = vmatpush.bf16.msra.mxu0 %v3131
    %3780 = vmatpush.bf16.msra.mxu0 %v3127
    %3781 = vmatpush.bf16.msra.mxu0 %v3123
    %3782 = vmatpush.bf16.msra.mxu0 %v3119
    %3783 = vmatpush.bf16.msra.mxu0 %v3115
    %3784 = vmatpush.bf16.msra.mxu0 %v3111
    %3785 = vmatpush.bf16.msra.mxu0 %v3107
    %3786 = vmatmul.bf16.gmra.mxu0 %v1940
    %v3787 = vpop.f32.mrf.mxu0
    %v3788 = vadd.f32 %v3774, %v3787
    %v3789 = vpop.f32.mrf.mxu0
    %v3790 = vadd.f32 %v3776, %v3789
    %3791 = vdwg.mxu0
    %3792 = vmatpush.bf16.msra.mxu0 %v3167
    %3793 = vmatpush.bf16.msra.mxu0 %v3163
    %3794 = vmatpush.bf16.msra.mxu0 %v3159
    %3795 = vmatpush.bf16.msra.mxu0 %v3155
    %3796 = vmatpush.bf16.msra.mxu0 %v3151
    %3797 = vmatpush.bf16.msra.mxu0 %v3147
    %3798 = vmatpush.bf16.msra.mxu0 %v3143
    %3799 = vmatpush.bf16.msra.mxu0 %v3139
    %3800 = vmatmul.bf16.gmra.mxu0 %v1941
    %v3801 = vpop.f32.mrf.mxu0
    %v3802 = vadd.f32 %v3788, %v3801
    %v3803 = vpop.f32.mrf.mxu0
    %v3804 = vadd.f32 %v3790, %v3803
    %3805 = vdwg.mxu0
    %3806 = vmatpush.bf16.msra.mxu0 %v3199
    %3807 = vmatpush.bf16.msra.mxu0 %v3195
    %3808 = vmatpush.bf16.msra.mxu0 %v3191
    %3809 = vmatpush.bf16.msra.mxu0 %v3187
    %3810 = vmatpush.bf16.msra.mxu0 %v3183
    %3811 = vmatpush.bf16.msra.mxu0 %v3179
    %3812 = vmatpush.bf16.msra.mxu0 %v3175
    %3813 = vmatpush.bf16.msra.mxu0 %v3171
    %3814 = vmatmul.bf16.gmra.mxu0 %v1942
    %v3815 = vpop.f32.mrf.mxu0
    %v3816 = vadd.f32 %v3802, %v3815
    %v3817 = vpop.f32.mrf.mxu0
    %v3818 = vadd.f32 %v3804, %v3817
    %3819 = vdwg.mxu0
    %3820 = vmatpush.bf16.msra.mxu0 %v3231
    %3821 = vmatpush.bf16.msra.mxu0 %v3227
    %3822 = vmatpush.bf16.msra.mxu0 %v3223
    %3823 = vmatpush.bf16.msra.mxu0 %v3219
    %3824 = vmatpush.bf16.msra.mxu0 %v3215
    %3825 = vmatpush.bf16.msra.mxu0 %v3211
    %3826 = vmatpush.bf16.msra.mxu0 %v3207
    %3827 = vmatpush.bf16.msra.mxu0 %v3203
    %3828 = vmatmul.bf16.gmra.mxu0 %v1943
    %v3829 = vpop.f32.mrf.mxu0
    %v3830 = vadd.f32 %v3816, %v3829
    %v3831 = vpop.f32.mrf.mxu0
    %v3832 = vadd.f32 %v3818, %v3831
    %3833 = vdwg.mxu0
    %3834 = vmatpush.bf16.msra.mxu0 %v2944
    %3835 = vmatpush.bf16.msra.mxu0 %v2940
    %3836 = vmatpush.bf16.msra.mxu0 %v2936
    %3837 = vmatpush.bf16.msra.mxu0 %v2932
    %3838 = vmatpush.bf16.msra.mxu0 %v2928
    %3839 = vmatpush.bf16.msra.mxu0 %v2924
    %3840 = vmatpush.bf16.msra.mxu0 %v2920
    %3841 = vmatpush.bf16.msra.mxu0 %v2916
    %3842 = vmatmul.bf16.gmra.mxu0 %v1934
    %v3843 = vpop.f32.mrf.mxu0
    %v3844 = vadd.f32 %v1928, %v3843
    %v3845 = vpop.f32.mrf.mxu0
    %v3846 = vadd.f32 %v1928, %v3845
    %3847 = vdwg.mxu0
    %3848 = vmatpush.bf16.msra.mxu0 %v2976
    %3849 = vmatpush.bf16.msra.mxu0 %v2972
    %3850 = vmatpush.bf16.msra.mxu0 %v2968
    %3851 = vmatpush.bf16.msra.mxu0 %v2964
    %3852 = vmatpush.bf16.msra.mxu0 %v2960
    %3853 = vmatpush.bf16.msra.mxu0 %v2956
    %3854 = vmatpush.bf16.msra.mxu0 %v2952
    %3855 = vmatpush.bf16.msra.mxu0 %v2948
    %3856 = vmatmul.bf16.gmra.mxu0 %v1935
    %v3857 = vpop.f32.mrf.mxu0
    %v3858 = vadd.f32 %v3844, %v3857
    %v3859 = vpop.f32.mrf.mxu0
    %v3860 = vadd.f32 %v3846, %v3859
    %3861 = vdwg.mxu0
    %3862 = vmatpush.bf16.msra.mxu0 %v3008
    %3863 = vmatpush.bf16.msra.mxu0 %v3004
    %3864 = vmatpush.bf16.msra.mxu0 %v3000
    %3865 = vmatpush.bf16.msra.mxu0 %v2996
    %3866 = vmatpush.bf16.msra.mxu0 %v2992
    %3867 = vmatpush.bf16.msra.mxu0 %v2988
    %3868 = vmatpush.bf16.msra.mxu0 %v2984
    %3869 = vmatpush.bf16.msra.mxu0 %v2980
    %3870 = vmatmul.bf16.gmra.mxu0 %v1936
    %v3871 = vpop.f32.mrf.mxu0
    %v3872 = vadd.f32 %v3858, %v3871
    %v3873 = vpop.f32.mrf.mxu0
    %v3874 = vadd.f32 %v3860, %v3873
    %3875 = vdwg.mxu0
    %3876 = vmatpush.bf16.msra.mxu0 %v3040
    %3877 = vmatpush.bf16.msra.mxu0 %v3036
    %3878 = vmatpush.bf16.msra.mxu0 %v3032
    %3879 = vmatpush.bf16.msra.mxu0 %v3028
    %3880 = vmatpush.bf16.msra.mxu0 %v3024
    %3881 = vmatpush.bf16.msra.mxu0 %v3020
    %3882 = vmatpush.bf16.msra.mxu0 %v3016
    %3883 = vmatpush.bf16.msra.mxu0 %v3012
    %3884 = vmatmul.bf16.gmra.mxu0 %v1937
    %v3885 = vpop.f32.mrf.mxu0
    %v3886 = vadd.f32 %v3872, %v3885
    %v3887 = vpop.f32.mrf.mxu0
    %v3888 = vadd.f32 %v3874, %v3887
    %3889 = vdwg.mxu0
    %3890 = vmatpush.bf16.msra.mxu0 %v3072
    %3891 = vmatpush.bf16.msra.mxu0 %v3068
    %3892 = vmatpush.bf16.msra.mxu0 %v3064
    %3893 = vmatpush.bf16.msra.mxu0 %v3060
    %3894 = vmatpush.bf16.msra.mxu0 %v3056
    %3895 = vmatpush.bf16.msra.mxu0 %v3052
    %3896 = vmatpush.bf16.msra.mxu0 %v3048
    %3897 = vmatpush.bf16.msra.mxu0 %v3044
    %3898 = vmatmul.bf16.gmra.mxu0 %v1938
    %v3899 = vpop.f32.mrf.mxu0
    %v3900 = vadd.f32 %v3886, %v3899
    %v3901 = vpop.f32.mrf.mxu0
    %v3902 = vadd.f32 %v3888, %v3901
    %3903 = vdwg.mxu0
    %3904 = vmatpush.bf16.msra.mxu0 %v3104
    %3905 = vmatpush.bf16.msra.mxu0 %v3100
    %3906 = vmatpush.bf16.msra.mxu0 %v3096
    %3907 = vmatpush.bf16.msra.mxu0 %v3092
    %3908 = vmatpush.bf16.msra.mxu0 %v3088
    %3909 = vmatpush.bf16.msra.mxu0 %v3084
    %3910 = vmatpush.bf16.msra.mxu0 %v3080
    %3911 = vmatpush.bf16.msra.mxu0 %v3076
    %3912 = vmatmul.bf16.gmra.mxu0 %v1939
    %v3913 = vpop.f32.mrf.mxu0
    %v3914 = vadd.f32 %v3900, %v3913
    %v3915 = vpop.f32.mrf.mxu0
    %v3916 = vadd.f32 %v3902, %v3915
    %3917 = vdwg.mxu0
    %3918 = vmatpush.bf16.msra.mxu0 %v3136
    %3919 = vmatpush.bf16.msra.mxu0 %v3132
    %3920 = vmatpush.bf16.msra.mxu0 %v3128
    %3921 = vmatpush.bf16.msra.mxu0 %v3124
    %3922 = vmatpush.bf16.msra.mxu0 %v3120
    %3923 = vmatpush.bf16.msra.mxu0 %v3116
    %3924 = vmatpush.bf16.msra.mxu0 %v3112
    %3925 = vmatpush.bf16.msra.mxu0 %v3108
    %3926 = vmatmul.bf16.gmra.mxu0 %v1940
    %v3927 = vpop.f32.mrf.mxu0
    %v3928 = vadd.f32 %v3914, %v3927
    %v3929 = vpop.f32.mrf.mxu0
    %v3930 = vadd.f32 %v3916, %v3929
    %3931 = vdwg.mxu0
    %3932 = vmatpush.bf16.msra.mxu0 %v3168
    %3933 = vmatpush.bf16.msra.mxu0 %v3164
    %3934 = vmatpush.bf16.msra.mxu0 %v3160
    %3935 = vmatpush.bf16.msra.mxu0 %v3156
    %3936 = vmatpush.bf16.msra.mxu0 %v3152
    %3937 = vmatpush.bf16.msra.mxu0 %v3148
    %3938 = vmatpush.bf16.msra.mxu0 %v3144
    %3939 = vmatpush.bf16.msra.mxu0 %v3140
    %3940 = vmatmul.bf16.gmra.mxu0 %v1941
    %v3941 = vpop.f32.mrf.mxu0
    %v3942 = vadd.f32 %v3928, %v3941
    %v3943 = vpop.f32.mrf.mxu0
    %v3944 = vadd.f32 %v3930, %v3943
    %3945 = vdwg.mxu0
    %3946 = vmatpush.bf16.msra.mxu0 %v3200
    %3947 = vmatpush.bf16.msra.mxu0 %v3196
    %3948 = vmatpush.bf16.msra.mxu0 %v3192
    %3949 = vmatpush.bf16.msra.mxu0 %v3188
    %3950 = vmatpush.bf16.msra.mxu0 %v3184
    %3951 = vmatpush.bf16.msra.mxu0 %v3180
    %3952 = vmatpush.bf16.msra.mxu0 %v3176
    %3953 = vmatpush.bf16.msra.mxu0 %v3172
    %3954 = vmatmul.bf16.gmra.mxu0 %v1942
    %v3955 = vpop.f32.mrf.mxu0
    %v3956 = vadd.f32 %v3942, %v3955
    %v3957 = vpop.f32.mrf.mxu0
    %v3958 = vadd.f32 %v3944, %v3957
    %3959 = vdwg.mxu0
    %3960 = vmatpush.bf16.msra.mxu0 %v3232
    %3961 = vmatpush.bf16.msra.mxu0 %v3228
    %3962 = vmatpush.bf16.msra.mxu0 %v3224
    %3963 = vmatpush.bf16.msra.mxu0 %v3220
    %3964 = vmatpush.bf16.msra.mxu0 %v3216
    %3965 = vmatpush.bf16.msra.mxu0 %v3212
    %3966 = vmatpush.bf16.msra.mxu0 %v3208
    %3967 = vmatpush.bf16.msra.mxu0 %v3204
    %3968 = vmatmul.bf16.gmra.mxu0 %v1943
    %v3969 = vpop.f32.mrf.mxu0
    %v3970 = vadd.f32 %v3956, %v3969
    %v3971 = vpop.f32.mrf.mxu0
    %v3972 = vadd.f32 %v3958, %v3971
    %3973 = vdwg.mxu0
    %3974 = vmatpush.bf16.msra.mxu0 %v2945
    %3975 = vmatpush.bf16.msra.mxu0 %v2941
    %3976 = vmatpush.bf16.msra.mxu0 %v2937
    %3977 = vmatpush.bf16.msra.mxu0 %v2933
    %3978 = vmatpush.bf16.msra.mxu0 %v2929
    %3979 = vmatpush.bf16.msra.mxu0 %v2925
    %3980 = vmatpush.bf16.msra.mxu0 %v2921
    %3981 = vmatpush.bf16.msra.mxu0 %v2917
    %3982 = vmatmul.bf16.gmra.mxu0 %v1934
    %v3983 = vpop.f32.mrf.mxu0
    %v3984 = vadd.f32 %v1929, %v3983
    %v3985 = vpop.f32.mrf.mxu0
    %v3986 = vadd.f32 %v1929, %v3985
    %3987 = vdwg.mxu0
    %3988 = vmatpush.bf16.msra.mxu0 %v2977
    %3989 = vmatpush.bf16.msra.mxu0 %v2973
    %3990 = vmatpush.bf16.msra.mxu0 %v2969
    %3991 = vmatpush.bf16.msra.mxu0 %v2965
    %3992 = vmatpush.bf16.msra.mxu0 %v2961
    %3993 = vmatpush.bf16.msra.mxu0 %v2957
    %3994 = vmatpush.bf16.msra.mxu0 %v2953
    %3995 = vmatpush.bf16.msra.mxu0 %v2949
    %3996 = vmatmul.bf16.gmra.mxu0 %v1935
    %v3997 = vpop.f32.mrf.mxu0
    %v3998 = vadd.f32 %v3984, %v3997
    %v3999 = vpop.f32.mrf.mxu0
    %v4000 = vadd.f32 %v3986, %v3999
    %4001 = vdwg.mxu0
    %4002 = vmatpush.bf16.msra.mxu0 %v3009
    %4003 = vmatpush.bf16.msra.mxu0 %v3005
    %4004 = vmatpush.bf16.msra.mxu0 %v3001
    %4005 = vmatpush.bf16.msra.mxu0 %v2997
    %4006 = vmatpush.bf16.msra.mxu0 %v2993
    %4007 = vmatpush.bf16.msra.mxu0 %v2989
    %4008 = vmatpush.bf16.msra.mxu0 %v2985
    %4009 = vmatpush.bf16.msra.mxu0 %v2981
    %4010 = vmatmul.bf16.gmra.mxu0 %v1936
    %v4011 = vpop.f32.mrf.mxu0
    %v4012 = vadd.f32 %v3998, %v4011
    %v4013 = vpop.f32.mrf.mxu0
    %v4014 = vadd.f32 %v4000, %v4013
    %4015 = vdwg.mxu0
    %4016 = vmatpush.bf16.msra.mxu0 %v3041
    %4017 = vmatpush.bf16.msra.mxu0 %v3037
    %4018 = vmatpush.bf16.msra.mxu0 %v3033
    %4019 = vmatpush.bf16.msra.mxu0 %v3029
    %4020 = vmatpush.bf16.msra.mxu0 %v3025
    %4021 = vmatpush.bf16.msra.mxu0 %v3021
    %4022 = vmatpush.bf16.msra.mxu0 %v3017
    %4023 = vmatpush.bf16.msra.mxu0 %v3013
    %4024 = vmatmul.bf16.gmra.mxu0 %v1937
    %v4025 = vpop.f32.mrf.mxu0
    %v4026 = vadd.f32 %v4012, %v4025
    %v4027 = vpop.f32.mrf.mxu0
    %v4028 = vadd.f32 %v4014, %v4027
    %4029 = vdwg.mxu0
    %4030 = vmatpush.bf16.msra.mxu0 %v3073
    %4031 = vmatpush.bf16.msra.mxu0 %v3069
    %4032 = vmatpush.bf16.msra.mxu0 %v3065
    %4033 = vmatpush.bf16.msra.mxu0 %v3061
    %4034 = vmatpush.bf16.msra.mxu0 %v3057
    %4035 = vmatpush.bf16.msra.mxu0 %v3053
    %4036 = vmatpush.bf16.msra.mxu0 %v3049
    %4037 = vmatpush.bf16.msra.mxu0 %v3045
    %4038 = vmatmul.bf16.gmra.mxu0 %v1938
    %v4039 = vpop.f32.mrf.mxu0
    %v4040 = vadd.f32 %v4026, %v4039
    %v4041 = vpop.f32.mrf.mxu0
    %v4042 = vadd.f32 %v4028, %v4041
    %4043 = vdwg.mxu0
    %4044 = vmatpush.bf16.msra.mxu0 %v3105
    %4045 = vmatpush.bf16.msra.mxu0 %v3101
    %4046 = vmatpush.bf16.msra.mxu0 %v3097
    %4047 = vmatpush.bf16.msra.mxu0 %v3093
    %4048 = vmatpush.bf16.msra.mxu0 %v3089
    %4049 = vmatpush.bf16.msra.mxu0 %v3085
    %4050 = vmatpush.bf16.msra.mxu0 %v3081
    %4051 = vmatpush.bf16.msra.mxu0 %v3077
    %4052 = vmatmul.bf16.gmra.mxu0 %v1939
    %v4053 = vpop.f32.mrf.mxu0
    %v4054 = vadd.f32 %v4040, %v4053
    %v4055 = vpop.f32.mrf.mxu0
    %v4056 = vadd.f32 %v4042, %v4055
    %4057 = vdwg.mxu0
    %4058 = vmatpush.bf16.msra.mxu0 %v3137
    %4059 = vmatpush.bf16.msra.mxu0 %v3133
    %4060 = vmatpush.bf16.msra.mxu0 %v3129
    %4061 = vmatpush.bf16.msra.mxu0 %v3125
    %4062 = vmatpush.bf16.msra.mxu0 %v3121
    %4063 = vmatpush.bf16.msra.mxu0 %v3117
    %4064 = vmatpush.bf16.msra.mxu0 %v3113
    %4065 = vmatpush.bf16.msra.mxu0 %v3109
    %4066 = vmatmul.bf16.gmra.mxu0 %v1940
    %v4067 = vpop.f32.mrf.mxu0
    %v4068 = vadd.f32 %v4054, %v4067
    %v4069 = vpop.f32.mrf.mxu0
    %v4070 = vadd.f32 %v4056, %v4069
    %4071 = vdwg.mxu0
    %4072 = vmatpush.bf16.msra.mxu0 %v3169
    %4073 = vmatpush.bf16.msra.mxu0 %v3165
    %4074 = vmatpush.bf16.msra.mxu0 %v3161
    %4075 = vmatpush.bf16.msra.mxu0 %v3157
    %4076 = vmatpush.bf16.msra.mxu0 %v3153
    %4077 = vmatpush.bf16.msra.mxu0 %v3149
    %4078 = vmatpush.bf16.msra.mxu0 %v3145
    %4079 = vmatpush.bf16.msra.mxu0 %v3141
    %4080 = vmatmul.bf16.gmra.mxu0 %v1941
    %v4081 = vpop.f32.mrf.mxu0
    %v4082 = vadd.f32 %v4068, %v4081
    %v4083 = vpop.f32.mrf.mxu0
    %v4084 = vadd.f32 %v4070, %v4083
    %4085 = vdwg.mxu0
    %4086 = vmatpush.bf16.msra.mxu0 %v3201
    %4087 = vmatpush.bf16.msra.mxu0 %v3197
    %4088 = vmatpush.bf16.msra.mxu0 %v3193
    %4089 = vmatpush.bf16.msra.mxu0 %v3189
    %4090 = vmatpush.bf16.msra.mxu0 %v3185
    %4091 = vmatpush.bf16.msra.mxu0 %v3181
    %4092 = vmatpush.bf16.msra.mxu0 %v3177
    %4093 = vmatpush.bf16.msra.mxu0 %v3173
    %4094 = vmatmul.bf16.gmra.mxu0 %v1942
    %v4095 = vpop.f32.mrf.mxu0
    %v4096 = vadd.f32 %v4082, %v4095
    %v4097 = vpop.f32.mrf.mxu0
    %v4098 = vadd.f32 %v4084, %v4097
    %4099 = vdwg.mxu0
    %4100 = vmatpush.bf16.msra.mxu0 %v3233
    %4101 = vmatpush.bf16.msra.mxu0 %v3229
    %4102 = vmatpush.bf16.msra.mxu0 %v3225
    %4103 = vmatpush.bf16.msra.mxu0 %v3221
    %4104 = vmatpush.bf16.msra.mxu0 %v3217
    %4105 = vmatpush.bf16.msra.mxu0 %v3213
    %4106 = vmatpush.bf16.msra.mxu0 %v3209
    %4107 = vmatpush.bf16.msra.mxu0 %v3205
    %4108 = vmatmul.bf16.gmra.mxu0 %v1943
    %v4109 = vpop.f32.mrf.mxu0
    %v4110 = vadd.f32 %v4096, %v4109
    %v4111 = vpop.f32.mrf.mxu0
    %v4112 = vadd.f32 %v4098, %v4111
    %4113 = vdwg.mxu0
    %v4114 = vmax.f32 %v3690, 0.0
    %v4115 = vmax.f32 %v3830, 0.0
    %v4116 = vmax.f32 %v3970, 0.0
    %v4117 = vmax.f32 %v4110, 0.0
    %v4118 = vmax.f32 %v3692, 0.0
    %v4119 = vmax.f32 %v3832, 0.0
    %v4120 = vmax.f32 %v3972, 0.0
    %v4121 = vmax.f32 %v4112, 0.0
    %v4122 = vmax.f32 %v4114, %v4116
    %v4123 = vmax.f32 %v4115, %v4117
    %v4124 = vmax.f32 %v4118, %v4120
    %v4125 = vmax.f32 %v4119, %v4121
    %v4130 = vrot.slane %v4123, 6
    %v4131 = vrot.slane %v4125, 6
    %v4132 = vsel %vm811, %v4122, %v4130
    %v4133 = vsel %vm813, %v4122, %v4130
    %v4134 = vrot.slane %v4133, 2
    %v4135 = vsel %vm816, %v4122, %v4130
    %v4136 = vrot.slane %v4135, 4
    %v4137 = vsel %vm552, %v4130, %v4122
    %v4138 = vrot.slane %v4137, 6
    %v4139 = vsel %vm811, %v4124, %v4131
    %v4140 = vsel %vm813, %v4124, %v4131
    %v4141 = vrot.slane %v4140, 2
    %v4142 = vsel %vm816, %v4124, %v4131
    %v4143 = vrot.slane %v4142, 4
    %v4144 = vsel %vm552, %v4131, %v4124
    %v4145 = vrot.slane %v4144, 6
    %4146 = vst [vmem:[#allocation1] ss:$4 sm:$0xff] %v4132
    %v4147 = vld.sshfl [vmem:[#allocation1] sm:$0xff pattern:$0x73625140]
    %v4148 = vld.sshfl [vmem:[#allocation1 + $0x8] sm:$0xff pattern:$0x73625140]
    %s4149 = scalar_lea.vmem [#allocation1], 32
    %4150 = vst [vmem:[%s4149] ss:$4 sm:$0xff] %v4134
    %v4151 = vld.sshfl [vmem:[#allocation1 + $0x20] sm:$0xff pattern:$0x73625140]
    %v4152 = vld.sshfl [vmem:[#allocation1 + $0x28] sm:$0xff pattern:$0x73625140]
    %4153 = vst [vmem:[#allocation1] ss:$4 sm:$0xff] %v4136
    %v4154 = vld.sshfl [vmem:[#allocation1] sm:$0xff pattern:$0x73625140]
    %v4155 = vld.sshfl [vmem:[#allocation1 + $0x8] sm:$0xff pattern:$0x73625140]
    %4156 = vst [vmem:[%s4149] ss:$4 sm:$0xff] %v4138
    %v4157 = vld.sshfl [vmem:[#allocation1 + $0x20] sm:$0xff pattern:$0x73625140]
    %v4158 = vld.sshfl [vmem:[#allocation1 + $0x28] sm:$0xff pattern:$0x73625140]
    %4159 = vst [vmem:[#allocation1] ss:$4 sm:$0xff] %v4139
    %v4160 = vld.sshfl [vmem:[#allocation1] sm:$0xff pattern:$0x73625140]
    %v4161 = vld.sshfl [vmem:[#allocation1 + $0x8] sm:$0xff pattern:$0x73625140]
    %4162 = vst [vmem:[%s4149] ss:$4 sm:$0xff] %v4141
    %v4163 = vld.sshfl [vmem:[#allocation1 + $0x20] sm:$0xff pattern:$0x73625140]
    %v4164 = vld.sshfl [vmem:[#allocation1 + $0x28] sm:$0xff pattern:$0x73625140]
    %4165 = vst [vmem:[#allocation1] ss:$4 sm:$0xff] %v4143
    %v4166 = vld.sshfl [vmem:[#allocation1] sm:$0xff pattern:$0x73625140]
    %v4167 = vld.sshfl [vmem:[#allocation1 + $0x8] sm:$0xff pattern:$0x73625140]
    %4168 = vst [vmem:[%s4149] ss:$4 sm:$0xff] %v4145
    %v4169 = vld.sshfl [vmem:[#allocation1 + $0x20] sm:$0xff pattern:$0x73625140]
    %v4170 = vld.sshfl [vmem:[#allocation1 + $0x28] sm:$0xff pattern:$0x73625140]
    %v4187 = vsel %vm811, %v4147, -inf
    %v4188 = vrot.slane %v4187, 4
    %v4189 = vmax.f32 %v4187, %v4188
    %v4190 = vrot.slane %v4189, 2
    %v4191 = vmax.f32 %v4189, %v4190
    %v4192 = vrot.slane %v4191, 1
    %v4193 = vmax.f32 %v4191, %v4192
    %v4194 = vsel %vm811, %v4148, -inf
    %v4195 = vrot.slane %v4194, 4
    %v4196 = vmax.f32 %v4194, %v4195
    %v4197 = vrot.slane %v4196, 2
    %v4198 = vmax.f32 %v4196, %v4197
    %v4199 = vrot.slane %v4198, 1
    %v4200 = vmax.f32 %v4198, %v4199
    %v4201 = vsel %vm811, %v4151, -inf
    %v4202 = vrot.slane %v4201, 4
    %v4203 = vmax.f32 %v4201, %v4202
    %v4204 = vrot.slane %v4203, 2
    %v4205 = vmax.f32 %v4203, %v4204
    %v4206 = vrot.slane %v4205, 1
    %v4207 = vmax.f32 %v4205, %v4206
    %v4208 = vsel %vm811, %v4152, -inf
    %v4209 = vrot.slane %v4208, 4
    %v4210 = vmax.f32 %v4208, %v4209
    %v4211 = vrot.slane %v4210, 2
    %v4212 = vmax.f32 %v4210, %v4211
    %v4213 = vrot.slane %v4212, 1
    %v4214 = vmax.f32 %v4212, %v4213
    %v4215 = vsel %vm811, %v4154, -inf
    %v4216 = vrot.slane %v4215, 4
    %v4217 = vmax.f32 %v4215, %v4216
    %v4218 = vrot.slane %v4217, 2
    %v4219 = vmax.f32 %v4217, %v4218
    %v4220 = vrot.slane %v4219, 1
    %v4221 = vmax.f32 %v4219, %v4220
    %v4222 = vsel %vm811, %v4155, -inf
    %v4223 = vrot.slane %v4222, 4
    %v4224 = vmax.f32 %v4222, %v4223
    %v4225 = vrot.slane %v4224, 2
    %v4226 = vmax.f32 %v4224, %v4225
    %v4227 = vrot.slane %v4226, 1
    %v4228 = vmax.f32 %v4226, %v4227
    %v4229 = vsel %vm811, %v4157, -inf
    %v4230 = vrot.slane %v4229, 4
    %v4231 = vmax.f32 %v4229, %v4230
    %v4232 = vrot.slane %v4231, 2
    %v4233 = vmax.f32 %v4231, %v4232
    %v4234 = vrot.slane %v4233, 1
    %v4235 = vmax.f32 %v4233, %v4234
    %v4236 = vsel %vm811, %v4158, -inf
    %v4237 = vrot.slane %v4236, 4
    %v4238 = vmax.f32 %v4236, %v4237
    %v4239 = vrot.slane %v4238, 2
    %v4240 = vmax.f32 %v4238, %v4239
    %v4241 = vrot.slane %v4240, 1
    %v4242 = vmax.f32 %v4240, %v4241
    %v4243 = vsel %vm811, %v4160, -inf
    %v4244 = vrot.slane %v4243, 4
    %v4245 = vmax.f32 %v4243, %v4244
    %v4246 = vrot.slane %v4245, 2
    %v4247 = vmax.f32 %v4245, %v4246
    %v4248 = vrot.slane %v4247, 1
    %v4249 = vmax.f32 %v4247, %v4248
    %v4250 = vsel %vm811, %v4161, -inf
    %v4251 = vrot.slane %v4250, 4
    %v4252 = vmax.f32 %v4250, %v4251
    %v4253 = vrot.slane %v4252, 2
    %v4254 = vmax.f32 %v4252, %v4253
    %v4255 = vrot.slane %v4254, 1
    %v4256 = vmax.f32 %v4254, %v4255
    %v4257 = vsel %vm811, %v4163, -inf
    %v4258 = vrot.slane %v4257, 4
    %v4259 = vmax.f32 %v4257, %v4258
    %v4260 = vrot.slane %v4259, 2
    %v4261 = vmax.f32 %v4259, %v4260
    %v4262 = vrot.slane %v4261, 1
    %v4263 = vmax.f32 %v4261, %v4262
    %v4264 = vsel %vm811, %v4164, -inf
    %v4265 = vrot.slane %v4264, 4
    %v4266 = vmax.f32 %v4264, %v4265
    %v4267 = vrot.slane %v4266, 2
    %v4268 = vmax.f32 %v4266, %v4267
    %v4269 = vrot.slane %v4268, 1
    %v4270 = vmax.f32 %v4268, %v4269
    %v4271 = vsel %vm811, %v4166, -inf
    %v4272 = vrot.slane %v4271, 4
    %v4273 = vmax.f32 %v4271, %v4272
    %v4274 = vrot.slane %v4273, 2
    %v4275 = vmax.f32 %v4273, %v4274
    %v4276 = vrot.slane %v4275, 1
    %v4277 = vmax.f32 %v4275, %v4276
    %v4278 = vsel %vm811, %v4167, -inf
    %v4279 = vrot.slane %v4278, 4
    %v4280 = vmax.f32 %v4278, %v4279
    %v4281 = vrot.slane %v4280, 2
    %v4282 = vmax.f32 %v4280, %v4281
    %v4283 = vrot.slane %v4282, 1
    %v4284 = vmax.f32 %v4282, %v4283
    %v4285 = vsel %vm811, %v4169, -inf
    %v4286 = vrot.slane %v4285, 4
    %v4287 = vmax.f32 %v4285, %v4286
    %v4288 = vrot.slane %v4287, 2
    %v4289 = vmax.f32 %v4287, %v4288
    %v4290 = vrot.slane %v4289, 1
    %v4291 = vmax.f32 %v4289, %v4290
    %v4292 = vsel %vm811, %v4170, -inf
    %v4293 = vrot.slane %v4292, 4
    %v4294 = vmax.f32 %v4292, %v4293
    %v4295 = vrot.slane %v4294, 2
    %v4296 = vmax.f32 %v4294, %v4295
    %v4297 = vrot.slane %v4296, 1
    %v4298 = vmax.f32 %v4296, %v4297
    %v4299 = vpack.c.bf16 %v4200, %v4193
    %v4300 = vpack.c.bf16 %v4214, %v4207
    %v4301 = vpack.c.bf16 %v4228, %v4221
    %v4302 = vpack.c.bf16 %v4242, %v4235
    %v4303 = vpack.c.bf16 %v4256, %v4249
    %v4304 = vpack.c.bf16 %v4270, %v4263
    %v4305 = vpack.c.bf16 %v4284, %v4277
    %v4306 = vpack.c.bf16 %v4298, %v4291
    %v4315 = vunpack.c.l.b16 %v4299
    %v4316 = vunpack.c.h.b16 %v4299
    %v4317 = vunpack.c.l.b16 %v4300
    %v4318 = vunpack.c.h.b16 %v4300
    %v4319 = vunpack.c.l.b16 %v4301
    %v4320 = vunpack.c.h.b16 %v4301
    %v4321 = vunpack.c.l.b16 %v4302
    %v4322 = vunpack.c.h.b16 %v4302
    %v4323 = vunpack.c.l.b16 %v4303
    %v4324 = vunpack.c.h.b16 %v4303
    %v4325 = vunpack.c.l.b16 %v4304
    %v4326 = vunpack.c.h.b16 %v4304
    %v4327 = vunpack.c.l.b16 %v4305
    %v4328 = vunpack.c.h.b16 %v4305
    %v4329 = vunpack.c.l.b16 %v4306
    %v4330 = vunpack.c.h.b16 %v4306
    %v4331 = vsel %vm1417, %v4317, %v4315
    %v4332 = vsel %vm1419, %v4319, %v4331
    %v4333 = vsel %vm1421, %v4321, %v4332
    %v4334 = vsel %vm1417, %v4318, %v4316
    %v4335 = vsel %vm1419, %v4320, %v4334
    %v4336 = vsel %vm1421, %v4322, %v4335
    %v4337 = vsel %vm1417, %v4325, %v4323
    %v4338 = vsel %vm1419, %v4327, %v4337
    %v4339 = vsel %vm1421, %v4329, %v4338
    %v4340 = vsel %vm1417, %v4326, %v4324
    %v4341 = vsel %vm1419, %v4328, %v4340
    %v4342 = vsel %vm1421, %v4330, %v4341
    %v4343 = vpack.c.b16 %v4336, %v4333
    %v4344 = vpack.c.b16 %v4342, %v4339
    %v4348 = vunpack.c.l.s4 1934713408
    %v4349 = vunpack.c.0.s8 %v4348
    %v4350 = vperm.slane %v4343, %v4349
    %v4351 = vrot.slane %v4343, 4
    %vm4352 = vcmask 1047556
    %v4353 = vsel %vm4352, 0, %v4351
    %v4355 = vunpack.c.l.s4 1934713408
    %v4356 = vunpack.c.0.s8 %v4355
    %v4357 = vperm.slane %v4353, %v4356
    %v4358 = vrot.slane %v4357, 4
    %v4359 = vsel %vm4352, %v4358, %v4350
    %v4360 = vrot.slane %v4350, 4
    %v4361 = vsel %vm4352, %v4357, %v4360
    %v4363 = vunpack.c.l.s4 1934713408
    %v4364 = vunpack.c.0.s8 %v4363
    %v4365 = vperm.slane %v4344, %v4364
    %v4366 = vrot.slane %v4344, 4
    %v4367 = vsel %vm4352, 0, %v4366
    %v4369 = vunpack.c.l.s4 1934713408
    %v4370 = vunpack.c.0.s8 %v4369
    %v4371 = vperm.slane %v4367, %v4370
    %v4372 = vrot.slane %v4371, 4
    %v4373 = vsel %vm4352, %v4372, %v4365
    %v4374 = vrot.slane %v4365, 4
    %v4375 = vsel %vm4352, %v4371, %v4374
    %v4378 = vpack.i.b16 %v4373, %v4359
    %v4379 = vshrl.u32 %v4359, 16
    %v4380 = vshrl.u32 %v4373, 16
    %v4381 = vpack.i.b16 %v4380, %v4379
    %v4384 = vpack.i.b16 %v4375, %v4361
    %v4385 = vshrl.u32 %v4361, 16
    %v4386 = vshrl.u32 %v4375, 16
    %v4387 = vpack.i.b16 %v4386, %v4385
    %v4388 = vunpack.c.l.b16 %v4378
    %v4389 = vunpack.c.h.b16 %v4378
    %v4390 = vpack.c.b16 %v4388, %v4388
    %v4391 = vpack.c.b16 %v4389, %v4389
    %v4394 = vunpack.c.l.b16 %v4381
    %v4395 = vunpack.c.h.b16 %v4381
    %v4396 = vpack.c.b16 %v4394, %v4394
    %v4397 = vpack.c.b16 %v4395, %v4395
    %v4400 = vunpack.c.l.b16 %v4384
    %v4401 = vunpack.c.h.b16 %v4384
    %v4402 = vpack.c.b16 %v4400, %v4400
    %v4403 = vpack.c.b16 %v4401, %v4401
    %v4406 = vunpack.c.l.b16 %v4387
    %v4407 = vunpack.c.h.b16 %v4387
    %v4408 = vpack.c.b16 %v4406, %v4406
    %v4409 = vpack.c.b16 %v4407, %v4407
    %v4412 = vld [vmem:[#allocation10] sm:$0xff]
    %v4413 = vld [vmem:[#allocation10 + $0x8] sm:$0xff]
    %v4414 = vld [vmem:[#allocation10 + $0x10] sm:$0xff]
    %v4415 = vld [vmem:[#allocation10 + $0x18] sm:$0xff]
    %v4416 = vld [vmem:[#allocation10 + $0x20] sm:$0xff]
    %v4417 = vld [vmem:[#allocation10 + $0x28] sm:$0xff]
    %v4418 = vld [vmem:[#allocation10 + $0x30] sm:$0xff]
    %v4419 = vld [vmem:[#allocation10 + $0x38] sm:$0xff]
    %v4420 = vld [vmem:[#allocation10 + $0x40] sm:$0xff]
    %v4421 = vld [vmem:[#allocation10 + $0x48] sm:$0xff]
    %v4422 = vld [vmem:[#allocation10 + $0x50] sm:$0xff]
    %v4423 = vld [vmem:[#allocation10 + $0x58] sm:$0xff]
    %v4424 = vld [vmem:[#allocation10 + $0x60] sm:$0xff]
    %v4425 = vld [vmem:[#allocation10 + $0x68] sm:$0xff]
    %v4426 = vld [vmem:[#allocation10 + $0x70] sm:$0xff]
    %v4427 = vld [vmem:[#allocation10 + $0x78] sm:$0xff]
    %v4428 = vld [vmem:[#allocation10 + $0x80] sm:$0xff]
    %v4429 = vld [vmem:[#allocation10 + $0x88] sm:$0xff]
    %v4430 = vld [vmem:[#allocation10 + $0x90] sm:$0xff]
    %v4431 = vld [vmem:[#allocation10 + $0x98] sm:$0xff]
    %v4432 = vld [vmem:[#allocation10 + $0xa0] sm:$0xff]
    %v4433 = vld [vmem:[#allocation10 + $0xa8] sm:$0xff]
    %v4434 = vld [vmem:[#allocation10 + $0xb0] sm:$0xff]
    %v4435 = vld [vmem:[#allocation10 + $0xb8] sm:$0xff]
    %v4436 = vld [vmem:[#allocation10 + $0xc0] sm:$0xff]
    %v4437 = vld [vmem:[#allocation10 + $0xc8] sm:$0xff]
    %v4438 = vld [vmem:[#allocation10 + $0xd0] sm:$0xff]
    %v4439 = vld [vmem:[#allocation10 + $0xd8] sm:$0xff]
    %v4440 = vld [vmem:[#allocation10 + $0xe0] sm:$0xff]
    %v4441 = vld [vmem:[#allocation10 + $0xe8] sm:$0xff]
    %v4442 = vld [vmem:[#allocation10 + $0xf0] sm:$0xff]
    %v4443 = vld [vmem:[#allocation10 + $0xf8] sm:$0xff]
    %v4444 = vld [vmem:[#allocation10 + $0x100] sm:$0xff]
    %v4445 = vld [vmem:[#allocation10 + $0x108] sm:$0xff]
    %v4446 = vld [vmem:[#allocation10 + $0x110] sm:$0xff]
    %v4447 = vld [vmem:[#allocation10 + $0x118] sm:$0xff]
    %v4448 = vld [vmem:[#allocation10 + $0x120] sm:$0xff]
    %v4449 = vld [vmem:[#allocation10 + $0x128] sm:$0xff]
    %v4450 = vld [vmem:[#allocation10 + $0x130] sm:$0xff]
    %v4451 = vld [vmem:[#allocation10 + $0x138] sm:$0xff]
    %v4452 = vld [vmem:[#allocation10 + $0x140] sm:$0xff]
    %v4453 = vld [vmem:[#allocation10 + $0x148] sm:$0xff]
    %v4454 = vld [vmem:[#allocation10 + $0x150] sm:$0xff]
    %v4455 = vld [vmem:[#allocation10 + $0x158] sm:$0xff]
    %v4456 = vld [vmem:[#allocation10 + $0x160] sm:$0xff]
    %v4457 = vld [vmem:[#allocation10 + $0x168] sm:$0xff]
    %v4458 = vld [vmem:[#allocation10 + $0x170] sm:$0xff]
    %v4459 = vld [vmem:[#allocation10 + $0x178] sm:$0xff]
    %v4460 = vld [vmem:[#allocation10 + $0x180] sm:$0xff]
    %v4461 = vld [vmem:[#allocation10 + $0x188] sm:$0xff]
    %v4462 = vld [vmem:[#allocation10 + $0x190] sm:$0xff]
    %v4463 = vld [vmem:[#allocation10 + $0x198] sm:$0xff]
    %v4464 = vld [vmem:[#allocation10 + $0x1a0] sm:$0xff]
    %v4465 = vld [vmem:[#allocation10 + $0x1a8] sm:$0xff]
    %v4466 = vld [vmem:[#allocation10 + $0x1b0] sm:$0xff]
    %v4467 = vld [vmem:[#allocation10 + $0x1b8] sm:$0xff]
    %v4468 = vld [vmem:[#allocation10 + $0x1c0] sm:$0xff]
    %v4469 = vld [vmem:[#allocation10 + $0x1c8] sm:$0xff]
    %v4470 = vld [vmem:[#allocation10 + $0x1d0] sm:$0xff]
    %v4471 = vld [vmem:[#allocation10 + $0x1d8] sm:$0xff]
    %v4472 = vld [vmem:[#allocation10 + $0x1e0] sm:$0xff]
    %v4473 = vld [vmem:[#allocation10 + $0x1e8] sm:$0xff]
    %v4474 = vld [vmem:[#allocation10 + $0x1f0] sm:$0xff]
    %v4475 = vld [vmem:[#allocation10 + $0x1f8] sm:$0xff]
    %v4476 = vld [vmem:[#allocation10 + $0x200] sm:$0xff]
    %v4477 = vld [vmem:[#allocation10 + $0x208] sm:$0xff]
    %v4478 = vld [vmem:[#allocation10 + $0x210] sm:$0xff]
    %v4479 = vld [vmem:[#allocation10 + $0x218] sm:$0xff]
    %v4480 = vld [vmem:[#allocation10 + $0x220] sm:$0xff]
    %v4481 = vld [vmem:[#allocation10 + $0x228] sm:$0xff]
    %v4482 = vld [vmem:[#allocation10 + $0x230] sm:$0xff]
    %v4483 = vld [vmem:[#allocation10 + $0x238] sm:$0xff]
    %v4484 = vld [vmem:[#allocation10 + $0x240] sm:$0xff]
    %v4485 = vld [vmem:[#allocation10 + $0x248] sm:$0xff]
    %v4486 = vld [vmem:[#allocation10 + $0x250] sm:$0xff]
    %v4487 = vld [vmem:[#allocation10 + $0x258] sm:$0xff]
    %v4488 = vld [vmem:[#allocation10 + $0x260] sm:$0xff]
    %v4489 = vld [vmem:[#allocation10 + $0x268] sm:$0xff]
    %v4490 = vld [vmem:[#allocation10 + $0x270] sm:$0xff]
    %v4491 = vld [vmem:[#allocation10 + $0x278] sm:$0xff]
    %v4492 = vld [vmem:[#allocation10 + $0x280] sm:$0xff]
    %v4493 = vld [vmem:[#allocation10 + $0x288] sm:$0xff]
    %v4494 = vld [vmem:[#allocation10 + $0x290] sm:$0xff]
    %v4495 = vld [vmem:[#allocation10 + $0x298] sm:$0xff]
    %v4496 = vld [vmem:[#allocation10 + $0x2a0] sm:$0xff]
    %v4497 = vld [vmem:[#allocation10 + $0x2a8] sm:$0xff]
    %v4498 = vld [vmem:[#allocation10 + $0x2b0] sm:$0xff]
    %v4499 = vld [vmem:[#allocation10 + $0x2b8] sm:$0xff]
    %v4500 = vld [vmem:[#allocation10 + $0x2c0] sm:$0xff]
    %v4501 = vld [vmem:[#allocation10 + $0x2c8] sm:$0xff]
    %v4502 = vld [vmem:[#allocation10 + $0x2d0] sm:$0xff]
    %v4503 = vld [vmem:[#allocation10 + $0x2d8] sm:$0xff]
    %v4504 = vld [vmem:[#allocation10 + $0x2e0] sm:$0xff]
    %v4505 = vld [vmem:[#allocation10 + $0x2e8] sm:$0xff]
    %v4506 = vld [vmem:[#allocation10 + $0x2f0] sm:$0xff]
    %v4507 = vld [vmem:[#allocation10 + $0x2f8] sm:$0xff]
    %v4508 = vld [vmem:[#allocation10 + $0x300] sm:$0xff]
    %v4509 = vld [vmem:[#allocation10 + $0x308] sm:$0xff]
    %v4510 = vld [vmem:[#allocation10 + $0x310] sm:$0xff]
    %v4511 = vld [vmem:[#allocation10 + $0x318] sm:$0xff]
    %v4512 = vld [vmem:[#allocation10 + $0x320] sm:$0xff]
    %v4513 = vld [vmem:[#allocation10 + $0x328] sm:$0xff]
    %v4514 = vld [vmem:[#allocation10 + $0x330] sm:$0xff]
    %v4515 = vld [vmem:[#allocation10 + $0x338] sm:$0xff]
    %v4516 = vld [vmem:[#allocation10 + $0x340] sm:$0xff]
    %v4517 = vld [vmem:[#allocation10 + $0x348] sm:$0xff]
    %v4518 = vld [vmem:[#allocation10 + $0x350] sm:$0xff]
    %v4519 = vld [vmem:[#allocation10 + $0x358] sm:$0xff]
    %v4520 = vld [vmem:[#allocation10 + $0x360] sm:$0xff]
    %v4521 = vld [vmem:[#allocation10 + $0x368] sm:$0xff]
    %v4522 = vld [vmem:[#allocation10 + $0x370] sm:$0xff]
    %v4523 = vld [vmem:[#allocation10 + $0x378] sm:$0xff]
    %v4524 = vld [vmem:[#allocation10 + $0x380] sm:$0xff]
    %v4525 = vld [vmem:[#allocation10 + $0x388] sm:$0xff]
    %v4526 = vld [vmem:[#allocation10 + $0x390] sm:$0xff]
    %v4527 = vld [vmem:[#allocation10 + $0x398] sm:$0xff]
    %v4528 = vld [vmem:[#allocation10 + $0x3a0] sm:$0xff]
    %v4529 = vld [vmem:[#allocation10 + $0x3a8] sm:$0xff]
    %v4530 = vld [vmem:[#allocation10 + $0x3b0] sm:$0xff]
    %v4531 = vld [vmem:[#allocation10 + $0x3b8] sm:$0xff]
    %v4532 = vld [vmem:[#allocation10 + $0x3c0] sm:$0xff]
    %v4533 = vld [vmem:[#allocation10 + $0x3c8] sm:$0xff]
    %v4534 = vld [vmem:[#allocation10 + $0x3d0] sm:$0xff]
    %v4535 = vld [vmem:[#allocation10 + $0x3d8] sm:$0xff]
    %v4536 = vld [vmem:[#allocation10 + $0x3e0] sm:$0xff]
    %v4537 = vld [vmem:[#allocation10 + $0x3e8] sm:$0xff]
    %v4538 = vld [vmem:[#allocation10 + $0x3f0] sm:$0xff]
    %v4539 = vld [vmem:[#allocation10 + $0x3f8] sm:$0xff]
    %v4540 = vld [vmem:[#allocation10 + $0x400] sm:$0xff]
    %v4541 = vld [vmem:[#allocation10 + $0x408] sm:$0xff]
    %v4542 = vld [vmem:[#allocation10 + $0x410] sm:$0xff]
    %v4543 = vld [vmem:[#allocation10 + $0x418] sm:$0xff]
    %v4544 = vld [vmem:[#allocation10 + $0x420] sm:$0xff]
    %v4545 = vld [vmem:[#allocation10 + $0x428] sm:$0xff]
    %v4546 = vld [vmem:[#allocation10 + $0x430] sm:$0xff]
    %v4547 = vld [vmem:[#allocation10 + $0x438] sm:$0xff]
    %v4548 = vld [vmem:[#allocation10 + $0x440] sm:$0xff]
    %v4549 = vld [vmem:[#allocation10 + $0x448] sm:$0xff]
    %v4550 = vld [vmem:[#allocation10 + $0x450] sm:$0xff]
    %v4551 = vld [vmem:[#allocation10 + $0x458] sm:$0xff]
    %v4552 = vld [vmem:[#allocation10 + $0x460] sm:$0xff]
    %v4553 = vld [vmem:[#allocation10 + $0x468] sm:$0xff]
    %v4554 = vld [vmem:[#allocation10 + $0x470] sm:$0xff]
    %v4555 = vld [vmem:[#allocation10 + $0x478] sm:$0xff]
    %v4556 = vld [vmem:[#allocation10 + $0x480] sm:$0xff]
    %v4557 = vld [vmem:[#allocation10 + $0x488] sm:$0xff]
    %v4558 = vld [vmem:[#allocation10 + $0x490] sm:$0xff]
    %v4559 = vld [vmem:[#allocation10 + $0x498] sm:$0xff]
    %v4560 = vld [vmem:[#allocation10 + $0x4a0] sm:$0xff]
    %v4561 = vld [vmem:[#allocation10 + $0x4a8] sm:$0xff]
    %v4562 = vld [vmem:[#allocation10 + $0x4b0] sm:$0xff]
    %v4563 = vld [vmem:[#allocation10 + $0x4b8] sm:$0xff]
    %v4564 = vld [vmem:[#allocation10 + $0x4c0] sm:$0xff]
    %v4565 = vld [vmem:[#allocation10 + $0x4c8] sm:$0xff]
    %v4566 = vld [vmem:[#allocation10 + $0x4d0] sm:$0xff]
    %v4567 = vld [vmem:[#allocation10 + $0x4d8] sm:$0xff]
    %v4568 = vld [vmem:[#allocation10 + $0x4e0] sm:$0xff]
    %v4569 = vld [vmem:[#allocation10 + $0x4e8] sm:$0xff]
    %v4570 = vld [vmem:[#allocation10 + $0x4f0] sm:$0xff]
    %v4571 = vld [vmem:[#allocation10 + $0x4f8] sm:$0xff]
    %v4572 = vld [vmem:[#allocation10 + $0x500] sm:$0xff]
    %v4573 = vld [vmem:[#allocation10 + $0x508] sm:$0xff]
    %v4574 = vld [vmem:[#allocation10 + $0x510] sm:$0xff]
    %v4575 = vld [vmem:[#allocation10 + $0x518] sm:$0xff]
    %v4576 = vld [vmem:[#allocation10 + $0x520] sm:$0xff]
    %v4577 = vld [vmem:[#allocation10 + $0x528] sm:$0xff]
    %v4578 = vld [vmem:[#allocation10 + $0x530] sm:$0xff]
    %v4579 = vld [vmem:[#allocation10 + $0x538] sm:$0xff]
    %v4580 = vld [vmem:[#allocation10 + $0x540] sm:$0xff]
    %v4581 = vld [vmem:[#allocation10 + $0x548] sm:$0xff]
    %v4582 = vld [vmem:[#allocation10 + $0x550] sm:$0xff]
    %v4583 = vld [vmem:[#allocation10 + $0x558] sm:$0xff]
    %v4584 = vld [vmem:[#allocation10 + $0x560] sm:$0xff]
    %v4585 = vld [vmem:[#allocation10 + $0x568] sm:$0xff]
    %v4586 = vld [vmem:[#allocation10 + $0x570] sm:$0xff]
    %v4587 = vld [vmem:[#allocation10 + $0x578] sm:$0xff]
    %v4588 = vld [vmem:[#allocation10 + $0x580] sm:$0xff]
    %v4589 = vld [vmem:[#allocation10 + $0x588] sm:$0xff]
    %v4590 = vld [vmem:[#allocation10 + $0x590] sm:$0xff]
    %v4591 = vld [vmem:[#allocation10 + $0x598] sm:$0xff]
    %v4592 = vld [vmem:[#allocation10 + $0x5a0] sm:$0xff]
    %v4593 = vld [vmem:[#allocation10 + $0x5a8] sm:$0xff]
    %v4594 = vld [vmem:[#allocation10 + $0x5b0] sm:$0xff]
    %v4595 = vld [vmem:[#allocation10 + $0x5b8] sm:$0xff]
    %v4596 = vld [vmem:[#allocation10 + $0x5c0] sm:$0xff]
    %v4597 = vld [vmem:[#allocation10 + $0x5c8] sm:$0xff]
    %v4598 = vld [vmem:[#allocation10 + $0x5d0] sm:$0xff]
    %v4599 = vld [vmem:[#allocation10 + $0x5d8] sm:$0xff]
    %v4600 = vld [vmem:[#allocation10 + $0x5e0] sm:$0xff]
    %v4601 = vld [vmem:[#allocation10 + $0x5e8] sm:$0xff]
    %v4602 = vld [vmem:[#allocation10 + $0x5f0] sm:$0xff]
    %v4603 = vld [vmem:[#allocation10 + $0x5f8] sm:$0xff]
    %v4604 = vld [vmem:[#allocation10 + $0x600] sm:$0xff]
    %v4605 = vld [vmem:[#allocation10 + $0x608] sm:$0xff]
    %v4606 = vld [vmem:[#allocation10 + $0x610] sm:$0xff]
    %v4607 = vld [vmem:[#allocation10 + $0x618] sm:$0xff]
    %v4608 = vld [vmem:[#allocation10 + $0x620] sm:$0xff]
    %v4609 = vld [vmem:[#allocation10 + $0x628] sm:$0xff]
    %v4610 = vld [vmem:[#allocation10 + $0x630] sm:$0xff]
    %v4611 = vld [vmem:[#allocation10 + $0x638] sm:$0xff]
    %v4612 = vld [vmem:[#allocation10 + $0x640] sm:$0xff]
    %v4613 = vld [vmem:[#allocation10 + $0x648] sm:$0xff]
    %v4614 = vld [vmem:[#allocation10 + $0x650] sm:$0xff]
    %v4615 = vld [vmem:[#allocation10 + $0x658] sm:$0xff]
    %v4616 = vld [vmem:[#allocation10 + $0x660] sm:$0xff]
    %v4617 = vld [vmem:[#allocation10 + $0x668] sm:$0xff]
    %v4618 = vld [vmem:[#allocation10 + $0x670] sm:$0xff]
    %v4619 = vld [vmem:[#allocation10 + $0x678] sm:$0xff]
    %v4620 = vld [vmem:[#allocation10 + $0x680] sm:$0xff]
    %v4621 = vld [vmem:[#allocation10 + $0x688] sm:$0xff]
    %v4622 = vld [vmem:[#allocation10 + $0x690] sm:$0xff]
    %v4623 = vld [vmem:[#allocation10 + $0x698] sm:$0xff]
    %v4624 = vld [vmem:[#allocation10 + $0x6a0] sm:$0xff]
    %v4625 = vld [vmem:[#allocation10 + $0x6a8] sm:$0xff]
    %v4626 = vld [vmem:[#allocation10 + $0x6b0] sm:$0xff]
    %v4627 = vld [vmem:[#allocation10 + $0x6b8] sm:$0xff]
    %v4628 = vld [vmem:[#allocation10 + $0x6c0] sm:$0xff]
    %v4629 = vld [vmem:[#allocation10 + $0x6c8] sm:$0xff]
    %v4630 = vld [vmem:[#allocation10 + $0x6d0] sm:$0xff]
    %v4631 = vld [vmem:[#allocation10 + $0x6d8] sm:$0xff]
    %v4632 = vld [vmem:[#allocation10 + $0x6e0] sm:$0xff]
    %v4633 = vld [vmem:[#allocation10 + $0x6e8] sm:$0xff]
    %v4634 = vld [vmem:[#allocation10 + $0x6f0] sm:$0xff]
    %v4635 = vld [vmem:[#allocation10 + $0x6f8] sm:$0xff]
    %v4636 = vld [vmem:[#allocation10 + $0x700] sm:$0xff]
    %v4637 = vld [vmem:[#allocation10 + $0x708] sm:$0xff]
    %v4638 = vld [vmem:[#allocation10 + $0x710] sm:$0xff]
    %v4639 = vld [vmem:[#allocation10 + $0x718] sm:$0xff]
    %v4640 = vld [vmem:[#allocation10 + $0x720] sm:$0xff]
    %v4641 = vld [vmem:[#allocation10 + $0x728] sm:$0xff]
    %v4642 = vld [vmem:[#allocation10 + $0x730] sm:$0xff]
    %v4643 = vld [vmem:[#allocation10 + $0x738] sm:$0xff]
    %v4644 = vld [vmem:[#allocation10 + $0x740] sm:$0xff]
    %v4645 = vld [vmem:[#allocation10 + $0x748] sm:$0xff]
    %v4646 = vld [vmem:[#allocation10 + $0x750] sm:$0xff]
    %v4647 = vld [vmem:[#allocation10 + $0x758] sm:$0xff]
    %v4648 = vld [vmem:[#allocation10 + $0x760] sm:$0xff]
    %v4649 = vld [vmem:[#allocation10 + $0x768] sm:$0xff]
    %v4650 = vld [vmem:[#allocation10 + $0x770] sm:$0xff]
    %v4651 = vld [vmem:[#allocation10 + $0x778] sm:$0xff]
    %v4652 = vld [vmem:[#allocation10 + $0x780] sm:$0xff]
    %v4653 = vld [vmem:[#allocation10 + $0x788] sm:$0xff]
    %v4654 = vld [vmem:[#allocation10 + $0x790] sm:$0xff]
    %v4655 = vld [vmem:[#allocation10 + $0x798] sm:$0xff]
    %v4656 = vld [vmem:[#allocation10 + $0x7a0] sm:$0xff]
    %v4657 = vld [vmem:[#allocation10 + $0x7a8] sm:$0xff]
    %v4658 = vld [vmem:[#allocation10 + $0x7b0] sm:$0xff]
    %v4659 = vld [vmem:[#allocation10 + $0x7b8] sm:$0xff]
    %v4660 = vld [vmem:[#allocation10 + $0x7c0] sm:$0xff]
    %v4661 = vld [vmem:[#allocation10 + $0x7c8] sm:$0xff]
    %v4662 = vld [vmem:[#allocation10 + $0x7d0] sm:$0xff]
    %v4663 = vld [vmem:[#allocation10 + $0x7d8] sm:$0xff]
    %v4664 = vld [vmem:[#allocation10 + $0x7e0] sm:$0xff]
    %v4665 = vld [vmem:[#allocation10 + $0x7e8] sm:$0xff]
    %v4666 = vld [vmem:[#allocation10 + $0x7f0] sm:$0xff]
    %v4667 = vld [vmem:[#allocation10 + $0x7f8] sm:$0xff]
    %v4668 = vld [vmem:[#allocation11] sm:$0xf]
    %v4670 = vperm.slane %v4668, 0
    %v4671 = vperm.slane %v4668, 1
    %v4672 = vperm.slane %v4668, 2
    %v4673 = vperm.slane %v4668, 3
    %v4934 = vunpack.c.l.b16 %v4412
    %v4935 = vunpack.c.h.b16 %v4412
    %v4936 = vunpack.c.l.b16 %v4413
    %v4937 = vunpack.c.h.b16 %v4413
    %v4938 = vunpack.c.l.b16 %v4414
    %v4939 = vunpack.c.h.b16 %v4414
    %v4940 = vunpack.c.l.b16 %v4415
    %v4941 = vunpack.c.h.b16 %v4415
    %v4942 = vunpack.c.l.b16 %v4416
    %v4943 = vunpack.c.h.b16 %v4416
    %v4944 = vunpack.c.l.b16 %v4417
    %v4945 = vunpack.c.h.b16 %v4417
    %v4946 = vunpack.c.l.b16 %v4418
    %v4947 = vunpack.c.h.b16 %v4418
    %v4948 = vunpack.c.l.b16 %v4419
    %v4949 = vunpack.c.h.b16 %v4419
    %v4950 = vunpack.c.l.b16 %v4420
    %v4951 = vunpack.c.h.b16 %v4420
    %v4952 = vunpack.c.l.b16 %v4421
    %v4953 = vunpack.c.h.b16 %v4421
    %v4954 = vunpack.c.l.b16 %v4422
    %v4955 = vunpack.c.h.b16 %v4422
    %v4956 = vunpack.c.l.b16 %v4423
    %v4957 = vunpack.c.h.b16 %v4423
    %v4958 = vunpack.c.l.b16 %v4424
    %v4959 = vunpack.c.h.b16 %v4424
    %v4960 = vunpack.c.l.b16 %v4425
    %v4961 = vunpack.c.h.b16 %v4425
    %v4962 = vunpack.c.l.b16 %v4426
    %v4963 = vunpack.c.h.b16 %v4426
    %v4964 = vunpack.c.l.b16 %v4427
    %v4965 = vunpack.c.h.b16 %v4427
    %v4966 = vunpack.c.l.b16 %v4428
    %v4967 = vunpack.c.h.b16 %v4428
    %v4968 = vunpack.c.l.b16 %v4429
    %v4969 = vunpack.c.h.b16 %v4429
    %v4970 = vunpack.c.l.b16 %v4430
    %v4971 = vunpack.c.h.b16 %v4430
    %v4972 = vunpack.c.l.b16 %v4431
    %v4973 = vunpack.c.h.b16 %v4431
    %v4974 = vunpack.c.l.b16 %v4432
    %v4975 = vunpack.c.h.b16 %v4432
    %v4976 = vunpack.c.l.b16 %v4433
    %v4977 = vunpack.c.h.b16 %v4433
    %v4978 = vunpack.c.l.b16 %v4434
    %v4979 = vunpack.c.h.b16 %v4434
    %v4980 = vunpack.c.l.b16 %v4435
    %v4981 = vunpack.c.h.b16 %v4435
    %v4982 = vunpack.c.l.b16 %v4436
    %v4983 = vunpack.c.h.b16 %v4436
    %v4984 = vunpack.c.l.b16 %v4437
    %v4985 = vunpack.c.h.b16 %v4437
    %v4986 = vunpack.c.l.b16 %v4438
    %v4987 = vunpack.c.h.b16 %v4438
    %v4988 = vunpack.c.l.b16 %v4439
    %v4989 = vunpack.c.h.b16 %v4439
    %v4990 = vunpack.c.l.b16 %v4440
    %v4991 = vunpack.c.h.b16 %v4440
    %v4992 = vunpack.c.l.b16 %v4441
    %v4993 = vunpack.c.h.b16 %v4441
    %v4994 = vunpack.c.l.b16 %v4442
    %v4995 = vunpack.c.h.b16 %v4442
    %v4996 = vunpack.c.l.b16 %v4443
    %v4997 = vunpack.c.h.b16 %v4443
    %v4998 = vunpack.c.l.b16 %v4444
    %v4999 = vunpack.c.h.b16 %v4444
    %v5000 = vunpack.c.l.b16 %v4445
    %v5001 = vunpack.c.h.b16 %v4445
    %v5002 = vunpack.c.l.b16 %v4446
    %v5003 = vunpack.c.h.b16 %v4446
    %v5004 = vunpack.c.l.b16 %v4447
    %v5005 = vunpack.c.h.b16 %v4447
    %v5006 = vunpack.c.l.b16 %v4448
    %v5007 = vunpack.c.h.b16 %v4448
    %v5008 = vunpack.c.l.b16 %v4449
    %v5009 = vunpack.c.h.b16 %v4449
    %v5010 = vunpack.c.l.b16 %v4450
    %v5011 = vunpack.c.h.b16 %v4450
    %v5012 = vunpack.c.l.b16 %v4451
    %v5013 = vunpack.c.h.b16 %v4451
    %v5014 = vunpack.c.l.b16 %v4452
    %v5015 = vunpack.c.h.b16 %v4452
    %v5016 = vunpack.c.l.b16 %v4453
    %v5017 = vunpack.c.h.b16 %v4453
    %v5018 = vunpack.c.l.b16 %v4454
    %v5019 = vunpack.c.h.b16 %v4454
    %v5020 = vunpack.c.l.b16 %v4455
    %v5021 = vunpack.c.h.b16 %v4455
    %v5022 = vunpack.c.l.b16 %v4456
    %v5023 = vunpack.c.h.b16 %v4456
    %v5024 = vunpack.c.l.b16 %v4457
    %v5025 = vunpack.c.h.b16 %v4457
    %v5026 = vunpack.c.l.b16 %v4458
    %v5027 = vunpack.c.h.b16 %v4458
    %v5028 = vunpack.c.l.b16 %v4459
    %v5029 = vunpack.c.h.b16 %v4459
    %v5030 = vunpack.c.l.b16 %v4460
    %v5031 = vunpack.c.h.b16 %v4460
    %v5032 = vunpack.c.l.b16 %v4461
    %v5033 = vunpack.c.h.b16 %v4461
    %v5034 = vunpack.c.l.b16 %v4462
    %v5035 = vunpack.c.h.b16 %v4462
    %v5036 = vunpack.c.l.b16 %v4463
    %v5037 = vunpack.c.h.b16 %v4463
    %v5038 = vunpack.c.l.b16 %v4464
    %v5039 = vunpack.c.h.b16 %v4464
    %v5040 = vunpack.c.l.b16 %v4465
    %v5041 = vunpack.c.h.b16 %v4465
    %v5042 = vunpack.c.l.b16 %v4466
    %v5043 = vunpack.c.h.b16 %v4466
    %v5044 = vunpack.c.l.b16 %v4467
    %v5045 = vunpack.c.h.b16 %v4467
    %v5046 = vunpack.c.l.b16 %v4468
    %v5047 = vunpack.c.h.b16 %v4468
    %v5048 = vunpack.c.l.b16 %v4469
    %v5049 = vunpack.c.h.b16 %v4469
    %v5050 = vunpack.c.l.b16 %v4470
    %v5051 = vunpack.c.h.b16 %v4470
    %v5052 = vunpack.c.l.b16 %v4471
    %v5053 = vunpack.c.h.b16 %v4471
    %v5054 = vunpack.c.l.b16 %v4472
    %v5055 = vunpack.c.h.b16 %v4472
    %v5056 = vunpack.c.l.b16 %v4473
    %v5057 = vunpack.c.h.b16 %v4473
    %v5058 = vunpack.c.l.b16 %v4474
    %v5059 = vunpack.c.h.b16 %v4474
    %v5060 = vunpack.c.l.b16 %v4475
    %v5061 = vunpack.c.h.b16 %v4475
    %v5062 = vunpack.c.l.b16 %v4476
    %v5063 = vunpack.c.h.b16 %v4476
    %v5064 = vunpack.c.l.b16 %v4477
    %v5065 = vunpack.c.h.b16 %v4477
    %v5066 = vunpack.c.l.b16 %v4478
    %v5067 = vunpack.c.h.b16 %v4478
    %v5068 = vunpack.c.l.b16 %v4479
    %v5069 = vunpack.c.h.b16 %v4479
    %v5070 = vunpack.c.l.b16 %v4480
    %v5071 = vunpack.c.h.b16 %v4480
    %v5072 = vunpack.c.l.b16 %v4481
    %v5073 = vunpack.c.h.b16 %v4481
    %v5074 = vunpack.c.l.b16 %v4482
    %v5075 = vunpack.c.h.b16 %v4482
    %v5076 = vunpack.c.l.b16 %v4483
    %v5077 = vunpack.c.h.b16 %v4483
    %v5078 = vunpack.c.l.b16 %v4484
    %v5079 = vunpack.c.h.b16 %v4484
    %v5080 = vunpack.c.l.b16 %v4485
    %v5081 = vunpack.c.h.b16 %v4485
    %v5082 = vunpack.c.l.b16 %v4486
    %v5083 = vunpack.c.h.b16 %v4486
    %v5084 = vunpack.c.l.b16 %v4487
    %v5085 = vunpack.c.h.b16 %v4487
    %v5086 = vunpack.c.l.b16 %v4488
    %v5087 = vunpack.c.h.b16 %v4488
    %v5088 = vunpack.c.l.b16 %v4489
    %v5089 = vunpack.c.h.b16 %v4489
    %v5090 = vunpack.c.l.b16 %v4490
    %v5091 = vunpack.c.h.b16 %v4490
    %v5092 = vunpack.c.l.b16 %v4491
    %v5093 = vunpack.c.h.b16 %v4491
    %v5094 = vunpack.c.l.b16 %v4492
    %v5095 = vunpack.c.h.b16 %v4492
    %v5096 = vunpack.c.l.b16 %v4493
    %v5097 = vunpack.c.h.b16 %v4493
    %v5098 = vunpack.c.l.b16 %v4494
    %v5099 = vunpack.c.h.b16 %v4494
    %v5100 = vunpack.c.l.b16 %v4495
    %v5101 = vunpack.c.h.b16 %v4495
    %v5102 = vunpack.c.l.b16 %v4496
    %v5103 = vunpack.c.h.b16 %v4496
    %v5104 = vunpack.c.l.b16 %v4497
    %v5105 = vunpack.c.h.b16 %v4497
    %v5106 = vunpack.c.l.b16 %v4498
    %v5107 = vunpack.c.h.b16 %v4498
    %v5108 = vunpack.c.l.b16 %v4499
    %v5109 = vunpack.c.h.b16 %v4499
    %v5110 = vunpack.c.l.b16 %v4500
    %v5111 = vunpack.c.h.b16 %v4500
    %v5112 = vunpack.c.l.b16 %v4501
    %v5113 = vunpack.c.h.b16 %v4501
    %v5114 = vunpack.c.l.b16 %v4502
    %v5115 = vunpack.c.h.b16 %v4502
    %v5116 = vunpack.c.l.b16 %v4503
    %v5117 = vunpack.c.h.b16 %v4503
    %v5118 = vunpack.c.l.b16 %v4504
    %v5119 = vunpack.c.h.b16 %v4504
    %v5120 = vunpack.c.l.b16 %v4505
    %v5121 = vunpack.c.h.b16 %v4505
    %v5122 = vunpack.c.l.b16 %v4506
    %v5123 = vunpack.c.h.b16 %v4506
    %v5124 = vunpack.c.l.b16 %v4507
    %v5125 = vunpack.c.h.b16 %v4507
    %v5126 = vunpack.c.l.b16 %v4508
    %v5127 = vunpack.c.h.b16 %v4508
    %v5128 = vunpack.c.l.b16 %v4509
    %v5129 = vunpack.c.h.b16 %v4509
    %v5130 = vunpack.c.l.b16 %v4510
    %v5131 = vunpack.c.h.b16 %v4510
    %v5132 = vunpack.c.l.b16 %v4511
    %v5133 = vunpack.c.h.b16 %v4511
    %v5134 = vunpack.c.l.b16 %v4512
    %v5135 = vunpack.c.h.b16 %v4512
    %v5136 = vunpack.c.l.b16 %v4513
    %v5137 = vunpack.c.h.b16 %v4513
    %v5138 = vunpack.c.l.b16 %v4514
    %v5139 = vunpack.c.h.b16 %v4514
    %v5140 = vunpack.c.l.b16 %v4515
    %v5141 = vunpack.c.h.b16 %v4515
    %v5142 = vunpack.c.l.b16 %v4516
    %v5143 = vunpack.c.h.b16 %v4516
    %v5144 = vunpack.c.l.b16 %v4517
    %v5145 = vunpack.c.h.b16 %v4517
    %v5146 = vunpack.c.l.b16 %v4518
    %v5147 = vunpack.c.h.b16 %v4518
    %v5148 = vunpack.c.l.b16 %v4519
    %v5149 = vunpack.c.h.b16 %v4519
    %v5150 = vunpack.c.l.b16 %v4520
    %v5151 = vunpack.c.h.b16 %v4520
    %v5152 = vunpack.c.l.b16 %v4521
    %v5153 = vunpack.c.h.b16 %v4521
    %v5154 = vunpack.c.l.b16 %v4522
    %v5155 = vunpack.c.h.b16 %v4522
    %v5156 = vunpack.c.l.b16 %v4523
    %v5157 = vunpack.c.h.b16 %v4523
    %v5158 = vunpack.c.l.b16 %v4524
    %v5159 = vunpack.c.h.b16 %v4524
    %v5160 = vunpack.c.l.b16 %v4525
    %v5161 = vunpack.c.h.b16 %v4525
    %v5162 = vunpack.c.l.b16 %v4526
    %v5163 = vunpack.c.h.b16 %v4526
    %v5164 = vunpack.c.l.b16 %v4527
    %v5165 = vunpack.c.h.b16 %v4527
    %v5166 = vunpack.c.l.b16 %v4528
    %v5167 = vunpack.c.h.b16 %v4528
    %v5168 = vunpack.c.l.b16 %v4529
    %v5169 = vunpack.c.h.b16 %v4529
    %v5170 = vunpack.c.l.b16 %v4530
    %v5171 = vunpack.c.h.b16 %v4530
    %v5172 = vunpack.c.l.b16 %v4531
    %v5173 = vunpack.c.h.b16 %v4531
    %v5174 = vunpack.c.l.b16 %v4532
    %v5175 = vunpack.c.h.b16 %v4532
    %v5176 = vunpack.c.l.b16 %v4533
    %v5177 = vunpack.c.h.b16 %v4533
    %v5178 = vunpack.c.l.b16 %v4534
    %v5179 = vunpack.c.h.b16 %v4534
    %v5180 = vunpack.c.l.b16 %v4535
    %v5181 = vunpack.c.h.b16 %v4535
    %v5182 = vunpack.c.l.b16 %v4536
    %v5183 = vunpack.c.h.b16 %v4536
    %v5184 = vunpack.c.l.b16 %v4537
    %v5185 = vunpack.c.h.b16 %v4537
    %v5186 = vunpack.c.l.b16 %v4538
    %v5187 = vunpack.c.h.b16 %v4538
    %v5188 = vunpack.c.l.b16 %v4539
    %v5189 = vunpack.c.h.b16 %v4539
    %v5190 = vunpack.c.l.b16 %v4540
    %v5191 = vunpack.c.h.b16 %v4540
    %v5192 = vunpack.c.l.b16 %v4541
    %v5193 = vunpack.c.h.b16 %v4541
    %v5194 = vunpack.c.l.b16 %v4542
    %v5195 = vunpack.c.h.b16 %v4542
    %v5196 = vunpack.c.l.b16 %v4543
    %v5197 = vunpack.c.h.b16 %v4543
    %v5198 = vunpack.c.l.b16 %v4544
    %v5199 = vunpack.c.h.b16 %v4544
    %v5200 = vunpack.c.l.b16 %v4545
    %v5201 = vunpack.c.h.b16 %v4545
    %v5202 = vunpack.c.l.b16 %v4546
    %v5203 = vunpack.c.h.b16 %v4546
    %v5204 = vunpack.c.l.b16 %v4547
    %v5205 = vunpack.c.h.b16 %v4547
    %v5206 = vunpack.c.l.b16 %v4548
    %v5207 = vunpack.c.h.b16 %v4548
    %v5208 = vunpack.c.l.b16 %v4549
    %v5209 = vunpack.c.h.b16 %v4549
    %v5210 = vunpack.c.l.b16 %v4550
    %v5211 = vunpack.c.h.b16 %v4550
    %v5212 = vunpack.c.l.b16 %v4551
    %v5213 = vunpack.c.h.b16 %v4551
    %v5214 = vunpack.c.l.b16 %v4552
    %v5215 = vunpack.c.h.b16 %v4552
    %v5216 = vunpack.c.l.b16 %v4553
    %v5217 = vunpack.c.h.b16 %v4553
    %v5218 = vunpack.c.l.b16 %v4554
    %v5219 = vunpack.c.h.b16 %v4554
    %v5220 = vunpack.c.l.b16 %v4555
    %v5221 = vunpack.c.h.b16 %v4555
    %v5222 = vunpack.c.l.b16 %v4556
    %v5223 = vunpack.c.h.b16 %v4556
    %v5224 = vunpack.c.l.b16 %v4557
    %v5225 = vunpack.c.h.b16 %v4557
    %v5226 = vunpack.c.l.b16 %v4558
    %v5227 = vunpack.c.h.b16 %v4558
    %v5228 = vunpack.c.l.b16 %v4559
    %v5229 = vunpack.c.h.b16 %v4559
    %v5230 = vunpack.c.l.b16 %v4560
    %v5231 = vunpack.c.h.b16 %v4560
    %v5232 = vunpack.c.l.b16 %v4561
    %v5233 = vunpack.c.h.b16 %v4561
    %v5234 = vunpack.c.l.b16 %v4562
    %v5235 = vunpack.c.h.b16 %v4562
    %v5236 = vunpack.c.l.b16 %v4563
    %v5237 = vunpack.c.h.b16 %v4563
    %v5238 = vunpack.c.l.b16 %v4564
    %v5239 = vunpack.c.h.b16 %v4564
    %v5240 = vunpack.c.l.b16 %v4565
    %v5241 = vunpack.c.h.b16 %v4565
    %v5242 = vunpack.c.l.b16 %v4566
    %v5243 = vunpack.c.h.b16 %v4566
    %v5244 = vunpack.c.l.b16 %v4567
    %v5245 = vunpack.c.h.b16 %v4567
    %v5246 = vunpack.c.l.b16 %v4568
    %v5247 = vunpack.c.h.b16 %v4568
    %v5248 = vunpack.c.l.b16 %v4569
    %v5249 = vunpack.c.h.b16 %v4569
    %v5250 = vunpack.c.l.b16 %v4570
    %v5251 = vunpack.c.h.b16 %v4570
    %v5252 = vunpack.c.l.b16 %v4571
    %v5253 = vunpack.c.h.b16 %v4571
    %v5254 = vunpack.c.l.b16 %v4572
    %v5255 = vunpack.c.h.b16 %v4572
    %v5256 = vunpack.c.l.b16 %v4573
    %v5257 = vunpack.c.h.b16 %v4573
    %v5258 = vunpack.c.l.b16 %v4574
    %v5259 = vunpack.c.h.b16 %v4574
    %v5260 = vunpack.c.l.b16 %v4575
    %v5261 = vunpack.c.h.b16 %v4575
    %v5262 = vunpack.c.l.b16 %v4576
    %v5263 = vunpack.c.h.b16 %v4576
    %v5264 = vunpack.c.l.b16 %v4577
    %v5265 = vunpack.c.h.b16 %v4577
    %v5266 = vunpack.c.l.b16 %v4578
    %v5267 = vunpack.c.h.b16 %v4578
    %v5268 = vunpack.c.l.b16 %v4579
    %v5269 = vunpack.c.h.b16 %v4579
    %v5270 = vunpack.c.l.b16 %v4580
    %v5271 = vunpack.c.h.b16 %v4580
    %v5272 = vunpack.c.l.b16 %v4581
    %v5273 = vunpack.c.h.b16 %v4581
    %v5274 = vunpack.c.l.b16 %v4582
    %v5275 = vunpack.c.h.b16 %v4582
    %v5276 = vunpack.c.l.b16 %v4583
    %v5277 = vunpack.c.h.b16 %v4583
    %v5278 = vunpack.c.l.b16 %v4584
    %v5279 = vunpack.c.h.b16 %v4584
    %v5280 = vunpack.c.l.b16 %v4585
    %v5281 = vunpack.c.h.b16 %v4585
    %v5282 = vunpack.c.l.b16 %v4586
    %v5283 = vunpack.c.h.b16 %v4586
    %v5284 = vunpack.c.l.b16 %v4587
    %v5285 = vunpack.c.h.b16 %v4587
    %v5286 = vunpack.c.l.b16 %v4588
    %v5287 = vunpack.c.h.b16 %v4588
    %v5288 = vunpack.c.l.b16 %v4589
    %v5289 = vunpack.c.h.b16 %v4589
    %v5290 = vunpack.c.l.b16 %v4590
    %v5291 = vunpack.c.h.b16 %v4590
    %v5292 = vunpack.c.l.b16 %v4591
    %v5293 = vunpack.c.h.b16 %v4591
    %v5294 = vunpack.c.l.b16 %v4592
    %v5295 = vunpack.c.h.b16 %v4592
    %v5296 = vunpack.c.l.b16 %v4593
    %v5297 = vunpack.c.h.b16 %v4593
    %v5298 = vunpack.c.l.b16 %v4594
    %v5299 = vunpack.c.h.b16 %v4594
    %v5300 = vunpack.c.l.b16 %v4595
    %v5301 = vunpack.c.h.b16 %v4595
    %v5302 = vunpack.c.l.b16 %v4596
    %v5303 = vunpack.c.h.b16 %v4596
    %v5304 = vunpack.c.l.b16 %v4597
    %v5305 = vunpack.c.h.b16 %v4597
    %v5306 = vunpack.c.l.b16 %v4598
    %v5307 = vunpack.c.h.b16 %v4598
    %v5308 = vunpack.c.l.b16 %v4599
    %v5309 = vunpack.c.h.b16 %v4599
    %v5310 = vunpack.c.l.b16 %v4600
    %v5311 = vunpack.c.h.b16 %v4600
    %v5312 = vunpack.c.l.b16 %v4601
    %v5313 = vunpack.c.h.b16 %v4601
    %v5314 = vunpack.c.l.b16 %v4602
    %v5315 = vunpack.c.h.b16 %v4602
    %v5316 = vunpack.c.l.b16 %v4603
    %v5317 = vunpack.c.h.b16 %v4603
    %v5318 = vunpack.c.l.b16 %v4604
    %v5319 = vunpack.c.h.b16 %v4604
    %v5320 = vunpack.c.l.b16 %v4605
    %v5321 = vunpack.c.h.b16 %v4605
    %v5322 = vunpack.c.l.b16 %v4606
    %v5323 = vunpack.c.h.b16 %v4606
    %v5324 = vunpack.c.l.b16 %v4607
    %v5325 = vunpack.c.h.b16 %v4607
    %v5326 = vunpack.c.l.b16 %v4608
    %v5327 = vunpack.c.h.b16 %v4608
    %v5328 = vunpack.c.l.b16 %v4609
    %v5329 = vunpack.c.h.b16 %v4609
    %v5330 = vunpack.c.l.b16 %v4610
    %v5331 = vunpack.c.h.b16 %v4610
    %v5332 = vunpack.c.l.b16 %v4611
    %v5333 = vunpack.c.h.b16 %v4611
    %v5334 = vunpack.c.l.b16 %v4612
    %v5335 = vunpack.c.h.b16 %v4612
    %v5336 = vunpack.c.l.b16 %v4613
    %v5337 = vunpack.c.h.b16 %v4613
    %v5338 = vunpack.c.l.b16 %v4614
    %v5339 = vunpack.c.h.b16 %v4614
    %v5340 = vunpack.c.l.b16 %v4615
    %v5341 = vunpack.c.h.b16 %v4615
    %v5342 = vunpack.c.l.b16 %v4616
    %v5343 = vunpack.c.h.b16 %v4616
    %v5344 = vunpack.c.l.b16 %v4617
    %v5345 = vunpack.c.h.b16 %v4617
    %v5346 = vunpack.c.l.b16 %v4618
    %v5347 = vunpack.c.h.b16 %v4618
    %v5348 = vunpack.c.l.b16 %v4619
    %v5349 = vunpack.c.h.b16 %v4619
    %v5350 = vunpack.c.l.b16 %v4620
    %v5351 = vunpack.c.h.b16 %v4620
    %v5352 = vunpack.c.l.b16 %v4621
    %v5353 = vunpack.c.h.b16 %v4621
    %v5354 = vunpack.c.l.b16 %v4622
    %v5355 = vunpack.c.h.b16 %v4622
    %v5356 = vunpack.c.l.b16 %v4623
    %v5357 = vunpack.c.h.b16 %v4623
    %v5358 = vunpack.c.l.b16 %v4624
    %v5359 = vunpack.c.h.b16 %v4624
    %v5360 = vunpack.c.l.b16 %v4625
    %v5361 = vunpack.c.h.b16 %v4625
    %v5362 = vunpack.c.l.b16 %v4626
    %v5363 = vunpack.c.h.b16 %v4626
    %v5364 = vunpack.c.l.b16 %v4627
    %v5365 = vunpack.c.h.b16 %v4627
    %v5366 = vunpack.c.l.b16 %v4628
    %v5367 = vunpack.c.h.b16 %v4628
    %v5368 = vunpack.c.l.b16 %v4629
    %v5369 = vunpack.c.h.b16 %v4629
    %v5370 = vunpack.c.l.b16 %v4630
    %v5371 = vunpack.c.h.b16 %v4630
    %v5372 = vunpack.c.l.b16 %v4631
    %v5373 = vunpack.c.h.b16 %v4631
    %v5374 = vunpack.c.l.b16 %v4632
    %v5375 = vunpack.c.h.b16 %v4632
    %v5376 = vunpack.c.l.b16 %v4633
    %v5377 = vunpack.c.h.b16 %v4633
    %v5378 = vunpack.c.l.b16 %v4634
    %v5379 = vunpack.c.h.b16 %v4634
    %v5380 = vunpack.c.l.b16 %v4635
    %v5381 = vunpack.c.h.b16 %v4635
    %v5382 = vunpack.c.l.b16 %v4636
    %v5383 = vunpack.c.h.b16 %v4636
    %v5384 = vunpack.c.l.b16 %v4637
    %v5385 = vunpack.c.h.b16 %v4637
    %v5386 = vunpack.c.l.b16 %v4638
    %v5387 = vunpack.c.h.b16 %v4638
    %v5388 = vunpack.c.l.b16 %v4639
    %v5389 = vunpack.c.h.b16 %v4639
    %v5390 = vunpack.c.l.b16 %v4640
    %v5391 = vunpack.c.h.b16 %v4640
    %v5392 = vunpack.c.l.b16 %v4641
    %v5393 = vunpack.c.h.b16 %v4641
    %v5394 = vunpack.c.l.b16 %v4642
    %v5395 = vunpack.c.h.b16 %v4642
    %v5396 = vunpack.c.l.b16 %v4643
    %v5397 = vunpack.c.h.b16 %v4643
    %v5398 = vunpack.c.l.b16 %v4644
    %v5399 = vunpack.c.h.b16 %v4644
    %v5400 = vunpack.c.l.b16 %v4645
    %v5401 = vunpack.c.h.b16 %v4645
    %v5402 = vunpack.c.l.b16 %v4646
    %v5403 = vunpack.c.h.b16 %v4646
    %v5404 = vunpack.c.l.b16 %v4647
    %v5405 = vunpack.c.h.b16 %v4647
    %v5406 = vunpack.c.l.b16 %v4648
    %v5407 = vunpack.c.h.b16 %v4648
    %v5408 = vunpack.c.l.b16 %v4649
    %v5409 = vunpack.c.h.b16 %v4649
    %v5410 = vunpack.c.l.b16 %v4650
    %v5411 = vunpack.c.h.b16 %v4650
    %v5412 = vunpack.c.l.b16 %v4651
    %v5413 = vunpack.c.h.b16 %v4651
    %v5414 = vunpack.c.l.b16 %v4652
    %v5415 = vunpack.c.h.b16 %v4652
    %v5416 = vunpack.c.l.b16 %v4653
    %v5417 = vunpack.c.h.b16 %v4653
    %v5418 = vunpack.c.l.b16 %v4654
    %v5419 = vunpack.c.h.b16 %v4654
    %v5420 = vunpack.c.l.b16 %v4655
    %v5421 = vunpack.c.h.b16 %v4655
    %v5422 = vunpack.c.l.b16 %v4656
    %v5423 = vunpack.c.h.b16 %v4656
    %v5424 = vunpack.c.l.b16 %v4657
    %v5425 = vunpack.c.h.b16 %v4657
    %v5426 = vunpack.c.l.b16 %v4658
    %v5427 = vunpack.c.h.b16 %v4658
    %v5428 = vunpack.c.l.b16 %v4659
    %v5429 = vunpack.c.h.b16 %v4659
    %v5430 = vunpack.c.l.b16 %v4660
    %v5431 = vunpack.c.h.b16 %v4660
    %v5432 = vunpack.c.l.b16 %v4661
    %v5433 = vunpack.c.h.b16 %v4661
    %v5434 = vunpack.c.l.b16 %v4662
    %v5435 = vunpack.c.h.b16 %v4662
    %v5436 = vunpack.c.l.b16 %v4663
    %v5437 = vunpack.c.h.b16 %v4663
    %v5438 = vunpack.c.l.b16 %v4664
    %v5439 = vunpack.c.h.b16 %v4664
    %v5440 = vunpack.c.l.b16 %v4665
    %v5441 = vunpack.c.h.b16 %v4665
    %v5442 = vunpack.c.l.b16 %v4666
    %v5443 = vunpack.c.h.b16 %v4666
    %v5444 = vunpack.c.l.b16 %v4667
    %v5445 = vunpack.c.h.b16 %v4667
    %v5446 = vpack.c.b16 %v4938, %v4934
    %v5447 = vpack.c.b16 %v4939, %v4935
    %v5448 = vpack.c.b16 %v4940, %v4936
    %v5449 = vpack.c.b16 %v4941, %v4937
    %v5450 = vpack.c.b16 %v4946, %v4942
    %v5451 = vpack.c.b16 %v4947, %v4943
    %v5452 = vpack.c.b16 %v4948, %v4944
    %v5453 = vpack.c.b16 %v4949, %v4945
    %v5454 = vpack.c.b16 %v4954, %v4950
    %v5455 = vpack.c.b16 %v4955, %v4951
    %v5456 = vpack.c.b16 %v4956, %v4952
    %v5457 = vpack.c.b16 %v4957, %v4953
    %v5458 = vpack.c.b16 %v4962, %v4958
    %v5459 = vpack.c.b16 %v4963, %v4959
    %v5460 = vpack.c.b16 %v4964, %v4960
    %v5461 = vpack.c.b16 %v4965, %v4961
    %v5462 = vpack.c.b16 %v4970, %v4966
    %v5463 = vpack.c.b16 %v4971, %v4967
    %v5464 = vpack.c.b16 %v4972, %v4968
    %v5465 = vpack.c.b16 %v4973, %v4969
    %v5466 = vpack.c.b16 %v4978, %v4974
    %v5467 = vpack.c.b16 %v4979, %v4975
    %v5468 = vpack.c.b16 %v4980, %v4976
    %v5469 = vpack.c.b16 %v4981, %v4977
    %v5470 = vpack.c.b16 %v4986, %v4982
    %v5471 = vpack.c.b16 %v4987, %v4983
    %v5472 = vpack.c.b16 %v4988, %v4984
    %v5473 = vpack.c.b16 %v4989, %v4985
    %v5474 = vpack.c.b16 %v4994, %v4990
    %v5475 = vpack.c.b16 %v4995, %v4991
    %v5476 = vpack.c.b16 %v4996, %v4992
    %v5477 = vpack.c.b16 %v4997, %v4993
    %v5478 = vpack.c.b16 %v5002, %v4998
    %v5479 = vpack.c.b16 %v5003, %v4999
    %v5480 = vpack.c.b16 %v5004, %v5000
    %v5481 = vpack.c.b16 %v5005, %v5001
    %v5482 = vpack.c.b16 %v5010, %v5006
    %v5483 = vpack.c.b16 %v5011, %v5007
    %v5484 = vpack.c.b16 %v5012, %v5008
    %v5485 = vpack.c.b16 %v5013, %v5009
    %v5486 = vpack.c.b16 %v5018, %v5014
    %v5487 = vpack.c.b16 %v5019, %v5015
    %v5488 = vpack.c.b16 %v5020, %v5016
    %v5489 = vpack.c.b16 %v5021, %v5017
    %v5490 = vpack.c.b16 %v5026, %v5022
    %v5491 = vpack.c.b16 %v5027, %v5023
    %v5492 = vpack.c.b16 %v5028, %v5024
    %v5493 = vpack.c.b16 %v5029, %v5025
    %v5494 = vpack.c.b16 %v5034, %v5030
    %v5495 = vpack.c.b16 %v5035, %v5031
    %v5496 = vpack.c.b16 %v5036, %v5032
    %v5497 = vpack.c.b16 %v5037, %v5033
    %v5498 = vpack.c.b16 %v5042, %v5038
    %v5499 = vpack.c.b16 %v5043, %v5039
    %v5500 = vpack.c.b16 %v5044, %v5040
    %v5501 = vpack.c.b16 %v5045, %v5041
    %v5502 = vpack.c.b16 %v5050, %v5046
    %v5503 = vpack.c.b16 %v5051, %v5047
    %v5504 = vpack.c.b16 %v5052, %v5048
    %v5505 = vpack.c.b16 %v5053, %v5049
    %v5506 = vpack.c.b16 %v5058, %v5054
    %v5507 = vpack.c.b16 %v5059, %v5055
    %v5508 = vpack.c.b16 %v5060, %v5056
    %v5509 = vpack.c.b16 %v5061, %v5057
    %v5510 = vpack.c.b16 %v5066, %v5062
    %v5511 = vpack.c.b16 %v5067, %v5063
    %v5512 = vpack.c.b16 %v5068, %v5064
    %v5513 = vpack.c.b16 %v5069, %v5065
    %v5514 = vpack.c.b16 %v5074, %v5070
    %v5515 = vpack.c.b16 %v5075, %v5071
    %v5516 = vpack.c.b16 %v5076, %v5072
    %v5517 = vpack.c.b16 %v5077, %v5073
    %v5518 = vpack.c.b16 %v5082, %v5078
    %v5519 = vpack.c.b16 %v5083, %v5079
    %v5520 = vpack.c.b16 %v5084, %v5080
    %v5521 = vpack.c.b16 %v5085, %v5081
    %v5522 = vpack.c.b16 %v5090, %v5086
    %v5523 = vpack.c.b16 %v5091, %v5087
    %v5524 = vpack.c.b16 %v5092, %v5088
    %v5525 = vpack.c.b16 %v5093, %v5089
    %v5526 = vpack.c.b16 %v5098, %v5094
    %v5527 = vpack.c.b16 %v5099, %v5095
    %v5528 = vpack.c.b16 %v5100, %v5096
    %v5529 = vpack.c.b16 %v5101, %v5097
    %v5530 = vpack.c.b16 %v5106, %v5102
    %v5531 = vpack.c.b16 %v5107, %v5103
    %v5532 = vpack.c.b16 %v5108, %v5104
    %v5533 = vpack.c.b16 %v5109, %v5105
    %v5534 = vpack.c.b16 %v5114, %v5110
    %v5535 = vpack.c.b16 %v5115, %v5111
    %v5536 = vpack.c.b16 %v5116, %v5112
    %v5537 = vpack.c.b16 %v5117, %v5113
    %v5538 = vpack.c.b16 %v5122, %v5118
    %v5539 = vpack.c.b16 %v5123, %v5119
    %v5540 = vpack.c.b16 %v5124, %v5120
    %v5541 = vpack.c.b16 %v5125, %v5121
    %v5542 = vpack.c.b16 %v5130, %v5126
    %v5543 = vpack.c.b16 %v5131, %v5127
    %v5544 = vpack.c.b16 %v5132, %v5128
    %v5545 = vpack.c.b16 %v5133, %v5129
    %v5546 = vpack.c.b16 %v5138, %v5134
    %v5547 = vpack.c.b16 %v5139, %v5135
    %v5548 = vpack.c.b16 %v5140, %v5136
    %v5549 = vpack.c.b16 %v5141, %v5137
    %v5550 = vpack.c.b16 %v5146, %v5142
    %v5551 = vpack.c.b16 %v5147, %v5143
    %v5552 = vpack.c.b16 %v5148, %v5144
    %v5553 = vpack.c.b16 %v5149, %v5145
    %v5554 = vpack.c.b16 %v5154, %v5150
    %v5555 = vpack.c.b16 %v5155, %v5151
    %v5556 = vpack.c.b16 %v5156, %v5152
    %v5557 = vpack.c.b16 %v5157, %v5153
    %v5558 = vpack.c.b16 %v5162, %v5158
    %v5559 = vpack.c.b16 %v5163, %v5159
    %v5560 = vpack.c.b16 %v5164, %v5160
    %v5561 = vpack.c.b16 %v5165, %v5161
    %v5562 = vpack.c.b16 %v5170, %v5166
    %v5563 = vpack.c.b16 %v5171, %v5167
    %v5564 = vpack.c.b16 %v5172, %v5168
    %v5565 = vpack.c.b16 %v5173, %v5169
    %v5566 = vpack.c.b16 %v5178, %v5174
    %v5567 = vpack.c.b16 %v5179, %v5175
    %v5568 = vpack.c.b16 %v5180, %v5176
    %v5569 = vpack.c.b16 %v5181, %v5177
    %v5570 = vpack.c.b16 %v5186, %v5182
    %v5571 = vpack.c.b16 %v5187, %v5183
    %v5572 = vpack.c.b16 %v5188, %v5184
    %v5573 = vpack.c.b16 %v5189, %v5185
    %v5574 = vpack.c.b16 %v5194, %v5190
    %v5575 = vpack.c.b16 %v5195, %v5191
    %v5576 = vpack.c.b16 %v5196, %v5192
    %v5577 = vpack.c.b16 %v5197, %v5193
    %v5578 = vpack.c.b16 %v5202, %v5198
    %v5579 = vpack.c.b16 %v5203, %v5199
    %v5580 = vpack.c.b16 %v5204, %v5200
    %v5581 = vpack.c.b16 %v5205, %v5201
    %v5582 = vpack.c.b16 %v5210, %v5206
    %v5583 = vpack.c.b16 %v5211, %v5207
    %v5584 = vpack.c.b16 %v5212, %v5208
    %v5585 = vpack.c.b16 %v5213, %v5209
    %v5586 = vpack.c.b16 %v5218, %v5214
    %v5587 = vpack.c.b16 %v5219, %v5215
    %v5588 = vpack.c.b16 %v5220, %v5216
    %v5589 = vpack.c.b16 %v5221, %v5217
    %v5590 = vpack.c.b16 %v5226, %v5222
    %v5591 = vpack.c.b16 %v5227, %v5223
    %v5592 = vpack.c.b16 %v5228, %v5224
    %v5593 = vpack.c.b16 %v5229, %v5225
    %v5594 = vpack.c.b16 %v5234, %v5230
    %v5595 = vpack.c.b16 %v5235, %v5231
    %v5596 = vpack.c.b16 %v5236, %v5232
    %v5597 = vpack.c.b16 %v5237, %v5233
    %v5598 = vpack.c.b16 %v5242, %v5238
    %v5599 = vpack.c.b16 %v5243, %v5239
    %v5600 = vpack.c.b16 %v5244, %v5240
    %v5601 = vpack.c.b16 %v5245, %v5241
    %v5602 = vpack.c.b16 %v5250, %v5246
    %v5603 = vpack.c.b16 %v5251, %v5247
    %v5604 = vpack.c.b16 %v5252, %v5248
    %v5605 = vpack.c.b16 %v5253, %v5249
    %v5606 = vpack.c.b16 %v5258, %v5254
    %v5607 = vpack.c.b16 %v5259, %v5255
    %v5608 = vpack.c.b16 %v5260, %v5256
    %v5609 = vpack.c.b16 %v5261, %v5257
    %v5610 = vpack.c.b16 %v5266, %v5262
    %v5611 = vpack.c.b16 %v5267, %v5263
    %v5612 = vpack.c.b16 %v5268, %v5264
    %v5613 = vpack.c.b16 %v5269, %v5265
    %v5614 = vpack.c.b16 %v5274, %v5270
    %v5615 = vpack.c.b16 %v5275, %v5271
    %v5616 = vpack.c.b16 %v5276, %v5272
    %v5617 = vpack.c.b16 %v5277, %v5273
    %v5618 = vpack.c.b16 %v5282, %v5278
    %v5619 = vpack.c.b16 %v5283, %v5279
    %v5620 = vpack.c.b16 %v5284, %v5280
    %v5621 = vpack.c.b16 %v5285, %v5281
    %v5622 = vpack.c.b16 %v5290, %v5286
    %v5623 = vpack.c.b16 %v5291, %v5287
    %v5624 = vpack.c.b16 %v5292, %v5288
    %v5625 = vpack.c.b16 %v5293, %v5289
    %v5626 = vpack.c.b16 %v5298, %v5294
    %v5627 = vpack.c.b16 %v5299, %v5295
    %v5628 = vpack.c.b16 %v5300, %v5296
    %v5629 = vpack.c.b16 %v5301, %v5297
    %v5630 = vpack.c.b16 %v5306, %v5302
    %v5631 = vpack.c.b16 %v5307, %v5303
    %v5632 = vpack.c.b16 %v5308, %v5304
    %v5633 = vpack.c.b16 %v5309, %v5305
    %v5634 = vpack.c.b16 %v5314, %v5310
    %v5635 = vpack.c.b16 %v5315, %v5311
    %v5636 = vpack.c.b16 %v5316, %v5312
    %v5637 = vpack.c.b16 %v5317, %v5313
    %v5638 = vpack.c.b16 %v5322, %v5318
    %v5639 = vpack.c.b16 %v5323, %v5319
    %v5640 = vpack.c.b16 %v5324, %v5320
    %v5641 = vpack.c.b16 %v5325, %v5321
    %v5642 = vpack.c.b16 %v5330, %v5326
    %v5643 = vpack.c.b16 %v5331, %v5327
    %v5644 = vpack.c.b16 %v5332, %v5328
    %v5645 = vpack.c.b16 %v5333, %v5329
    %v5646 = vpack.c.b16 %v5338, %v5334
    %v5647 = vpack.c.b16 %v5339, %v5335
    %v5648 = vpack.c.b16 %v5340, %v5336
    %v5649 = vpack.c.b16 %v5341, %v5337
    %v5650 = vpack.c.b16 %v5346, %v5342
    %v5651 = vpack.c.b16 %v5347, %v5343
    %v5652 = vpack.c.b16 %v5348, %v5344
    %v5653 = vpack.c.b16 %v5349, %v5345
    %v5654 = vpack.c.b16 %v5354, %v5350
    %v5655 = vpack.c.b16 %v5355, %v5351
    %v5656 = vpack.c.b16 %v5356, %v5352
    %v5657 = vpack.c.b16 %v5357, %v5353
    %v5658 = vpack.c.b16 %v5362, %v5358
    %v5659 = vpack.c.b16 %v5363, %v5359
    %v5660 = vpack.c.b16 %v5364, %v5360
    %v5661 = vpack.c.b16 %v5365, %v5361
    %v5662 = vpack.c.b16 %v5370, %v5366
    %v5663 = vpack.c.b16 %v5371, %v5367
    %v5664 = vpack.c.b16 %v5372, %v5368
    %v5665 = vpack.c.b16 %v5373, %v5369
    %v5666 = vpack.c.b16 %v5378, %v5374
    %v5667 = vpack.c.b16 %v5379, %v5375
    %v5668 = vpack.c.b16 %v5380, %v5376
    %v5669 = vpack.c.b16 %v5381, %v5377
    %v5670 = vpack.c.b16 %v5386, %v5382
    %v5671 = vpack.c.b16 %v5387, %v5383
    %v5672 = vpack.c.b16 %v5388, %v5384
    %v5673 = vpack.c.b16 %v5389, %v5385
    %v5674 = vpack.c.b16 %v5394, %v5390
    %v5675 = vpack.c.b16 %v5395, %v5391
    %v5676 = vpack.c.b16 %v5396, %v5392
    %v5677 = vpack.c.b16 %v5397, %v5393
    %v5678 = vpack.c.b16 %v5402, %v5398
    %v5679 = vpack.c.b16 %v5403, %v5399
    %v5680 = vpack.c.b16 %v5404, %v5400
    %v5681 = vpack.c.b16 %v5405, %v5401
    %v5682 = vpack.c.b16 %v5410, %v5406
    %v5683 = vpack.c.b16 %v5411, %v5407
    %v5684 = vpack.c.b16 %v5412, %v5408
    %v5685 = vpack.c.b16 %v5413, %v5409
    %v5686 = vpack.c.b16 %v5418, %v5414
    %v5687 = vpack.c.b16 %v5419, %v5415
    %v5688 = vpack.c.b16 %v5420, %v5416
    %v5689 = vpack.c.b16 %v5421, %v5417
    %v5690 = vpack.c.b16 %v5426, %v5422
    %v5691 = vpack.c.b16 %v5427, %v5423
    %v5692 = vpack.c.b16 %v5428, %v5424
    %v5693 = vpack.c.b16 %v5429, %v5425
    %v5694 = vpack.c.b16 %v5434, %v5430
    %v5695 = vpack.c.b16 %v5435, %v5431
    %v5696 = vpack.c.b16 %v5436, %v5432
    %v5697 = vpack.c.b16 %v5437, %v5433
    %v5698 = vpack.c.b16 %v5442, %v5438
    %v5699 = vpack.c.b16 %v5443, %v5439
    %v5700 = vpack.c.b16 %v5444, %v5440
    %v5701 = vpack.c.b16 %v5445, %v5441
    %5958 = vmatpush.bf16.msra.mxu0 %v5474
    %5959 = vmatpush.bf16.msra.mxu0 %v5470
    %5960 = vmatpush.bf16.msra.mxu0 %v5466
    %5961 = vmatpush.bf16.msra.mxu0 %v5462
    %5962 = vmatpush.bf16.msra.mxu0 %v5458
    %5963 = vmatpush.bf16.msra.mxu0 %v5454
    %5964 = vmatpush.bf16.msra.mxu0 %v5450
    %5965 = vmatpush.bf16.msra.mxu0 %v5446
    %5966 = vmatmul.bf16.gmra.mxu0 %v4390
    %v5967 = vpop.f32.mrf.mxu0
    %v5968 = vadd.f32 %v4670, %v5967
    %v5969 = vpop.f32.mrf.mxu0
    %5970 = vdwg.mxu0
    %5971 = vmatpush.bf16.msra.mxu0 %v5506
    %5972 = vmatpush.bf16.msra.mxu0 %v5502
    %5973 = vmatpush.bf16.msra.mxu0 %v5498
    %5974 = vmatpush.bf16.msra.mxu0 %v5494
    %5975 = vmatpush.bf16.msra.mxu0 %v5490
    %5976 = vmatpush.bf16.msra.mxu0 %v5486
    %5977 = vmatpush.bf16.msra.mxu0 %v5482
    %5978 = vmatpush.bf16.msra.mxu0 %v5478
    %5979 = vmatmul.bf16.gmra.mxu0 %v4391
    %v5980 = vpop.f32.mrf.mxu0
    %v5981 = vadd.f32 %v5968, %v5980
    %v5982 = vpop.f32.mrf.mxu0
    %5983 = vdwg.mxu0
    %5984 = vmatpush.bf16.msra.mxu0 %v5538
    %5985 = vmatpush.bf16.msra.mxu0 %v5534
    %5986 = vmatpush.bf16.msra.mxu0 %v5530
    %5987 = vmatpush.bf16.msra.mxu0 %v5526
    %5988 = vmatpush.bf16.msra.mxu0 %v5522
    %5989 = vmatpush.bf16.msra.mxu0 %v5518
    %5990 = vmatpush.bf16.msra.mxu0 %v5514
    %5991 = vmatpush.bf16.msra.mxu0 %v5510
    %5992 = vmatmul.bf16.gmra.mxu0 %v4396
    %v5993 = vpop.f32.mrf.mxu0
    %v5994 = vadd.f32 %v5981, %v5993
    %v5995 = vpop.f32.mrf.mxu0
    %5996 = vdwg.mxu0
    %5997 = vmatpush.bf16.msra.mxu0 %v5570
    %5998 = vmatpush.bf16.msra.mxu0 %v5566
    %5999 = vmatpush.bf16.msra.mxu0 %v5562
    %6000 = vmatpush.bf16.msra.mxu0 %v5558
    %6001 = vmatpush.bf16.msra.mxu0 %v5554
    %6002 = vmatpush.bf16.msra.mxu0 %v5550
    %6003 = vmatpush.bf16.msra.mxu0 %v5546
    %6004 = vmatpush.bf16.msra.mxu0 %v5542
    %6005 = vmatmul.bf16.gmra.mxu0 %v4397
    %v6006 = vpop.f32.mrf.mxu0
    %v6007 = vadd.f32 %v5994, %v6006
    %v6008 = vpop.f32.mrf.mxu0
    %6009 = vdwg.mxu0
    %6010 = vmatpush.bf16.msra.mxu0 %v5602
    %6011 = vmatpush.bf16.msra.mxu0 %v5598
    %6012 = vmatpush.bf16.msra.mxu0 %v5594
    %6013 = vmatpush.bf16.msra.mxu0 %v5590
    %6014 = vmatpush.bf16.msra.mxu0 %v5586
    %6015 = vmatpush.bf16.msra.mxu0 %v5582
    %6016 = vmatpush.bf16.msra.mxu0 %v5578
    %6017 = vmatpush.bf16.msra.mxu0 %v5574
    %6018 = vmatmul.bf16.gmra.mxu0 %v4402
    %v6019 = vpop.f32.mrf.mxu0
    %v6020 = vadd.f32 %v6007, %v6019
    %v6021 = vpop.f32.mrf.mxu0
    %6022 = vdwg.mxu0
    %6023 = vmatpush.bf16.msra.mxu0 %v5634
    %6024 = vmatpush.bf16.msra.mxu0 %v5630
    %6025 = vmatpush.bf16.msra.mxu0 %v5626
    %6026 = vmatpush.bf16.msra.mxu0 %v5622
    %6027 = vmatpush.bf16.msra.mxu0 %v5618
    %6028 = vmatpush.bf16.msra.mxu0 %v5614
    %6029 = vmatpush.bf16.msra.mxu0 %v5610
    %6030 = vmatpush.bf16.msra.mxu0 %v5606
    %6031 = vmatmul.bf16.gmra.mxu0 %v4403
    %v6032 = vpop.f32.mrf.mxu0
    %v6033 = vadd.f32 %v6020, %v6032
    %v6034 = vpop.f32.mrf.mxu0
    %6035 = vdwg.mxu0
    %6036 = vmatpush.bf16.msra.mxu0 %v5666
    %6037 = vmatpush.bf16.msra.mxu0 %v5662
    %6038 = vmatpush.bf16.msra.mxu0 %v5658
    %6039 = vmatpush.bf16.msra.mxu0 %v5654
    %6040 = vmatpush.bf16.msra.mxu0 %v5650
    %6041 = vmatpush.bf16.msra.mxu0 %v5646
    %6042 = vmatpush.bf16.msra.mxu0 %v5642
    %6043 = vmatpush.bf16.msra.mxu0 %v5638
    %6044 = vmatmul.bf16.gmra.mxu0 %v4408
    %v6045 = vpop.f32.mrf.mxu0
    %v6046 = vadd.f32 %v6033, %v6045
    %v6047 = vpop.f32.mrf.mxu0
    %6048 = vdwg.mxu0
    %6049 = vmatpush.bf16.msra.mxu0 %v5698
    %6050 = vmatpush.bf16.msra.mxu0 %v5694
    %6051 = vmatpush.bf16.msra.mxu0 %v5690
    %6052 = vmatpush.bf16.msra.mxu0 %v5686
    %6053 = vmatpush.bf16.msra.mxu0 %v5682
    %6054 = vmatpush.bf16.msra.mxu0 %v5678
    %6055 = vmatpush.bf16.msra.mxu0 %v5674
    %6056 = vmatpush.bf16.msra.mxu0 %v5670
    %6057 = vmatmul.bf16.gmra.mxu0 %v4409
    %v6058 = vpop.f32.mrf.mxu0
    %v6059 = vadd.f32 %v6046, %v6058
    %v6060 = vpop.f32.mrf.mxu0
    %6061 = vdwg.mxu0
    %6062 = vmatpush.bf16.msra.mxu0 %v5475
    %6063 = vmatpush.bf16.msra.mxu0 %v5471
    %6064 = vmatpush.bf16.msra.mxu0 %v5467
    %6065 = vmatpush.bf16.msra.mxu0 %v5463
    %6066 = vmatpush.bf16.msra.mxu0 %v5459
    %6067 = vmatpush.bf16.msra.mxu0 %v5455
    %6068 = vmatpush.bf16.msra.mxu0 %v5451
    %6069 = vmatpush.bf16.msra.mxu0 %v5447
    %6070 = vmatmul.bf16.gmra.mxu0 %v4390
    %v6071 = vpop.f32.mrf.mxu0
    %v6072 = vadd.f32 %v4671, %v6071
    %v6073 = vpop.f32.mrf.mxu0
    %6074 = vdwg.mxu0
    %6075 = vmatpush.bf16.msra.mxu0 %v5507
    %6076 = vmatpush.bf16.msra.mxu0 %v5503
    %6077 = vmatpush.bf16.msra.mxu0 %v5499
    %6078 = vmatpush.bf16.msra.mxu0 %v5495
    %6079 = vmatpush.bf16.msra.mxu0 %v5491
    %6080 = vmatpush.bf16.msra.mxu0 %v5487
    %6081 = vmatpush.bf16.msra.mxu0 %v5483
    %6082 = vmatpush.bf16.msra.mxu0 %v5479
    %6083 = vmatmul.bf16.gmra.mxu0 %v4391
    %v6084 = vpop.f32.mrf.mxu0
    %v6085 = vadd.f32 %v6072, %v6084
    %v6086 = vpop.f32.mrf.mxu0
    %6087 = vdwg.mxu0
    %6088 = vmatpush.bf16.msra.mxu0 %v5539
    %6089 = vmatpush.bf16.msra.mxu0 %v5535
    %6090 = vmatpush.bf16.msra.mxu0 %v5531
    %6091 = vmatpush.bf16.msra.mxu0 %v5527
    %6092 = vmatpush.bf16.msra.mxu0 %v5523
    %6093 = vmatpush.bf16.msra.mxu0 %v5519
    %6094 = vmatpush.bf16.msra.mxu0 %v5515
    %6095 = vmatpush.bf16.msra.mxu0 %v5511
    %6096 = vmatmul.bf16.gmra.mxu0 %v4396
    %v6097 = vpop.f32.mrf.mxu0
    %v6098 = vadd.f32 %v6085, %v6097
    %v6099 = vpop.f32.mrf.mxu0
    %6100 = vdwg.mxu0
    %6101 = vmatpush.bf16.msra.mxu0 %v5571
    %6102 = vmatpush.bf16.msra.mxu0 %v5567
    %6103 = vmatpush.bf16.msra.mxu0 %v5563
    %6104 = vmatpush.bf16.msra.mxu0 %v5559
    %6105 = vmatpush.bf16.msra.mxu0 %v5555
    %6106 = vmatpush.bf16.msra.mxu0 %v5551
    %6107 = vmatpush.bf16.msra.mxu0 %v5547
    %6108 = vmatpush.bf16.msra.mxu0 %v5543
    %6109 = vmatmul.bf16.gmra.mxu0 %v4397
    %v6110 = vpop.f32.mrf.mxu0
    %v6111 = vadd.f32 %v6098, %v6110
    %v6112 = vpop.f32.mrf.mxu0
    %6113 = vdwg.mxu0
    %6114 = vmatpush.bf16.msra.mxu0 %v5603
    %6115 = vmatpush.bf16.msra.mxu0 %v5599
    %6116 = vmatpush.bf16.msra.mxu0 %v5595
    %6117 = vmatpush.bf16.msra.mxu0 %v5591
    %6118 = vmatpush.bf16.msra.mxu0 %v5587
    %6119 = vmatpush.bf16.msra.mxu0 %v5583
    %6120 = vmatpush.bf16.msra.mxu0 %v5579
    %6121 = vmatpush.bf16.msra.mxu0 %v5575
    %6122 = vmatmul.bf16.gmra.mxu0 %v4402
    %v6123 = vpop.f32.mrf.mxu0
    %v6124 = vadd.f32 %v6111, %v6123
    %v6125 = vpop.f32.mrf.mxu0
    %6126 = vdwg.mxu0
    %6127 = vmatpush.bf16.msra.mxu0 %v5635
    %6128 = vmatpush.bf16.msra.mxu0 %v5631
    %6129 = vmatpush.bf16.msra.mxu0 %v5627
    %6130 = vmatpush.bf16.msra.mxu0 %v5623
    %6131 = vmatpush.bf16.msra.mxu0 %v5619
    %6132 = vmatpush.bf16.msra.mxu0 %v5615
    %6133 = vmatpush.bf16.msra.mxu0 %v5611
    %6134 = vmatpush.bf16.msra.mxu0 %v5607
    %6135 = vmatmul.bf16.gmra.mxu0 %v4403
    %v6136 = vpop.f32.mrf.mxu0
    %v6137 = vadd.f32 %v6124, %v6136
    %v6138 = vpop.f32.mrf.mxu0
    %6139 = vdwg.mxu0
    %6140 = vmatpush.bf16.msra.mxu0 %v5667
    %6141 = vmatpush.bf16.msra.mxu0 %v5663
    %6142 = vmatpush.bf16.msra.mxu0 %v5659
    %6143 = vmatpush.bf16.msra.mxu0 %v5655
    %6144 = vmatpush.bf16.msra.mxu0 %v5651
    %6145 = vmatpush.bf16.msra.mxu0 %v5647
    %6146 = vmatpush.bf16.msra.mxu0 %v5643
    %6147 = vmatpush.bf16.msra.mxu0 %v5639
    %6148 = vmatmul.bf16.gmra.mxu0 %v4408
    %v6149 = vpop.f32.mrf.mxu0
    %v6150 = vadd.f32 %v6137, %v6149
    %v6151 = vpop.f32.mrf.mxu0
    %6152 = vdwg.mxu0
    %6153 = vmatpush.bf16.msra.mxu0 %v5699
    %6154 = vmatpush.bf16.msra.mxu0 %v5695
    %6155 = vmatpush.bf16.msra.mxu0 %v5691
    %6156 = vmatpush.bf16.msra.mxu0 %v5687
    %6157 = vmatpush.bf16.msra.mxu0 %v5683
    %6158 = vmatpush.bf16.msra.mxu0 %v5679
    %6159 = vmatpush.bf16.msra.mxu0 %v5675
    %6160 = vmatpush.bf16.msra.mxu0 %v5671
    %6161 = vmatmul.bf16.gmra.mxu0 %v4409
    %v6162 = vpop.f32.mrf.mxu0
    %v6163 = vadd.f32 %v6150, %v6162
    %v6164 = vpop.f32.mrf.mxu0
    %6165 = vdwg.mxu0
    %6166 = vmatpush.bf16.msra.mxu0 %v5476
    %6167 = vmatpush.bf16.msra.mxu0 %v5472
    %6168 = vmatpush.bf16.msra.mxu0 %v5468
    %6169 = vmatpush.bf16.msra.mxu0 %v5464
    %6170 = vmatpush.bf16.msra.mxu0 %v5460
    %6171 = vmatpush.bf16.msra.mxu0 %v5456
    %6172 = vmatpush.bf16.msra.mxu0 %v5452
    %6173 = vmatpush.bf16.msra.mxu0 %v5448
    %6174 = vmatmul.bf16.gmra.mxu0 %v4390
    %v6175 = vpop.f32.mrf.mxu0
    %v6176 = vadd.f32 %v4672, %v6175
    %v6177 = vpop.f32.mrf.mxu0
    %6178 = vdwg.mxu0
    %6179 = vmatpush.bf16.msra.mxu0 %v5508
    %6180 = vmatpush.bf16.msra.mxu0 %v5504
    %6181 = vmatpush.bf16.msra.mxu0 %v5500
    %6182 = vmatpush.bf16.msra.mxu0 %v5496
    %6183 = vmatpush.bf16.msra.mxu0 %v5492
    %6184 = vmatpush.bf16.msra.mxu0 %v5488
    %6185 = vmatpush.bf16.msra.mxu0 %v5484
    %6186 = vmatpush.bf16.msra.mxu0 %v5480
    %6187 = vmatmul.bf16.gmra.mxu0 %v4391
    %v6188 = vpop.f32.mrf.mxu0
    %v6189 = vadd.f32 %v6176, %v6188
    %v6190 = vpop.f32.mrf.mxu0
    %6191 = vdwg.mxu0
    %6192 = vmatpush.bf16.msra.mxu0 %v5540
    %6193 = vmatpush.bf16.msra.mxu0 %v5536
    %6194 = vmatpush.bf16.msra.mxu0 %v5532
    %6195 = vmatpush.bf16.msra.mxu0 %v5528
    %6196 = vmatpush.bf16.msra.mxu0 %v5524
    %6197 = vmatpush.bf16.msra.mxu0 %v5520
    %6198 = vmatpush.bf16.msra.mxu0 %v5516
    %6199 = vmatpush.bf16.msra.mxu0 %v5512
    %6200 = vmatmul.bf16.gmra.mxu0 %v4396
    %v6201 = vpop.f32.mrf.mxu0
    %v6202 = vadd.f32 %v6189, %v6201
    %v6203 = vpop.f32.mrf.mxu0
    %6204 = vdwg.mxu0
    %6205 = vmatpush.bf16.msra.mxu0 %v5572
    %6206 = vmatpush.bf16.msra.mxu0 %v5568
    %6207 = vmatpush.bf16.msra.mxu0 %v5564
    %6208 = vmatpush.bf16.msra.mxu0 %v5560
    %6209 = vmatpush.bf16.msra.mxu0 %v5556
    %6210 = vmatpush.bf16.msra.mxu0 %v5552
    %6211 = vmatpush.bf16.msra.mxu0 %v5548
    %6212 = vmatpush.bf16.msra.mxu0 %v5544
    %6213 = vmatmul.bf16.gmra.mxu0 %v4397
    %v6214 = vpop.f32.mrf.mxu0
    %v6215 = vadd.f32 %v6202, %v6214
    %v6216 = vpop.f32.mrf.mxu0
    %6217 = vdwg.mxu0
    %6218 = vmatpush.bf16.msra.mxu0 %v5604
    %6219 = vmatpush.bf16.msra.mxu0 %v5600
    %6220 = vmatpush.bf16.msra.mxu0 %v5596
    %6221 = vmatpush.bf16.msra.mxu0 %v5592
    %6222 = vmatpush.bf16.msra.mxu0 %v5588
    %6223 = vmatpush.bf16.msra.mxu0 %v5584
    %6224 = vmatpush.bf16.msra.mxu0 %v5580
    %6225 = vmatpush.bf16.msra.mxu0 %v5576
    %6226 = vmatmul.bf16.gmra.mxu0 %v4402
    %v6227 = vpop.f32.mrf.mxu0
    %v6228 = vadd.f32 %v6215, %v6227
    %v6229 = vpop.f32.mrf.mxu0
    %6230 = vdwg.mxu0
    %6231 = vmatpush.bf16.msra.mxu0 %v5636
    %6232 = vmatpush.bf16.msra.mxu0 %v5632
    %6233 = vmatpush.bf16.msra.mxu0 %v5628
    %6234 = vmatpush.bf16.msra.mxu0 %v5624
    %6235 = vmatpush.bf16.msra.mxu0 %v5620
    %6236 = vmatpush.bf16.msra.mxu0 %v5616
    %6237 = vmatpush.bf16.msra.mxu0 %v5612
    %6238 = vmatpush.bf16.msra.mxu0 %v5608
    %6239 = vmatmul.bf16.gmra.mxu0 %v4403
    %v6240 = vpop.f32.mrf.mxu0
    %v6241 = vadd.f32 %v6228, %v6240
    %v6242 = vpop.f32.mrf.mxu0
    %6243 = vdwg.mxu0
    %6244 = vmatpush.bf16.msra.mxu0 %v5668
    %6245 = vmatpush.bf16.msra.mxu0 %v5664
    %6246 = vmatpush.bf16.msra.mxu0 %v5660
    %6247 = vmatpush.bf16.msra.mxu0 %v5656
    %6248 = vmatpush.bf16.msra.mxu0 %v5652
    %6249 = vmatpush.bf16.msra.mxu0 %v5648
    %6250 = vmatpush.bf16.msra.mxu0 %v5644
    %6251 = vmatpush.bf16.msra.mxu0 %v5640
    %6252 = vmatmul.bf16.gmra.mxu0 %v4408
    %v6253 = vpop.f32.mrf.mxu0
    %v6254 = vadd.f32 %v6241, %v6253
    %v6255 = vpop.f32.mrf.mxu0
    %6256 = vdwg.mxu0
    %6257 = vmatpush.bf16.msra.mxu0 %v5700
    %6258 = vmatpush.bf16.msra.mxu0 %v5696
    %6259 = vmatpush.bf16.msra.mxu0 %v5692
    %6260 = vmatpush.bf16.msra.mxu0 %v5688
    %6261 = vmatpush.bf16.msra.mxu0 %v5684
    %6262 = vmatpush.bf16.msra.mxu0 %v5680
    %6263 = vmatpush.bf16.msra.mxu0 %v5676
    %6264 = vmatpush.bf16.msra.mxu0 %v5672
    %6265 = vmatmul.bf16.gmra.mxu0 %v4409
    %v6266 = vpop.f32.mrf.mxu0
    %v6267 = vadd.f32 %v6254, %v6266
    %v6268 = vpop.f32.mrf.mxu0
    %6269 = vdwg.mxu0
    %6270 = vmatpush.bf16.msra.mxu0 %v5477
    %6271 = vmatpush.bf16.msra.mxu0 %v5473
    %6272 = vmatpush.bf16.msra.mxu0 %v5469
    %6273 = vmatpush.bf16.msra.mxu0 %v5465
    %6274 = vmatpush.bf16.msra.mxu0 %v5461
    %6275 = vmatpush.bf16.msra.mxu0 %v5457
    %6276 = vmatpush.bf16.msra.mxu0 %v5453
    %6277 = vmatpush.bf16.msra.mxu0 %v5449
    %6278 = vmatmul.bf16.gmra.mxu0 %v4390
    %v6279 = vpop.f32.mrf.mxu0
    %v6280 = vadd.f32 %v4673, %v6279
    %v6281 = vpop.f32.mrf.mxu0
    %6282 = vdwg.mxu0
    %6283 = vmatpush.bf16.msra.mxu0 %v5509
    %6284 = vmatpush.bf16.msra.mxu0 %v5505
    %6285 = vmatpush.bf16.msra.mxu0 %v5501
    %6286 = vmatpush.bf16.msra.mxu0 %v5497
    %6287 = vmatpush.bf16.msra.mxu0 %v5493
    %6288 = vmatpush.bf16.msra.mxu0 %v5489
    %6289 = vmatpush.bf16.msra.mxu0 %v5485
    %6290 = vmatpush.bf16.msra.mxu0 %v5481
    %6291 = vmatmul.bf16.gmra.mxu0 %v4391
    %v6292 = vpop.f32.mrf.mxu0
    %v6293 = vadd.f32 %v6280, %v6292
    %v6294 = vpop.f32.mrf.mxu0
    %6295 = vdwg.mxu0
    %6296 = vmatpush.bf16.msra.mxu0 %v5541
    %6297 = vmatpush.bf16.msra.mxu0 %v5537
    %6298 = vmatpush.bf16.msra.mxu0 %v5533
    %6299 = vmatpush.bf16.msra.mxu0 %v5529
    %6300 = vmatpush.bf16.msra.mxu0 %v5525
    %6301 = vmatpush.bf16.msra.mxu0 %v5521
    %6302 = vmatpush.bf16.msra.mxu0 %v5517
    %6303 = vmatpush.bf16.msra.mxu0 %v5513
    %6304 = vmatmul.bf16.gmra.mxu0 %v4396
    %v6305 = vpop.f32.mrf.mxu0
    %v6306 = vadd.f32 %v6293, %v6305
    %v6307 = vpop.f32.mrf.mxu0
    %6308 = vdwg.mxu0
    %6309 = vmatpush.bf16.msra.mxu0 %v5573
    %6310 = vmatpush.bf16.msra.mxu0 %v5569
    %6311 = vmatpush.bf16.msra.mxu0 %v5565
    %6312 = vmatpush.bf16.msra.mxu0 %v5561
    %6313 = vmatpush.bf16.msra.mxu0 %v5557
    %6314 = vmatpush.bf16.msra.mxu0 %v5553
    %6315 = vmatpush.bf16.msra.mxu0 %v5549
    %6316 = vmatpush.bf16.msra.mxu0 %v5545
    %6317 = vmatmul.bf16.gmra.mxu0 %v4397
    %v6318 = vpop.f32.mrf.mxu0
    %v6319 = vadd.f32 %v6306, %v6318
    %v6320 = vpop.f32.mrf.mxu0
    %6321 = vdwg.mxu0
    %6322 = vmatpush.bf16.msra.mxu0 %v5605
    %6323 = vmatpush.bf16.msra.mxu0 %v5601
    %6324 = vmatpush.bf16.msra.mxu0 %v5597
    %6325 = vmatpush.bf16.msra.mxu0 %v5593
    %6326 = vmatpush.bf16.msra.mxu0 %v5589
    %6327 = vmatpush.bf16.msra.mxu0 %v5585
    %6328 = vmatpush.bf16.msra.mxu0 %v5581
    %6329 = vmatpush.bf16.msra.mxu0 %v5577
    %6330 = vmatmul.bf16.gmra.mxu0 %v4402
    %v6331 = vpop.f32.mrf.mxu0
    %v6332 = vadd.f32 %v6319, %v6331
    %v6333 = vpop.f32.mrf.mxu0
    %6334 = vdwg.mxu0
    %6335 = vmatpush.bf16.msra.mxu0 %v5637
    %6336 = vmatpush.bf16.msra.mxu0 %v5633
    %6337 = vmatpush.bf16.msra.mxu0 %v5629
    %6338 = vmatpush.bf16.msra.mxu0 %v5625
    %6339 = vmatpush.bf16.msra.mxu0 %v5621
    %6340 = vmatpush.bf16.msra.mxu0 %v5617
    %6341 = vmatpush.bf16.msra.mxu0 %v5613
    %6342 = vmatpush.bf16.msra.mxu0 %v5609
    %6343 = vmatmul.bf16.gmra.mxu0 %v4403
    %v6344 = vpop.f32.mrf.mxu0
    %v6345 = vadd.f32 %v6332, %v6344
    %v6346 = vpop.f32.mrf.mxu0
    %6347 = vdwg.mxu0
    %6348 = vmatpush.bf16.msra.mxu0 %v5669
    %6349 = vmatpush.bf16.msra.mxu0 %v5665
    %6350 = vmatpush.bf16.msra.mxu0 %v5661
    %6351 = vmatpush.bf16.msra.mxu0 %v5657
    %6352 = vmatpush.bf16.msra.mxu0 %v5653
    %6353 = vmatpush.bf16.msra.mxu0 %v5649
    %6354 = vmatpush.bf16.msra.mxu0 %v5645
    %6355 = vmatpush.bf16.msra.mxu0 %v5641
    %6356 = vmatmul.bf16.gmra.mxu0 %v4408
    %v6357 = vpop.f32.mrf.mxu0
    %v6358 = vadd.f32 %v6345, %v6357
    %v6359 = vpop.f32.mrf.mxu0
    %6360 = vdwg.mxu0
    %6361 = vmatpush.bf16.msra.mxu0 %v5701
    %6362 = vmatpush.bf16.msra.mxu0 %v5697
    %6363 = vmatpush.bf16.msra.mxu0 %v5693
    %6364 = vmatpush.bf16.msra.mxu0 %v5689
    %6365 = vmatpush.bf16.msra.mxu0 %v5685
    %6366 = vmatpush.bf16.msra.mxu0 %v5681
    %6367 = vmatpush.bf16.msra.mxu0 %v5677
    %6368 = vmatpush.bf16.msra.mxu0 %v5673
    %6369 = vmatmul.bf16.gmra.mxu0 %v4409
    %v6370 = vpop.f32.mrf.mxu0
    %v6371 = vadd.f32 %v6358, %v6370
    %v6372 = vpop.f32.mrf.mxu0
    %6373 = vdwg.mxu0
    %v6374 = vmax.f32 %v6059, 0.0
    %v6375 = vmax.f32 %v6163, 0.0
    %v6376 = vmax.f32 %v6267, 0.0
    %v6377 = vmax.f32 %v6371, 0.0
    %v6378 = vpack.c.bf16 %v6374, %v6374
    %v6379 = vpack.c.bf16 %v6375, %v6375
    %v6380 = vpack.c.bf16 %v6376, %v6376
    %v6381 = vpack.c.bf16 %v6377, %v6377
    %v6382 = vld [vmem:[%s7] sm:$0xf]
    %v6383 = vld [vmem:[%s7 + $0x4] sm:$0xf]
    %v6384 = vld [vmem:[%s7 + $0x8] sm:$0xf]
    %v6385 = vld [vmem:[%s7 + $0xc] sm:$0xf]
    %v6386 = vld [vmem:[%s7 + $0x10] sm:$0xf]
    %v6387 = vld [vmem:[%s7 + $0x14] sm:$0xf]
    %v6388 = vld [vmem:[%s7 + $0x18] sm:$0xf]
    %v6389 = vld [vmem:[%s7 + $0x1c] sm:$0xf]
    %v6390 = vld [vmem:[%s7 + $0x20] sm:$0xf]
    %v6391 = vld [vmem:[%s7 + $0x24] sm:$0xf]
    %v6392 = vld [vmem:[%s7 + $0x28] sm:$0xf]
    %v6393 = vld [vmem:[%s7 + $0x2c] sm:$0xf]
    %v6394 = vld [vmem:[%s7 + $0x30] sm:$0xf]
    %v6395 = vld [vmem:[%s7 + $0x34] sm:$0xf]
    %v6396 = vld [vmem:[%s7 + $0x38] sm:$0xf]
    %v6397 = vld [vmem:[%s7 + $0x3c] sm:$0xf]
    %v6398 = vld [vmem:[%s7 + $0x40] sm:$0xf]
    %v6399 = vld [vmem:[%s7 + $0x44] sm:$0xf]
    %v6400 = vld [vmem:[%s7 + $0x48] sm:$0xf]
    %v6401 = vld [vmem:[%s7 + $0x4c] sm:$0xf]
    %v6402 = vld [vmem:[%s7 + $0x50] sm:$0xf]
    %v6403 = vld [vmem:[%s7 + $0x54] sm:$0xf]
    %v6404 = vld [vmem:[%s7 + $0x58] sm:$0xf]
    %v6405 = vld [vmem:[%s7 + $0x5c] sm:$0xf]
    %v6406 = vld [vmem:[%s7 + $0x60] sm:$0xf]
    %v6407 = vld [vmem:[%s7 + $0x64] sm:$0xf]
    %v6408 = vld [vmem:[%s7 + $0x68] sm:$0xf]
    %v6409 = vld [vmem:[%s7 + $0x6c] sm:$0xf]
    %v6410 = vld [vmem:[%s7 + $0x70] sm:$0xf]
    %v6411 = vld [vmem:[%s7 + $0x74] sm:$0xf]
    %v6412 = vld [vmem:[%s7 + $0x78] sm:$0xf]
    %v6413 = vld [vmem:[%s7 + $0x7c] sm:$0xf]
    %v6414 = vld [vmem:[%s7 + $0x80] sm:$0xf]
    %v6415 = vld [vmem:[%s7 + $0x84] sm:$0xf]
    %v6416 = vld [vmem:[%s7 + $0x88] sm:$0xf]
    %v6417 = vld [vmem:[%s7 + $0x8c] sm:$0xf]
    %v6418 = vld [vmem:[%s7 + $0x90] sm:$0xf]
    %v6419 = vld [vmem:[%s7 + $0x94] sm:$0xf]
    %v6420 = vld [vmem:[%s7 + $0x98] sm:$0xf]
    %v6421 = vld [vmem:[%s7 + $0x9c] sm:$0xf]
    %v6422 = vld [vmem:[%s7 + $0xa0] sm:$0xf]
    %v6423 = vld [vmem:[%s7 + $0xa4] sm:$0xf]
    %v6424 = vld [vmem:[%s7 + $0xa8] sm:$0xf]
    %v6425 = vld [vmem:[%s7 + $0xac] sm:$0xf]
    %v6426 = vld [vmem:[%s7 + $0xb0] sm:$0xf]
    %v6427 = vld [vmem:[%s7 + $0xb4] sm:$0xf]
    %v6428 = vld [vmem:[%s7 + $0xb8] sm:$0xf]
    %v6429 = vld [vmem:[%s7 + $0xbc] sm:$0xf]
    %v6430 = vld [vmem:[%s7 + $0xc0] sm:$0xf]
    %v6431 = vld [vmem:[%s7 + $0xc4] sm:$0xf]
    %v6432 = vld [vmem:[%s7 + $0xc8] sm:$0xf]
    %v6433 = vld [vmem:[%s7 + $0xcc] sm:$0xf]
    %v6434 = vld [vmem:[%s7 + $0xd0] sm:$0xf]
    %v6435 = vld [vmem:[%s7 + $0xd4] sm:$0xf]
    %v6436 = vld [vmem:[%s7 + $0xd8] sm:$0xf]
    %v6437 = vld [vmem:[%s7 + $0xdc] sm:$0xf]
    %v6438 = vld [vmem:[%s7 + $0xe0] sm:$0xf]
    %v6439 = vld [vmem:[%s7 + $0xe4] sm:$0xf]
    %v6440 = vld [vmem:[%s7 + $0xe8] sm:$0xf]
    %v6441 = vld [vmem:[%s7 + $0xec] sm:$0xf]
    %v6442 = vld [vmem:[%s7 + $0xf0] sm:$0xf]
    %v6443 = vld [vmem:[%s7 + $0xf4] sm:$0xf]
    %v6444 = vld [vmem:[%s7 + $0xf8] sm:$0xf]
    %v6445 = vld [vmem:[%s7 + $0xfc] sm:$0xf]
    %v6446 = vld [vmem:[#allocation13] sm:$0x1]
    %v6448 = vperm.slane %v6446, 0
    %v6514 = vunpack.c.l.b16 %v6382
    %v6515 = vunpack.c.l.b16 %v6383
    %v6516 = vunpack.c.l.b16 %v6384
    %v6517 = vunpack.c.l.b16 %v6385
    %v6518 = vunpack.c.l.b16 %v6386
    %v6519 = vunpack.c.l.b16 %v6387
    %v6520 = vunpack.c.l.b16 %v6388
    %v6521 = vunpack.c.l.b16 %v6389
    %v6522 = vunpack.c.l.b16 %v6390
    %v6523 = vunpack.c.l.b16 %v6391
    %v6524 = vunpack.c.l.b16 %v6392
    %v6525 = vunpack.c.l.b16 %v6393
    %v6526 = vunpack.c.l.b16 %v6394
    %v6527 = vunpack.c.l.b16 %v6395
    %v6528 = vunpack.c.l.b16 %v6396
    %v6529 = vunpack.c.l.b16 %v6397
    %v6530 = vunpack.c.l.b16 %v6398
    %v6531 = vunpack.c.l.b16 %v6399
    %v6532 = vunpack.c.l.b16 %v6400
    %v6533 = vunpack.c.l.b16 %v6401
    %v6534 = vunpack.c.l.b16 %v6402
    %v6535 = vunpack.c.l.b16 %v6403
    %v6536 = vunpack.c.l.b16 %v6404
    %v6537 = vunpack.c.l.b16 %v6405
    %v6538 = vunpack.c.l.b16 %v6406
    %v6539 = vunpack.c.l.b16 %v6407
    %v6540 = vunpack.c.l.b16 %v6408
    %v6541 = vunpack.c.l.b16 %v6409
    %v6542 = vunpack.c.l.b16 %v6410
    %v6543 = vunpack.c.l.b16 %v6411
    %v6544 = vunpack.c.l.b16 %v6412
    %v6545 = vunpack.c.l.b16 %v6413
    %v6546 = vunpack.c.l.b16 %v6414
    %v6547 = vunpack.c.l.b16 %v6415
    %v6548 = vunpack.c.l.b16 %v6416
    %v6549 = vunpack.c.l.b16 %v6417
    %v6550 = vunpack.c.l.b16 %v6418
    %v6551 = vunpack.c.l.b16 %v6419
    %v6552 = vunpack.c.l.b16 %v6420
    %v6553 = vunpack.c.l.b16 %v6421
    %v6554 = vunpack.c.l.b16 %v6422
    %v6555 = vunpack.c.l.b16 %v6423
    %v6556 = vunpack.c.l.b16 %v6424
    %v6557 = vunpack.c.l.b16 %v6425
    %v6558 = vunpack.c.l.b16 %v6426
    %v6559 = vunpack.c.l.b16 %v6427
    %v6560 = vunpack.c.l.b16 %v6428
    %v6561 = vunpack.c.l.b16 %v6429
    %v6562 = vunpack.c.l.b16 %v6430
    %v6563 = vunpack.c.l.b16 %v6431
    %v6564 = vunpack.c.l.b16 %v6432
    %v6565 = vunpack.c.l.b16 %v6433
    %v6566 = vunpack.c.l.b16 %v6434
    %v6567 = vunpack.c.l.b16 %v6435
    %v6568 = vunpack.c.l.b16 %v6436
    %v6569 = vunpack.c.l.b16 %v6437
    %v6570 = vunpack.c.l.b16 %v6438
    %v6571 = vunpack.c.l.b16 %v6439
    %v6572 = vunpack.c.l.b16 %v6440
    %v6573 = vunpack.c.l.b16 %v6441
    %v6574 = vunpack.c.l.b16 %v6442
    %v6575 = vunpack.c.l.b16 %v6443
    %v6576 = vunpack.c.l.b16 %v6444
    %v6577 = vunpack.c.l.b16 %v6445
    %v6578 = vpack.c.b16 %v6515, %v6514
    %v6579 = vpack.c.b16 %v6517, %v6516
    %v6580 = vpack.c.b16 %v6519, %v6518
    %v6581 = vpack.c.b16 %v6521, %v6520
    %v6582 = vpack.c.b16 %v6523, %v6522
    %v6583 = vpack.c.b16 %v6525, %v6524
    %v6584 = vpack.c.b16 %v6527, %v6526
    %v6585 = vpack.c.b16 %v6529, %v6528
    %v6586 = vpack.c.b16 %v6531, %v6530
    %v6587 = vpack.c.b16 %v6533, %v6532
    %v6588 = vpack.c.b16 %v6535, %v6534
    %v6589 = vpack.c.b16 %v6537, %v6536
    %v6590 = vpack.c.b16 %v6539, %v6538
    %v6591 = vpack.c.b16 %v6541, %v6540
    %v6592 = vpack.c.b16 %v6543, %v6542
    %v6593 = vpack.c.b16 %v6545, %v6544
    %v6594 = vpack.c.b16 %v6547, %v6546
    %v6595 = vpack.c.b16 %v6549, %v6548
    %v6596 = vpack.c.b16 %v6551, %v6550
    %v6597 = vpack.c.b16 %v6553, %v6552
    %v6598 = vpack.c.b16 %v6555, %v6554
    %v6599 = vpack.c.b16 %v6557, %v6556
    %v6600 = vpack.c.b16 %v6559, %v6558
    %v6601 = vpack.c.b16 %v6561, %v6560
    %v6602 = vpack.c.b16 %v6563, %v6562
    %v6603 = vpack.c.b16 %v6565, %v6564
    %v6604 = vpack.c.b16 %v6567, %v6566
    %v6605 = vpack.c.b16 %v6569, %v6568
    %v6606 = vpack.c.b16 %v6571, %v6570
    %v6607 = vpack.c.b16 %v6573, %v6572
    %v6608 = vpack.c.b16 %v6575, %v6574
    %v6609 = vpack.c.b16 %v6577, %v6576
    %6642 = vmatpush.bf16.msra.mxu0 %v6585
    %6643 = vmatpush.bf16.msra.mxu0 %v6584
    %6644 = vmatpush.bf16.msra.mxu0 %v6583
    %6645 = vmatpush.bf16.msra.mxu0 %v6582
    %6646 = vmatpush.bf16.msra.mxu0 %v6581
    %6647 = vmatpush.bf16.msra.mxu0 %v6580
    %6648 = vmatpush.bf16.msra.mxu0 %v6579
    %6649 = vmatpush.bf16.msra.mxu0 %v6578
    %6650 = vmatmul.bf16.gmra.mxu0 %v6378
    %v6651 = vpop.f32.mrf.mxu0
    %v6652 = vadd.f32 %v6448, %v6651
    %v6653 = vpop.f32.mrf.mxu0
    %6654 = vdwg.mxu0
    %6655 = vmatpush.bf16.msra.mxu0 %v6593
    %6656 = vmatpush.bf16.msra.mxu0 %v6592
    %6657 = vmatpush.bf16.msra.mxu0 %v6591
    %6658 = vmatpush.bf16.msra.mxu0 %v6590
    %6659 = vmatpush.bf16.msra.mxu0 %v6589
    %6660 = vmatpush.bf16.msra.mxu0 %v6588
    %6661 = vmatpush.bf16.msra.mxu0 %v6587
    %6662 = vmatpush.bf16.msra.mxu0 %v6586
    %6663 = vmatmul.bf16.gmra.mxu0 %v6379
    %v6664 = vpop.f32.mrf.mxu0
    %v6665 = vadd.f32 %v6652, %v6664
    %v6666 = vpop.f32.mrf.mxu0
    %6667 = vdwg.mxu0
    %6668 = vmatpush.bf16.msra.mxu0 %v6601
    %6669 = vmatpush.bf16.msra.mxu0 %v6600
    %6670 = vmatpush.bf16.msra.mxu0 %v6599
    %6671 = vmatpush.bf16.msra.mxu0 %v6598
    %6672 = vmatpush.bf16.msra.mxu0 %v6597
    %6673 = vmatpush.bf16.msra.mxu0 %v6596
    %6674 = vmatpush.bf16.msra.mxu0 %v6595
    %6675 = vmatpush.bf16.msra.mxu0 %v6594
    %6676 = vmatmul.bf16.gmra.mxu0 %v6380
    %v6677 = vpop.f32.mrf.mxu0
    %v6678 = vadd.f32 %v6665, %v6677
    %v6679 = vpop.f32.mrf.mxu0
    %6680 = vdwg.mxu0
    %6681 = vmatpush.bf16.msra.mxu0 %v6609
    %6682 = vmatpush.bf16.msra.mxu0 %v6608
    %6683 = vmatpush.bf16.msra.mxu0 %v6607
    %6684 = vmatpush.bf16.msra.mxu0 %v6606
    %6685 = vmatpush.bf16.msra.mxu0 %v6605
    %6686 = vmatpush.bf16.msra.mxu0 %v6604
    %6687 = vmatpush.bf16.msra.mxu0 %v6603
    %6688 = vmatpush.bf16.msra.mxu0 %v6602
    %6689 = vmatmul.bf16.gmra.mxu0 %v6381
    %v6690 = vpop.f32.mrf.mxu0
    %v6691 = vadd.f32 %v6678, %v6690
    %v6692 = vpop.f32.mrf.mxu0
    %6693 = vdwg.mxu0
    %vm6694 = vcmask 74752
    %v6695 = vsel %vm6694, %v6691, -inf
    %6696 = vmax.xlane.f32.xlu0 %v6695
    %v6697 = vpop.xlane.xlu0 %6696
    %v6698 = vsub.f32 %v6691, %v6697
    %v6699 = vmul.f32 %v6698, 1.442695
    %v6700 = vpow.pop %v6699
    %v6701 = vsel %vm6694, %v6700, 0.0
    %6702 = vadd.xlane.f32.xlu0 %v6701
    %v6703 = vpop.xlane.xlu0 %6702
    %v6704 = vlog2.pop %v6703
    %v6705 = vmul.f32 %v6704, 0.6931472
    %v6706 = vsub.f32 %v6698, %v6705
    %6707 = vst.msk [vmem:[#allocation14] sm:$0x3] %vm6694, %v6706
    // Predicated region
    $region66: #{tpu_custom_call.1} parent=1 // pred_check
      _
    $region67: #{tpu_custom_call.1} parent=1 // pred_check_branch
      %6709 = sbr.rel (0) target = $region69
    $region68: #{tpu_custom_call.1} parent=1 // pred_region
      %6711 = vsyncadd [#allocation4], 0
      %s6713 = sshll.u32 [#allocation14], 4
      %s6714 = int_to_ptr.vmem [resolvable:$true] %s6713
      %s6715 = sshll.u32 %s9, 4
      %s6716 = int_to_ptr.hbm [resolvable:$true] %s6715
      %6718 = dma.vmem_to_hbm [thread:$0]  %s6714, 32, %s6716, [#allocation4]
    $region69: #{tpu_custom_call.1} parent=1 // pred_fallthru
      _
    // Predicated region
    $region70: #{tpu_custom_call.1} parent=1 // pred_check
      _
    $region71: #{tpu_custom_call.1} parent=1 // pred_check_branch
      %6720 = sbr.rel (0) target = $region73
    $region72: #{tpu_custom_call.1} parent=1 // pred_region
      %6722 = dma.done [#allocation4], 32
    $region73: #{tpu_custom_call.1} parent=1 // pred_fallthru
      _
    %6723 = vsyncpa [#allocation3], 1
    %6724 = vsyncpa [#allocation6], 1
    %6725 = vsyncpa [#allocation9], 1
    %6726 = vsyncpa [#allocation12], 1
    %6727 = vsyncpa [#allocation4], 1

</llo_original>
